<compile_context>
chip_gen: v7x
topology: tpu7x:2x2x1
jax: 0.10.0
libtpu: 0.0.40
codegen_flags: <defaults>
</compile_context>

<pallas_src>
import math
from functools import partial

import jax
import jax.numpy as jnp
from jax import lax
from jax.experimental import pallas as pl
from jax.experimental.pallas import tpu as pltpu


# --------------------------------------------------------------------------
# In-kernel helpers
# --------------------------------------------------------------------------

def _ln(x, g, b, eps=1e-5):
    # LayerNorm over last dim, f32, biased variance, eps=1e-5 (PyTorch default).
    mean = jnp.mean(x, axis=-1, keepdims=True)
    var = jnp.mean((x - mean) ** 2, axis=-1, keepdims=True)
    return (x - mean) * lax.rsqrt(var + eps) * g + b


def _mm(x, w):
    # bf16 MXU matmul, f32 accumulation.
    return jnp.dot(x.astype(jnp.bfloat16), w.astype(jnp.bfloat16),
                   preferred_element_type=jnp.float32)


def _softmax_rows(s):
    # Exact softmax (matches torch.softmax; attention matrices are kernel outputs).
    m = jnp.max(s, axis=-1, keepdims=True)
    e = jnp.exp(s - m)
    return e / jnp.sum(e, axis=-1, keepdims=True)


def _bcast_spec(arr):
    # Full-array block, same for every grid point (weights / norm params / biases).
    nd = arr.ndim
    return pl.BlockSpec(arr.shape, lambda b: (0,) * nd)


# --------------------------------------------------------------------------
# Single fused kernel: LN1 + spatial MHA ('mul') + fc + internal LN + residual,
#                      LN2 + cross-attn + out-proj + residual,
#                      LN3 + FFN + residual.
# --------------------------------------------------------------------------

def _fused_layer_kernel(H,
                        tgt_ref, mem_ref, loc_ref,
                        n1g_ref, n1b_ref,
                        wqkv_ref, bqkv_ref,
                        wloc_ref, bloc_ref,          # SMEM scalars
                        wfc_ref, bfc_ref,
                        lng_ref, lnb_ref,
                        n2g_ref, n2b_ref,
                        wq_ref, bq_ref,
                        wkv_ref, bkv_ref,
                        wo_ref, bo_ref,
                        n3g_ref, n3b_ref,
                        w1_ref, b1_ref,
                        w2_ref, b2_ref,
                        out_ref, sattn_ref, cattn_ref):
    Bt, L, D = tgt_ref.shape
    T = mem_ref.shape[1]
    SD = loc_ref.shape[1]
    dh = D // H

    x = tgt_ref[...].reshape(Bt * L, D)                      # (Bt*L, D) f32

    # ======================= Stage 1: spatial self-attention =======================
    x2 = _ln(x, n1g_ref[...], n1b_ref[...])                  # LN1
    # Fused QKV projection (1/sqrt(dh) pre-folded into the Q columns of wqkv/bqkv).
    qkv = _mm(x2, wqkv_ref[...]) + bqkv_ref[...]             # (Bt*L, 3D) f32
    qkv = qkv.astype(jnp.bfloat16).reshape(Bt, L, 3 * D)     # single bf16 cast

    # Pairwise-loc planes: lane-dense (L on lanes), built once for all heads.
    locs = loc_ref[...]                                      # (Bt, SD, L, L) f32
    loc_log = []
    for h in range(H):
        acc = locs[:, 0] * wloc_ref[0, h]
        for d in range(1, SD):
            acc = acc + locs[:, d] * wloc_ref[d, h]
        acc = jnp.maximum(acc + bloc_ref[h], 0.0)            # relu ('mul' fusion)
        loc_log.append(jnp.log(jnp.maximum(acc, 1e-6)))      # log(clamp(., 1e-6))

    wfc = wfc_ref[...].astype(jnp.bfloat16)
    sa = jnp.zeros((Bt * L, D), jnp.float32)
    for h in range(H):
        q_h = qkv[:, :, h * dh:(h + 1) * dh]
        k_h = qkv[:, :, D + h * dh:D + (h + 1) * dh]
        v_h = qkv[:, :, 2 * D + h * dh:2 * D + (h + 1) * dh]
        scores = jnp.einsum('bld,btd->blt', q_h, k_h,
                            preferred_element_type=jnp.float32)       # (Bt, L, L)
        p = _softmax_rows(scores + loc_log[h])
        sattn_ref[h] = p                                               # (head, b, l, t)
        ctx_h = jnp.einsum('blt,btd->bld', p.astype(jnp.bfloat16), v_h,
                           preferred_element_type=jnp.float32)          # (Bt, L, dh)
        # Accumulate the fc projection per head -> lane-dense D-wide output, no concat.
        sa = sa + jnp.dot(ctx_h.astype(jnp.bfloat16).reshape(Bt * L, dh),
                          wfc[h * dh:(h + 1) * dh, :],
                          preferred_element_type=jnp.float32)
    sa = sa + bfc_ref[...]
    # MultiHeadAttentionSpatial internal residual (against LN1 output) + its LayerNorm.
    y = _ln(sa + x2, lng_ref[...], lnb_ref[...])
    t1 = x + y                                               # decoder residual (dropout1 == id)

    # ======================= Stage 2: cross attention vs. memory =======================
    x2 = _ln(t1, n2g_ref[...], n2b_ref[...])                 # LN2
    q = (_mm(x2, wq_ref[...]) + bq_ref[...]).astype(jnp.bfloat16).reshape(Bt, L, D)
    mem = mem_ref[...].reshape(Bt * T, D)
    kv = (_mm(mem, wkv_ref[...]) + bkv_ref[...]).astype(jnp.bfloat16).reshape(Bt, T, 2 * D)

    wo = wo_ref[...].astype(jnp.bfloat16)
    o = jnp.zeros((Bt * L, D), jnp.float32)
    attn_sum = jnp.zeros((Bt, L, T), jnp.float32)
    for h in range(H):
        q_h = q[:, :, h * dh:(h + 1) * dh]
        k_h = kv[:, :, h * dh:(h + 1) * dh]
        v_h = kv[:, :, D + h * dh:D + (h + 1) * dh]
        p = _softmax_rows(jnp.einsum('bld,btd->blt', q_h, k_h,
                                     preferred_element_type=jnp.float32))
        attn_sum = attn_sum + p
        ctx_h = jnp.einsum('blt,btd->bld', p.astype(jnp.bfloat16), v_h,
                           preferred_element_type=jnp.float32)
        o = o + jnp.dot(ctx_h.astype(jnp.bfloat16).reshape(Bt * L, dh),
                        wo[h * dh:(h + 1) * dh, :],
                        preferred_element_type=jnp.float32)
    o = o + bo_ref[...]
    t2 = t1 + o                                              # residual (dropout2 == id)
    cattn_ref[...] = attn_sum * (1.0 / H)                    # head-averaged attn (torch default)

    # ======================= Stage 3: feed-forward =======================
    x2 = _ln(t2, n3g_ref[...], n3b_ref[...])                 # LN3
    hact = jnp.maximum(_mm(x2, w1_ref[...]) + b1_ref[...], 0.0)   # relu in f32
    y = _mm(hact, w2_ref[...]) + b2_ref[...]
    out_ref[...] = (t2 + y).reshape(Bt, L, D)                # residual (dropout3 == id)


# --------------------------------------------------------------------------
# Wrapper
# --------------------------------------------------------------------------

def _pick_block_b(B, L):
    # Enough rows per grid step to fill the MXU M dim (~256) and amortize per-step overhead.
    bt = max(1, min(B, max(1, 256 // max(L, 1))))
    while B % bt != 0:
        bt -= 1
    return bt


def _vmem_limit_bytes(Bt, L, T, D, F, SD, H):
    f32 = 4
    io_blocks = (Bt * L * D + Bt * T * D + Bt * SD * L * L          # inputs
                 + Bt * L * D + H * Bt * L * L + Bt * L * T) * f32  # outputs
    weights = (D * 3 * D + D * D + D * 2 * D + D * D + D * F + F * D) * 2 \
        + (12 * D + 3 * D + 2 * D + F) * f32
    temps = (Bt * L * 3 * D + (H + 3) * Bt * L * L + 5 * Bt * L * D
             + Bt * L * F + Bt * T * 2 * D) * f32
    est = 2 * io_blocks + 2 * weights + 2 * temps                   # double-buffer + headroom
    return int(min(max(est, 32 << 20), 64 << 20))                   # v7x-safe clamp


@partial(jax.jit, static_argnames=('nhead',))
def transformer_spatial_decoder_layer(p, tgt, memory, pairwise_locs, *, nhead):
    B, L, D = tgt.shape
    T = memory.shape[1]
    SD = pairwise_locs.shape[-1]
    F = p['ff_w1'].shape[1]
    H = nhead
    Bt = _pick_block_b(B, L)

    # Lane-friendly loc layout: (B, SD, L, L) with L on the 128-lane axis.
    locs_t = jnp.transpose(pairwise_locs, (0, 3, 1, 2))

    smem = pl.BlockSpec(memory_space=pltpu.MemorySpace.SMEM)

    out, sattn, cattn = pl.pallas_call(
        partial(_fused_layer_kernel, H),
        grid=(B // Bt,),
        in_specs=[
            pl.BlockSpec((Bt, L, D), lambda b: (b, 0, 0)),
            pl.BlockSpec((Bt, T, D), lambda b: (b, 0, 0)),
            pl.BlockSpec((Bt, SD, L, L), lambda b: (b, 0, 0, 0)),
            _bcast_spec(p['norm1_g']), _bcast_spec(p['norm1_b']),
            _bcast_spec(p['sa_wqkv']), _bcast_spec(p['sa_bqkv']),
            smem, smem,
            _bcast_spec(p['sa_wfc']), _bcast_spec(p['sa_bfc']),
            _bcast_spec(p['sa_ln_g']), _bcast_spec(p['sa_ln_b']),
            _bcast_spec(p['norm2_g']), _bcast_spec(p['norm2_b']),
            _bcast_spec(p['ca_wq']), _bcast_spec(p['ca_bq']),
            _bcast_spec(p['ca_wkv']), _bcast_spec(p['ca_bkv']),
            _bcast_spec(p['ca_wo']), _bcast_spec(p['ca_bo']),
            _bcast_spec(p['norm3_g']), _bcast_spec(p['norm3_b']),
            _bcast_spec(p['ff_w1']), _bcast_spec(p['ff_b1']),
            _bcast_spec(p['ff_w2']), _bcast_spec(p['ff_b2']),
        ],
        out_specs=(
            pl.BlockSpec((Bt, L, D), lambda b: (b, 0, 0)),
            pl.BlockSpec((H, Bt, L, L), lambda b: (0, b, 0, 0)),
            pl.BlockSpec((Bt, L, T), lambda b: (b, 0, 0)),
        ),
        out_shape=(
            jax.ShapeDtypeStruct((B, L, D), jnp.float32),
            jax.ShapeDtypeStruct((H, B, L, L), jnp.float32),
            jax.ShapeDtypeStruct((B, L, T), jnp.float32),
        ),
        compiler_params=pltpu.CompilerParams(
            dimension_semantics=("parallel",),
            vmem_limit_bytes=_vmem_limit_bytes(Bt, L, T, D, F, SD, H)),
    )(tgt, memory, locs_t,
      p['norm1_g'], p['norm1_b'],
      p['sa_wqkv'], p['sa_bqkv'],
      p['sa_wloc'], p['sa_bloc'],
      p['sa_wfc'], p['sa_bfc'],
      p['sa_ln_g'], p['sa_ln_b'],
      p['norm2_g'], p['norm2_b'],
      p['ca_wq'], p['ca_bq'],
      p['ca_wkv'], p['ca_bkv'],
      p['ca_wo'], p['ca_bo'],
      p['norm3_g'], p['norm3_b'],
      p['ff_w1'], p['ff_b1'],
      p['ff_w2'], p['ff_b2'])
    return out, sattn, cattn


# --------------------------------------------------------------------------
# Parameter construction.
# NOTE: the 1/sqrt(d_per_head) attention scale is folded into the Q-projection
# weights/biases (sa_wqkv Q columns, ca_wq/ca_bq). A converter from a PyTorch
# state_dict must apply the same folding.
# --------------------------------------------------------------------------

def init_params(key, d_model, nhead, dim_feedforward, spatial_dim):
    D, F, SD, H = d_model, dim_feedforward, spatial_dim, nhead
    dh = D // H
    scale = 1.0 / math.sqrt(dh)
    keys = iter(jax.random.split(key, 32))

    def w(shape, fan_in):
        return jax.random.normal(next(keys), shape, jnp.float32) / math.sqrt(fan_in)

    zeros = lambda *s: jnp.zeros(s, jnp.float32)
    ones = lambda *s: jnp.ones(s, jnp.float32)

    # spatial self-attention: fused QKV weight, Q columns pre-scaled.
    sa_wq = w((D, D), D) * scale
    sa_wk = w((D, D), D)
    sa_wv = w((D, D), D)
    sa_wqkv = jnp.concatenate([sa_wq, sa_wk, sa_wv], axis=1).astype(jnp.bfloat16)

    # cross attention: Q weight pre-scaled, fused KV weight.
    ca_wq = (w((D, D), D) * scale).astype(jnp.bfloat16)
    ca_wkv = jnp.concatenate([w((D, D), D), w((D, D), D)], axis=1).astype(jnp.bfloat16)

    return {
        # layer norms (stored as (1, D) so they broadcast row-wise in-kernel)
        'norm1_g': ones(1, D), 'norm1_b': zeros(1, D),
        'norm2_g': ones(1, D), 'norm2_b': zeros(1, D),
        'norm3_g': ones(1, D), 'norm3_b': zeros(1, D),
        # spatial self-attention (fusion='mul', multihead=True)
        'sa_wqkv': sa_wqkv, 'sa_bqkv': zeros(1, 3 * D),
        'sa_wloc': w((SD, H), SD), 'sa_bloc': jnp.zeros((H,), jnp.float32),
        'sa_wfc': w((D, D), D).astype(jnp.bfloat16), 'sa_bfc': zeros(1, D),
        'sa_ln_g': ones(1, D), 'sa_ln_b': zeros(1, D),
        # cross attention (nn.MultiheadAttention, batch_first)
        'ca_wq': ca_wq, 'ca_bq': zeros(1, D),
        'ca_wkv': ca_wkv, 'ca_bkv': zeros(1, 2 * D),
        'ca_wo': w((D, D), D).astype(jnp.bfloat16), 'ca_bo': zeros(1, D),
        # feed-forward
        'ff_w1': w((D, F), D).astype(jnp.bfloat16), 'ff_b1': zeros(1, F),
        'ff_w2': w((F, D), F).astype(jnp.bfloat16), 'ff_b2': zeros(1, D),
    }


if __name__ == "__main__":
    B, L, T = 2, 8, 8
    D, H, FF, SD = 32, 4, 64, 5

    key = jax.random.PRNGKey(0)
    k1, k2, k3 = jax.random.split(key, 3)
    tgt = jax.random.normal(k1, (B, L, D), jnp.float32)
    memory = jax.random.normal(k2, (B, T, D), jnp.float32)
    tgt_pairwise_locs = jax.random.normal(k3, (B, L, L, SD), jnp.float32)

    params = init_params(jax.random.PRNGKey(42), D, H, FF, SD)

    out, self_attn, cross_attn = transformer_spatial_decoder_layer(
        params, tgt, memory, tgt_pairwise_locs, nhead=H)
    jax.block_until_ready((out, self_attn, cross_attn))

    assert out.shape == (B, L, D)
    assert self_attn.shape == (H, B, L, L)
    assert cross_attn.shape == (B, L, T)
    assert bool(jnp.all(jnp.isfinite(out)))
    assert bool(jnp.all(jnp.isfinite(self_attn)))
    assert bool(jnp.all(jnp.isfinite(cross_attn)))
    # attention rows must sum to ~1
    assert bool(jnp.allclose(jnp.sum(self_attn, axis=-1), 1.0, atol=1e-4))
    assert bool(jnp.allclose(jnp.sum(cross_attn, axis=-1), 1.0, atol=1e-4))
    print("KERNEL_OK")
</pallas_src>

<mosaic_0001>
module attributes {stable_mosaic.version = 11 : i64} {
  func.func @_fused_layer_kernel(%arg0: i32, %arg1: memref<2x8x32xf32, #tpu.memory_space<vmem>>, %arg2: memref<2x8x32xf32, #tpu.memory_space<vmem>>, %arg3: memref<2x5x8x8xf32, #tpu.memory_space<vmem>>, %arg4: memref<1x32xf32, #tpu.memory_space<vmem>>, %arg5: memref<1x32xf32, #tpu.memory_space<vmem>>, %arg6: memref<32x96xbf16, #tpu.memory_space<vmem>>, %arg7: memref<1x96xf32, #tpu.memory_space<vmem>>, %arg8: memref<5x4xf32, #tpu.memory_space<smem>>, %arg9: memref<4xf32, #tpu.memory_space<smem>>, %arg10: memref<32x32xbf16, #tpu.memory_space<vmem>>, %arg11: memref<1x32xf32, #tpu.memory_space<vmem>>, %arg12: memref<1x32xf32, #tpu.memory_space<vmem>>, %arg13: memref<1x32xf32, #tpu.memory_space<vmem>>, %arg14: memref<1x32xf32, #tpu.memory_space<vmem>>, %arg15: memref<1x32xf32, #tpu.memory_space<vmem>>, %arg16: memref<32x32xbf16, #tpu.memory_space<vmem>>, %arg17: memref<1x32xf32, #tpu.memory_space<vmem>>, %arg18: memref<32x64xbf16, #tpu.memory_space<vmem>>, %arg19: memref<1x64xf32, #tpu.memory_space<vmem>>, %arg20: memref<32x32xbf16, #tpu.memory_space<vmem>>, %arg21: memref<1x32xf32, #tpu.memory_space<vmem>>, %arg22: memref<1x32xf32, #tpu.memory_space<vmem>>, %arg23: memref<1x32xf32, #tpu.memory_space<vmem>>, %arg24: memref<32x64xbf16, #tpu.memory_space<vmem>>, %arg25: memref<1x64xf32, #tpu.memory_space<vmem>>, %arg26: memref<64x32xbf16, #tpu.memory_space<vmem>>, %arg27: memref<1x32xf32, #tpu.memory_space<vmem>>, %arg28: memref<2x8x32xf32, #tpu.memory_space<vmem>>, %arg29: memref<4x2x8x8xf32, #tpu.memory_space<vmem>>, %arg30: memref<2x8x8xf32, #tpu.memory_space<vmem>>) attributes {dimension_semantics = [#tpu.dimension_semantics<parallel>], iteration_bounds = array<i64: 1>, scalar_prefetch = 0 : i64, scratch_operands = 0 : i64, tpu.core_type = #tpu.core_type<tc>, window_params = [{transform_indices = @transform_0, window_bounds = array<i64: 2, 8, 32>}, {transform_indices = @transform_1, window_bounds = array<i64: 2, 8, 32>}, {transform_indices = @transform_2, window_bounds = array<i64: 2, 5, 8, 8>}, {pipeline_mode = #tpu.pipeline_mode<synchronous>, transform_indices = @transform_3, window_bounds = array<i64: 1, 32>}, {pipeline_mode = #tpu.pipeline_mode<synchronous>, transform_indices = @transform_4, window_bounds = array<i64: 1, 32>}, {pipeline_mode = #tpu.pipeline_mode<synchronous>, transform_indices = @transform_5, window_bounds = array<i64: 32, 96>}, {pipeline_mode = #tpu.pipeline_mode<synchronous>, transform_indices = @transform_6, window_bounds = array<i64: 1, 96>}, {transform_indices = @transform_7, window_bounds = array<i64: 5, 4>}, {transform_indices = @transform_8, window_bounds = array<i64: 4>}, {pipeline_mode = #tpu.pipeline_mode<synchronous>, transform_indices = @transform_9, window_bounds = array<i64: 32, 32>}, {pipeline_mode = #tpu.pipeline_mode<synchronous>, transform_indices = @transform_10, window_bounds = array<i64: 1, 32>}, {pipeline_mode = #tpu.pipeline_mode<synchronous>, transform_indices = @transform_11, window_bounds = array<i64: 1, 32>}, {pipeline_mode = #tpu.pipeline_mode<synchronous>, transform_indices = @transform_12, window_bounds = array<i64: 1, 32>}, {pipeline_mode = #tpu.pipeline_mode<synchronous>, transform_indices = @transform_13, window_bounds = array<i64: 1, 32>}, {pipeline_mode = #tpu.pipeline_mode<synchronous>, transform_indices = @transform_14, window_bounds = array<i64: 1, 32>}, {pipeline_mode = #tpu.pipeline_mode<synchronous>, transform_indices = @transform_15, window_bounds = array<i64: 32, 32>}, {pipeline_mode = #tpu.pipeline_mode<synchronous>, transform_indices = @transform_16, window_bounds = array<i64: 1, 32>}, {pipeline_mode = #tpu.pipeline_mode<synchronous>, transform_indices = @transform_17, window_bounds = array<i64: 32, 64>}, {pipeline_mode = #tpu.pipeline_mode<synchronous>, transform_indices = @transform_18, window_bounds = array<i64: 1, 64>}, {pipeline_mode = #tpu.pipeline_mode<synchronous>, transform_indices = @transform_19, window_bounds = array<i64: 32, 32>}, {pipeline_mode = #tpu.pipeline_mode<synchronous>, transform_indices = @transform_20, window_bounds = array<i64: 1, 32>}, {pipeline_mode = #tpu.pipeline_mode<synchronous>, transform_indices = @transform_21, window_bounds = array<i64: 1, 32>}, {pipeline_mode = #tpu.pipeline_mode<synchronous>, transform_indices = @transform_22, window_bounds = array<i64: 1, 32>}, {pipeline_mode = #tpu.pipeline_mode<synchronous>, transform_indices = @transform_23, window_bounds = array<i64: 32, 64>}, {pipeline_mode = #tpu.pipeline_mode<synchronous>, transform_indices = @transform_24, window_bounds = array<i64: 1, 64>}, {pipeline_mode = #tpu.pipeline_mode<synchronous>, transform_indices = @transform_25, window_bounds = array<i64: 64, 32>}, {pipeline_mode = #tpu.pipeline_mode<synchronous>, transform_indices = @transform_26, window_bounds = array<i64: 1, 32>}, {transform_indices = @transform_27, window_bounds = array<i64: 2, 8, 32>}, {transform_indices = @transform_28, window_bounds = array<i64: 4, 2, 8, 8>}, {transform_indices = @transform_29, window_bounds = array<i64: 2, 8, 8>}]} {
    %c0 = arith.constant 0 : index
    %c0_0 = arith.constant 0 : index
    %c0_1 = arith.constant 0 : index
    %0 = vector.load %arg1[%c0, %c0_0, %c0_1] : memref<2x8x32xf32, #tpu.memory_space<vmem>>, vector<2x8x32xf32>
    %1 = vector.shape_cast %0 : vector<2x8x32xf32> to vector<16x32xf32>
    %c0_2 = arith.constant 0 : index
    %c0_3 = arith.constant 0 : index
    %2 = vector.load %arg4[%c0_2, %c0_3] : memref<1x32xf32, #tpu.memory_space<vmem>>, vector<1x32xf32>
    %c0_4 = arith.constant 0 : index
    %c0_5 = arith.constant 0 : index
    %3 = vector.load %arg5[%c0_4, %c0_5] : memref<1x32xf32, #tpu.memory_space<vmem>>, vector<1x32xf32>
    %cst = arith.constant dense<0.000000e+00> : vector<16xf32>
    %4 = vector.multi_reduction <add>, %1, %cst [1] : vector<16x32xf32> to vector<16xf32>
    %5 = vector.shape_cast %4 : vector<16xf32> to vector<16x1xf32>
    %cst_6 = arith.constant 3.200000e+01 : f32
    %6 = vector.broadcast %cst_6 : f32 to vector<16x1xf32>
    %7 = arith.divf %5, %6 : vector<16x1xf32>
    %8 = vector.broadcast %7 : vector<16x1xf32> to vector<16x32xf32>
    %9 = arith.subf %1, %8 : vector<16x32xf32>
    %10 = arith.mulf %9, %9 : vector<16x32xf32>
    %cst_7 = arith.constant dense<0.000000e+00> : vector<16xf32>
    %11 = vector.multi_reduction <add>, %10, %cst_7 [1] : vector<16x32xf32> to vector<16xf32>
    %12 = vector.shape_cast %11 : vector<16xf32> to vector<16x1xf32>
    %cst_8 = arith.constant 3.200000e+01 : f32
    %13 = vector.broadcast %cst_8 : f32 to vector<16x1xf32>
    %14 = arith.divf %12, %13 : vector<16x1xf32>
    %15 = vector.broadcast %7 : vector<16x1xf32> to vector<16x32xf32>
    %16 = arith.subf %1, %15 : vector<16x32xf32>
    %cst_9 = arith.constant 9.99999974E-6 : f32
    %17 = vector.broadcast %cst_9 : f32 to vector<16x1xf32>
    %18 = arith.addf %14, %17 : vector<16x1xf32>
    %19 = math.rsqrt %18 : vector<16x1xf32>
    %20 = vector.broadcast %19 : vector<16x1xf32> to vector<16x32xf32>
    %21 = arith.mulf %16, %20 : vector<16x32xf32>
    %22 = vector.broadcast %2 : vector<1x32xf32> to vector<16x32xf32>
    %23 = arith.mulf %21, %22 : vector<16x32xf32>
    %24 = vector.broadcast %3 : vector<1x32xf32> to vector<16x32xf32>
    %25 = arith.addf %23, %24 : vector<16x32xf32>
    %c0_10 = arith.constant 0 : index
    %c0_11 = arith.constant 0 : index
    %26 = vector.load %arg6[%c0_10, %c0_11] : memref<32x96xbf16, #tpu.memory_space<vmem>>, vector<32x96xbf16>
    %27 = arith.truncf %25 : vector<16x32xf32> to vector<16x32xbf16>
    %cst_12 = arith.constant dense<0.000000e+00> : vector<16x96xf32>
    %28 = tpu.matmul %27, %26, %cst_12 {dimension_numbers = #tpu.dot_dimension_numbers<[1], [0], [0], [1], [0, 0, 1, 1], [], []>} : vector<16x32xbf16>, vector<32x96xbf16>, vector<16x96xf32> -> vector<16x96xf32>
    %c0_13 = arith.constant 0 : index
    %c0_14 = arith.constant 0 : index
    %29 = vector.load %arg7[%c0_13, %c0_14] : memref<1x96xf32, #tpu.memory_space<vmem>>, vector<1x96xf32>
    %30 = vector.broadcast %29 : vector<1x96xf32> to vector<16x96xf32>
    %31 = arith.addf %28, %30 : vector<16x96xf32>
    %32 = arith.truncf %31 : vector<16x96xf32> to vector<16x96xbf16>
    %33 = vector.shape_cast %32 : vector<16x96xbf16> to vector<2x8x96xbf16>
    %c0_15 = arith.constant 0 : index
    %c0_16 = arith.constant 0 : index
    %c0_17 = arith.constant 0 : index
    %c0_18 = arith.constant 0 : index
    %34 = vector.load %arg3[%c0_15, %c0_16, %c0_17, %c0_18] : memref<2x5x8x8xf32, #tpu.memory_space<vmem>>, vector<2x5x8x8xf32>
    %35 = vector.extract_strided_slice %34 {offsets = [0, 0, 0, 0], sizes = [2, 1, 8, 8], strides = [1, 1, 1, 1]} : vector<2x5x8x8xf32> to vector<2x1x8x8xf32>
    %36 = vector.shape_cast %35 : vector<2x1x8x8xf32> to vector<2x8x8xf32>
    %c0_19 = arith.constant 0 : index
    %c0_20 = arith.constant 0 : index
    %37 = memref.load %arg8[%c0_19, %c0_20] : memref<5x4xf32, #tpu.memory_space<smem>>
    %38 = vector.broadcast %37 : f32 to vector<2x8x8xf32>
    %39 = arith.mulf %36, %38 : vector<2x8x8xf32>
    %40 = vector.extract_strided_slice %34 {offsets = [0, 1, 0, 0], sizes = [2, 1, 8, 8], strides = [1, 1, 1, 1]} : vector<2x5x8x8xf32> to vector<2x1x8x8xf32>
    %41 = vector.shape_cast %40 : vector<2x1x8x8xf32> to vector<2x8x8xf32>
    %c1 = arith.constant 1 : index
    %c0_21 = arith.constant 0 : index
    %42 = memref.load %arg8[%c1, %c0_21] : memref<5x4xf32, #tpu.memory_space<smem>>
    %43 = vector.broadcast %42 : f32 to vector<2x8x8xf32>
    %44 = arith.mulf %41, %43 : vector<2x8x8xf32>
    %45 = arith.addf %39, %44 : vector<2x8x8xf32>
    %46 = vector.extract_strided_slice %34 {offsets = [0, 2, 0, 0], sizes = [2, 1, 8, 8], strides = [1, 1, 1, 1]} : vector<2x5x8x8xf32> to vector<2x1x8x8xf32>
    %47 = vector.shape_cast %46 : vector<2x1x8x8xf32> to vector<2x8x8xf32>
    %c2 = arith.constant 2 : index
    %c0_22 = arith.constant 0 : index
    %48 = memref.load %arg8[%c2, %c0_22] : memref<5x4xf32, #tpu.memory_space<smem>>
    %49 = vector.broadcast %48 : f32 to vector<2x8x8xf32>
    %50 = arith.mulf %47, %49 : vector<2x8x8xf32>
    %51 = arith.addf %45, %50 : vector<2x8x8xf32>
    %52 = vector.extract_strided_slice %34 {offsets = [0, 3, 0, 0], sizes = [2, 1, 8, 8], strides = [1, 1, 1, 1]} : vector<2x5x8x8xf32> to vector<2x1x8x8xf32>
    %53 = vector.shape_cast %52 : vector<2x1x8x8xf32> to vector<2x8x8xf32>
    %c3 = arith.constant 3 : index
    %c0_23 = arith.constant 0 : index
    %54 = memref.load %arg8[%c3, %c0_23] : memref<5x4xf32, #tpu.memory_space<smem>>
    %55 = vector.broadcast %54 : f32 to vector<2x8x8xf32>
    %56 = arith.mulf %53, %55 : vector<2x8x8xf32>
    %57 = arith.addf %51, %56 : vector<2x8x8xf32>
    %58 = vector.extract_strided_slice %34 {offsets = [0, 4, 0, 0], sizes = [2, 1, 8, 8], strides = [1, 1, 1, 1]} : vector<2x5x8x8xf32> to vector<2x1x8x8xf32>
    %59 = vector.shape_cast %58 : vector<2x1x8x8xf32> to vector<2x8x8xf32>
    %c4 = arith.constant 4 : index
    %c0_24 = arith.constant 0 : index
    %60 = memref.load %arg8[%c4, %c0_24] : memref<5x4xf32, #tpu.memory_space<smem>>
    %61 = vector.broadcast %60 : f32 to vector<2x8x8xf32>
    %62 = arith.mulf %59, %61 : vector<2x8x8xf32>
    %63 = arith.addf %57, %62 : vector<2x8x8xf32>
    %c0_25 = arith.constant 0 : index
    %64 = memref.load %arg9[%c0_25] : memref<4xf32, #tpu.memory_space<smem>>
    %65 = vector.broadcast %64 : f32 to vector<2x8x8xf32>
    %66 = arith.addf %63, %65 : vector<2x8x8xf32>
    %cst_26 = arith.constant 0.000000e+00 : f32
    %67 = vector.broadcast %cst_26 : f32 to vector<2x8x8xf32>
    %68 = arith.maximumf %66, %67 : vector<2x8x8xf32>
    %cst_27 = arith.constant 9.99999997E-7 : f32
    %69 = vector.broadcast %cst_27 : f32 to vector<2x8x8xf32>
    %70 = arith.maximumf %68, %69 : vector<2x8x8xf32>
    %71 = math.log %70 : vector<2x8x8xf32>
    %72 = vector.extract_strided_slice %34 {offsets = [0, 0, 0, 0], sizes = [2, 1, 8, 8], strides = [1, 1, 1, 1]} : vector<2x5x8x8xf32> to vector<2x1x8x8xf32>
    %73 = vector.shape_cast %72 : vector<2x1x8x8xf32> to vector<2x8x8xf32>
    %c0_28 = arith.constant 0 : index
    %c1_29 = arith.constant 1 : index
    %74 = memref.load %arg8[%c0_28, %c1_29] : memref<5x4xf32, #tpu.memory_space<smem>>
    %75 = vector.broadcast %74 : f32 to vector<2x8x8xf32>
    %76 = arith.mulf %73, %75 : vector<2x8x8xf32>
    %77 = vector.extract_strided_slice %34 {offsets = [0, 1, 0, 0], sizes = [2, 1, 8, 8], strides = [1, 1, 1, 1]} : vector<2x5x8x8xf32> to vector<2x1x8x8xf32>
    %78 = vector.shape_cast %77 : vector<2x1x8x8xf32> to vector<2x8x8xf32>
    %c1_30 = arith.constant 1 : index
    %c1_31 = arith.constant 1 : index
    %79 = memref.load %arg8[%c1_30, %c1_31] : memref<5x4xf32, #tpu.memory_space<smem>>
    %80 = vector.broadcast %79 : f32 to vector<2x8x8xf32>
    %81 = arith.mulf %78, %80 : vector<2x8x8xf32>
    %82 = arith.addf %76, %81 : vector<2x8x8xf32>
    %83 = vector.extract_strided_slice %34 {offsets = [0, 2, 0, 0], sizes = [2, 1, 8, 8], strides = [1, 1, 1, 1]} : vector<2x5x8x8xf32> to vector<2x1x8x8xf32>
    %84 = vector.shape_cast %83 : vector<2x1x8x8xf32> to vector<2x8x8xf32>
    %c2_32 = arith.constant 2 : index
    %c1_33 = arith.constant 1 : index
    %85 = memref.load %arg8[%c2_32, %c1_33] : memref<5x4xf32, #tpu.memory_space<smem>>
    %86 = vector.broadcast %85 : f32 to vector<2x8x8xf32>
    %87 = arith.mulf %84, %86 : vector<2x8x8xf32>
    %88 = arith.addf %82, %87 : vector<2x8x8xf32>
    %89 = vector.extract_strided_slice %34 {offsets = [0, 3, 0, 0], sizes = [2, 1, 8, 8], strides = [1, 1, 1, 1]} : vector<2x5x8x8xf32> to vector<2x1x8x8xf32>
    %90 = vector.shape_cast %89 : vector<2x1x8x8xf32> to vector<2x8x8xf32>
    %c3_34 = arith.constant 3 : index
    %c1_35 = arith.constant 1 : index
    %91 = memref.load %arg8[%c3_34, %c1_35] : memref<5x4xf32, #tpu.memory_space<smem>>
    %92 = vector.broadcast %91 : f32 to vector<2x8x8xf32>
    %93 = arith.mulf %90, %92 : vector<2x8x8xf32>
    %94 = arith.addf %88, %93 : vector<2x8x8xf32>
    %95 = vector.extract_strided_slice %34 {offsets = [0, 4, 0, 0], sizes = [2, 1, 8, 8], strides = [1, 1, 1, 1]} : vector<2x5x8x8xf32> to vector<2x1x8x8xf32>
    %96 = vector.shape_cast %95 : vector<2x1x8x8xf32> to vector<2x8x8xf32>
    %c4_36 = arith.constant 4 : index
    %c1_37 = arith.constant 1 : index
    %97 = memref.load %arg8[%c4_36, %c1_37] : memref<5x4xf32, #tpu.memory_space<smem>>
    %98 = vector.broadcast %97 : f32 to vector<2x8x8xf32>
    %99 = arith.mulf %96, %98 : vector<2x8x8xf32>
    %100 = arith.addf %94, %99 : vector<2x8x8xf32>
    %c1_38 = arith.constant 1 : index
    %101 = memref.load %arg9[%c1_38] : memref<4xf32, #tpu.memory_space<smem>>
    %102 = vector.broadcast %101 : f32 to vector<2x8x8xf32>
    %103 = arith.addf %100, %102 : vector<2x8x8xf32>
    %cst_39 = arith.constant 0.000000e+00 : f32
    %104 = vector.broadcast %cst_39 : f32 to vector<2x8x8xf32>
    %105 = arith.maximumf %103, %104 : vector<2x8x8xf32>
    %cst_40 = arith.constant 9.99999997E-7 : f32
    %106 = vector.broadcast %cst_40 : f32 to vector<2x8x8xf32>
    %107 = arith.maximumf %105, %106 : vector<2x8x8xf32>
    %108 = math.log %107 : vector<2x8x8xf32>
    %109 = vector.extract_strided_slice %34 {offsets = [0, 0, 0, 0], sizes = [2, 1, 8, 8], strides = [1, 1, 1, 1]} : vector<2x5x8x8xf32> to vector<2x1x8x8xf32>
    %110 = vector.shape_cast %109 : vector<2x1x8x8xf32> to vector<2x8x8xf32>
    %c0_41 = arith.constant 0 : index
    %c2_42 = arith.constant 2 : index
    %111 = memref.load %arg8[%c0_41, %c2_42] : memref<5x4xf32, #tpu.memory_space<smem>>
    %112 = vector.broadcast %111 : f32 to vector<2x8x8xf32>
    %113 = arith.mulf %110, %112 : vector<2x8x8xf32>
    %114 = vector.extract_strided_slice %34 {offsets = [0, 1, 0, 0], sizes = [2, 1, 8, 8], strides = [1, 1, 1, 1]} : vector<2x5x8x8xf32> to vector<2x1x8x8xf32>
    %115 = vector.shape_cast %114 : vector<2x1x8x8xf32> to vector<2x8x8xf32>
    %c1_43 = arith.constant 1 : index
    %c2_44 = arith.constant 2 : index
    %116 = memref.load %arg8[%c1_43, %c2_44] : memref<5x4xf32, #tpu.memory_space<smem>>
    %117 = vector.broadcast %116 : f32 to vector<2x8x8xf32>
    %118 = arith.mulf %115, %117 : vector<2x8x8xf32>
    %119 = arith.addf %113, %118 : vector<2x8x8xf32>
    %120 = vector.extract_strided_slice %34 {offsets = [0, 2, 0, 0], sizes = [2, 1, 8, 8], strides = [1, 1, 1, 1]} : vector<2x5x8x8xf32> to vector<2x1x8x8xf32>
    %121 = vector.shape_cast %120 : vector<2x1x8x8xf32> to vector<2x8x8xf32>
    %c2_45 = arith.constant 2 : index
    %c2_46 = arith.constant 2 : index
    %122 = memref.load %arg8[%c2_45, %c2_46] : memref<5x4xf32, #tpu.memory_space<smem>>
    %123 = vector.broadcast %122 : f32 to vector<2x8x8xf32>
    %124 = arith.mulf %121, %123 : vector<2x8x8xf32>
    %125 = arith.addf %119, %124 : vector<2x8x8xf32>
    %126 = vector.extract_strided_slice %34 {offsets = [0, 3, 0, 0], sizes = [2, 1, 8, 8], strides = [1, 1, 1, 1]} : vector<2x5x8x8xf32> to vector<2x1x8x8xf32>
    %127 = vector.shape_cast %126 : vector<2x1x8x8xf32> to vector<2x8x8xf32>
    %c3_47 = arith.constant 3 : index
    %c2_48 = arith.constant 2 : index
    %128 = memref.load %arg8[%c3_47, %c2_48] : memref<5x4xf32, #tpu.memory_space<smem>>
    %129 = vector.broadcast %128 : f32 to vector<2x8x8xf32>
    %130 = arith.mulf %127, %129 : vector<2x8x8xf32>
    %131 = arith.addf %125, %130 : vector<2x8x8xf32>
    %132 = vector.extract_strided_slice %34 {offsets = [0, 4, 0, 0], sizes = [2, 1, 8, 8], strides = [1, 1, 1, 1]} : vector<2x5x8x8xf32> to vector<2x1x8x8xf32>
    %133 = vector.shape_cast %132 : vector<2x1x8x8xf32> to vector<2x8x8xf32>
    %c4_49 = arith.constant 4 : index
    %c2_50 = arith.constant 2 : index
    %134 = memref.load %arg8[%c4_49, %c2_50] : memref<5x4xf32, #tpu.memory_space<smem>>
    %135 = vector.broadcast %134 : f32 to vector<2x8x8xf32>
    %136 = arith.mulf %133, %135 : vector<2x8x8xf32>
    %137 = arith.addf %131, %136 : vector<2x8x8xf32>
    %c2_51 = arith.constant 2 : index
    %138 = memref.load %arg9[%c2_51] : memref<4xf32, #tpu.memory_space<smem>>
    %139 = vector.broadcast %138 : f32 to vector<2x8x8xf32>
    %140 = arith.addf %137, %139 : vector<2x8x8xf32>
    %cst_52 = arith.constant 0.000000e+00 : f32
    %141 = vector.broadcast %cst_52 : f32 to vector<2x8x8xf32>
    %142 = arith.maximumf %140, %141 : vector<2x8x8xf32>
    %cst_53 = arith.constant 9.99999997E-7 : f32
    %143 = vector.broadcast %cst_53 : f32 to vector<2x8x8xf32>
    %144 = arith.maximumf %142, %143 : vector<2x8x8xf32>
    %145 = math.log %144 : vector<2x8x8xf32>
    %146 = vector.extract_strided_slice %34 {offsets = [0, 0, 0, 0], sizes = [2, 1, 8, 8], strides = [1, 1, 1, 1]} : vector<2x5x8x8xf32> to vector<2x1x8x8xf32>
    %147 = vector.shape_cast %146 : vector<2x1x8x8xf32> to vector<2x8x8xf32>
    %c0_54 = arith.constant 0 : index
    %c3_55 = arith.constant 3 : index
    %148 = memref.load %arg8[%c0_54, %c3_55] : memref<5x4xf32, #tpu.memory_space<smem>>
    %149 = vector.broadcast %148 : f32 to vector<2x8x8xf32>
    %150 = arith.mulf %147, %149 : vector<2x8x8xf32>
    %151 = vector.extract_strided_slice %34 {offsets = [0, 1, 0, 0], sizes = [2, 1, 8, 8], strides = [1, 1, 1, 1]} : vector<2x5x8x8xf32> to vector<2x1x8x8xf32>
    %152 = vector.shape_cast %151 : vector<2x1x8x8xf32> to vector<2x8x8xf32>
    %c1_56 = arith.constant 1 : index
    %c3_57 = arith.constant 3 : index
    %153 = memref.load %arg8[%c1_56, %c3_57] : memref<5x4xf32, #tpu.memory_space<smem>>
    %154 = vector.broadcast %153 : f32 to vector<2x8x8xf32>
    %155 = arith.mulf %152, %154 : vector<2x8x8xf32>
    %156 = arith.addf %150, %155 : vector<2x8x8xf32>
    %157 = vector.extract_strided_slice %34 {offsets = [0, 2, 0, 0], sizes = [2, 1, 8, 8], strides = [1, 1, 1, 1]} : vector<2x5x8x8xf32> to vector<2x1x8x8xf32>
    %158 = vector.shape_cast %157 : vector<2x1x8x8xf32> to vector<2x8x8xf32>
    %c2_58 = arith.constant 2 : index
    %c3_59 = arith.constant 3 : index
    %159 = memref.load %arg8[%c2_58, %c3_59] : memref<5x4xf32, #tpu.memory_space<smem>>
    %160 = vector.broadcast %159 : f32 to vector<2x8x8xf32>
    %161 = arith.mulf %158, %160 : vector<2x8x8xf32>
    %162 = arith.addf %156, %161 : vector<2x8x8xf32>
    %163 = vector.extract_strided_slice %34 {offsets = [0, 3, 0, 0], sizes = [2, 1, 8, 8], strides = [1, 1, 1, 1]} : vector<2x5x8x8xf32> to vector<2x1x8x8xf32>
    %164 = vector.shape_cast %163 : vector<2x1x8x8xf32> to vector<2x8x8xf32>
    %c3_60 = arith.constant 3 : index
    %c3_61 = arith.constant 3 : index
    %165 = memref.load %arg8[%c3_60, %c3_61] : memref<5x4xf32, #tpu.memory_space<smem>>
    %166 = vector.broadcast %165 : f32 to vector<2x8x8xf32>
    %167 = arith.mulf %164, %166 : vector<2x8x8xf32>
    %168 = arith.addf %162, %167 : vector<2x8x8xf32>
    %169 = vector.extract_strided_slice %34 {offsets = [0, 4, 0, 0], sizes = [2, 1, 8, 8], strides = [1, 1, 1, 1]} : vector<2x5x8x8xf32> to vector<2x1x8x8xf32>
    %170 = vector.shape_cast %169 : vector<2x1x8x8xf32> to vector<2x8x8xf32>
    %c4_62 = arith.constant 4 : index
    %c3_63 = arith.constant 3 : index
    %171 = memref.load %arg8[%c4_62, %c3_63] : memref<5x4xf32, #tpu.memory_space<smem>>
    %172 = vector.broadcast %171 : f32 to vector<2x8x8xf32>
    %173 = arith.mulf %170, %172 : vector<2x8x8xf32>
    %174 = arith.addf %168, %173 : vector<2x8x8xf32>
    %c3_64 = arith.constant 3 : index
    %175 = memref.load %arg9[%c3_64] : memref<4xf32, #tpu.memory_space<smem>>
    %176 = vector.broadcast %175 : f32 to vector<2x8x8xf32>
    %177 = arith.addf %174, %176 : vector<2x8x8xf32>
    %cst_65 = arith.constant 0.000000e+00 : f32
    %178 = vector.broadcast %cst_65 : f32 to vector<2x8x8xf32>
    %179 = arith.maximumf %177, %178 : vector<2x8x8xf32>
    %cst_66 = arith.constant 9.99999997E-7 : f32
    %180 = vector.broadcast %cst_66 : f32 to vector<2x8x8xf32>
    %181 = arith.maximumf %179, %180 : vector<2x8x8xf32>
    %182 = math.log %181 : vector<2x8x8xf32>
    %c0_67 = arith.constant 0 : index
    %c0_68 = arith.constant 0 : index
    %183 = vector.load %arg10[%c0_67, %c0_68] : memref<32x32xbf16, #tpu.memory_space<vmem>>, vector<32x32xbf16>
    %cst_69 = arith.constant 0.000000e+00 : f32
    %184 = vector.broadcast %cst_69 : f32 to vector<16x32xf32>
    %185 = vector.extract_strided_slice %33 {offsets = [0, 0, 0], sizes = [2, 8, 8], strides = [1, 1, 1]} : vector<2x8x96xbf16> to vector<2x8x8xbf16>
    %186 = vector.extract_strided_slice %33 {offsets = [0, 0, 32], sizes = [2, 8, 8], strides = [1, 1, 1]} : vector<2x8x96xbf16> to vector<2x8x8xbf16>
    %187 = vector.extract_strided_slice %33 {offsets = [0, 0, 64], sizes = [2, 8, 8], strides = [1, 1, 1]} : vector<2x8x96xbf16> to vector<2x8x8xbf16>
    "tpu.trace_start"() <{level = 10 : i32, message = "bld,btd->blt"}> : () -> ()
    %cst_70 = arith.constant dense<0.000000e+00> : vector<2x8x8xf32>
    %188 = tpu.matmul %185, %186, %cst_70 {dimension_numbers = #tpu.dot_dimension_numbers<[2], [2], [1], [1], [0, 0, 0, 1, 1, 1], [0], [0]>} : vector<2x8x8xbf16>, vector<2x8x8xbf16>, vector<2x8x8xf32> -> vector<2x8x8xf32>
    "tpu.trace_stop"() : () -> ()
    %189 = arith.addf %188, %71 : vector<2x8x8xf32>
    %cst_71 = arith.constant dense<0xFF800000> : vector<2x8xf32>
    %190 = vector.multi_reduction <maximumf>, %189, %cst_71 [2] : vector<2x8x8xf32> to vector<2x8xf32>
    %191 = vector.shape_cast %190 : vector<2x8xf32> to vector<2x8x1xf32>
    %192 = vector.broadcast %191 : vector<2x8x1xf32> to vector<2x8x8xf32>
    %193 = arith.subf %189, %192 : vector<2x8x8xf32>
    %194 = math.exp %193 : vector<2x8x8xf32>
    %cst_72 = arith.constant dense<0.000000e+00> : vector<2x8xf32>
    %195 = vector.multi_reduction <add>, %194, %cst_72 [2] : vector<2x8x8xf32> to vector<2x8xf32>
    %196 = vector.shape_cast %195 : vector<2x8xf32> to vector<2x8x1xf32>
    %197 = vector.broadcast %196 : vector<2x8x1xf32> to vector<2x8x8xf32>
    %198 = arith.divf %194, %197 : vector<2x8x8xf32>
    %c0_73 = arith.constant 0 : index
    %c0_74 = arith.constant 0 : index
    %c0_75 = arith.constant 0 : index
    %c0_76 = arith.constant 0 : index
    %199 = vector.load %arg29[%c0_73, %c0_74, %c0_75, %c0_76] : memref<4x2x8x8xf32, #tpu.memory_space<vmem>>, vector<1x2x8x8xf32>
    %200 = vector.shape_cast %199 : vector<1x2x8x8xf32> to vector<2x8x8xf32>
    %201 = vector.shape_cast %198 : vector<2x8x8xf32> to vector<1x2x8x8xf32>
    tpu.vector_store %arg29[%c0_73, %c0_74, %c0_75, %c0_76], %201 {strides = array<i32>} : memref<4x2x8x8xf32, #tpu.memory_space<vmem>>, vector<1x2x8x8xf32>,
    %202 = arith.truncf %198 : vector<2x8x8xf32> to vector<2x8x8xbf16>
    "tpu.trace_start"() <{level = 10 : i32, message = "blt,btd->bld"}> : () -> ()
    %cst_77 = arith.constant dense<0.000000e+00> : vector<2x8x8xf32>
    %203 = tpu.matmul %202, %187, %cst_77 {dimension_numbers = #tpu.dot_dimension_numbers<[2], [1], [1], [2], [0, 0, 0, 1, 1, 2], [0], [0]>} : vector<2x8x8xbf16>, vector<2x8x8xbf16>, vector<2x8x8xf32> -> vector<2x8x8xf32>
    "tpu.trace_stop"() : () -> ()
    %204 = arith.truncf %203 : vector<2x8x8xf32> to vector<2x8x8xbf16>
    %205 = vector.shape_cast %204 : vector<2x8x8xbf16> to vector<16x8xbf16>
    %206 = vector.extract_strided_slice %183 {offsets = [0, 0], sizes = [8, 32], strides = [1, 1]} : vector<32x32xbf16> to vector<8x32xbf16>
    %cst_78 = arith.constant dense<0.000000e+00> : vector<16x32xf32>
    %207 = tpu.matmul %205, %206, %cst_78 {dimension_numbers = #tpu.dot_dimension_numbers<[1], [0], [0], [1], [0, 0, 1, 1], [], []>} : vector<16x8xbf16>, vector<8x32xbf16>, vector<16x32xf32> -> vector<16x32xf32>
    %208 = arith.addf %184, %207 : vector<16x32xf32>
    %209 = vector.extract_strided_slice %33 {offsets = [0, 0, 8], sizes = [2, 8, 8], strides = [1, 1, 1]} : vector<2x8x96xbf16> to vector<2x8x8xbf16>
    %210 = vector.extract_strided_slice %33 {offsets = [0, 0, 40], sizes = [2, 8, 8], strides = [1, 1, 1]} : vector<2x8x96xbf16> to vector<2x8x8xbf16>
    %211 = vector.extract_strided_slice %33 {offsets = [0, 0, 72], sizes = [2, 8, 8], strides = [1, 1, 1]} : vector<2x8x96xbf16> to vector<2x8x8xbf16>
    "tpu.trace_start"() <{level = 10 : i32, message = "bld,btd->blt"}> : () -> ()
    %cst_79 = arith.constant dense<0.000000e+00> : vector<2x8x8xf32>
    %212 = tpu.matmul %209, %210, %cst_79 {dimension_numbers = #tpu.dot_dimension_numbers<[2], [2], [1], [1], [0, 0, 0, 1, 1, 1], [0], [0]>} : vector<2x8x8xbf16>, vector<2x8x8xbf16>, vector<2x8x8xf32> -> vector<2x8x8xf32>
    "tpu.trace_stop"() : () -> ()
    %213 = arith.addf %212, %108 : vector<2x8x8xf32>
    %cst_80 = arith.constant dense<0xFF800000> : vector<2x8xf32>
    %214 = vector.multi_reduction <maximumf>, %213, %cst_80 [2] : vector<2x8x8xf32> to vector<2x8xf32>
    %215 = vector.shape_cast %214 : vector<2x8xf32> to vector<2x8x1xf32>
    %216 = vector.broadcast %215 : vector<2x8x1xf32> to vector<2x8x8xf32>
    %217 = arith.subf %213, %216 : vector<2x8x8xf32>
    %218 = math.exp %217 : vector<2x8x8xf32>
    %cst_81 = arith.constant dense<0.000000e+00> : vector<2x8xf32>
    %219 = vector.multi_reduction <add>, %218, %cst_81 [2] : vector<2x8x8xf32> to vector<2x8xf32>
    %220 = vector.shape_cast %219 : vector<2x8xf32> to vector<2x8x1xf32>
    %221 = vector.broadcast %220 : vector<2x8x1xf32> to vector<2x8x8xf32>
    %222 = arith.divf %218, %221 : vector<2x8x8xf32>
    %c1_82 = arith.constant 1 : index
    %c0_83 = arith.constant 0 : index
    %c0_84 = arith.constant 0 : index
    %c0_85 = arith.constant 0 : index
    %223 = vector.load %arg29[%c1_82, %c0_83, %c0_84, %c0_85] : memref<4x2x8x8xf32, #tpu.memory_space<vmem>>, vector<1x2x8x8xf32>
    %224 = vector.shape_cast %223 : vector<1x2x8x8xf32> to vector<2x8x8xf32>
    %225 = vector.shape_cast %222 : vector<2x8x8xf32> to vector<1x2x8x8xf32>
    tpu.vector_store %arg29[%c1_82, %c0_83, %c0_84, %c0_85], %225 {strides = array<i32>} : memref<4x2x8x8xf32, #tpu.memory_space<vmem>>, vector<1x2x8x8xf32>,
    %226 = arith.truncf %222 : vector<2x8x8xf32> to vector<2x8x8xbf16>
    "tpu.trace_start"() <{level = 10 : i32, message = "blt,btd->bld"}> : () -> ()
    %cst_86 = arith.constant dense<0.000000e+00> : vector<2x8x8xf32>
    %227 = tpu.matmul %226, %211, %cst_86 {dimension_numbers = #tpu.dot_dimension_numbers<[2], [1], [1], [2], [0, 0, 0, 1, 1, 2], [0], [0]>} : vector<2x8x8xbf16>, vector<2x8x8xbf16>, vector<2x8x8xf32> -> vector<2x8x8xf32>
    "tpu.trace_stop"() : () -> ()
    %228 = arith.truncf %227 : vector<2x8x8xf32> to vector<2x8x8xbf16>
    %229 = vector.shape_cast %228 : vector<2x8x8xbf16> to vector<16x8xbf16>
    %230 = vector.extract_strided_slice %183 {offsets = [8, 0], sizes = [8, 32], strides = [1, 1]} : vector<32x32xbf16> to vector<8x32xbf16>
    %cst_87 = arith.constant dense<0.000000e+00> : vector<16x32xf32>
    %231 = tpu.matmul %229, %230, %cst_87 {dimension_numbers = #tpu.dot_dimension_numbers<[1], [0], [0], [1], [0, 0, 1, 1], [], []>} : vector<16x8xbf16>, vector<8x32xbf16>, vector<16x32xf32> -> vector<16x32xf32>
    %232 = arith.addf %208, %231 : vector<16x32xf32>
    %233 = vector.extract_strided_slice %33 {offsets = [0, 0, 16], sizes = [2, 8, 8], strides = [1, 1, 1]} : vector<2x8x96xbf16> to vector<2x8x8xbf16>
    %234 = vector.extract_strided_slice %33 {offsets = [0, 0, 48], sizes = [2, 8, 8], strides = [1, 1, 1]} : vector<2x8x96xbf16> to vector<2x8x8xbf16>
    %235 = vector.extract_strided_slice %33 {offsets = [0, 0, 80], sizes = [2, 8, 8], strides = [1, 1, 1]} : vector<2x8x96xbf16> to vector<2x8x8xbf16>
    "tpu.trace_start"() <{level = 10 : i32, message = "bld,btd->blt"}> : () -> ()
    %cst_88 = arith.constant dense<0.000000e+00> : vector<2x8x8xf32>
    %236 = tpu.matmul %233, %234, %cst_88 {dimension_numbers = #tpu.dot_dimension_numbers<[2], [2], [1], [1], [0, 0, 0, 1, 1, 1], [0], [0]>} : vector<2x8x8xbf16>, vector<2x8x8xbf16>, vector<2x8x8xf32> -> vector<2x8x8xf32>
    "tpu.trace_stop"() : () -> ()
    %237 = arith.addf %236, %145 : vector<2x8x8xf32>
    %cst_89 = arith.constant dense<0xFF800000> : vector<2x8xf32>
    %238 = vector.multi_reduction <maximumf>, %237, %cst_89 [2] : vector<2x8x8xf32> to vector<2x8xf32>
    %239 = vector.shape_cast %238 : vector<2x8xf32> to vector<2x8x1xf32>
    %240 = vector.broadcast %239 : vector<2x8x1xf32> to vector<2x8x8xf32>
    %241 = arith.subf %237, %240 : vector<2x8x8xf32>
    %242 = math.exp %241 : vector<2x8x8xf32>
    %cst_90 = arith.constant dense<0.000000e+00> : vector<2x8xf32>
    %243 = vector.multi_reduction <add>, %242, %cst_90 [2] : vector<2x8x8xf32> to vector<2x8xf32>
    %244 = vector.shape_cast %243 : vector<2x8xf32> to vector<2x8x1xf32>
    %245 = vector.broadcast %244 : vector<2x8x1xf32> to vector<2x8x8xf32>
    %246 = arith.divf %242, %245 : vector<2x8x8xf32>
    %c2_91 = arith.constant 2 : index
    %c0_92 = arith.constant 0 : index
    %c0_93 = arith.constant 0 : index
    %c0_94 = arith.constant 0 : index
    %247 = vector.load %arg29[%c2_91, %c0_92, %c0_93, %c0_94] : memref<4x2x8x8xf32, #tpu.memory_space<vmem>>, vector<1x2x8x8xf32>
    %248 = vector.shape_cast %247 : vector<1x2x8x8xf32> to vector<2x8x8xf32>
    %249 = vector.shape_cast %246 : vector<2x8x8xf32> to vector<1x2x8x8xf32>
    tpu.vector_store %arg29[%c2_91, %c0_92, %c0_93, %c0_94], %249 {strides = array<i32>} : memref<4x2x8x8xf32, #tpu.memory_space<vmem>>, vector<1x2x8x8xf32>,
    %250 = arith.truncf %246 : vector<2x8x8xf32> to vector<2x8x8xbf16>
    "tpu.trace_start"() <{level = 10 : i32, message = "blt,btd->bld"}> : () -> ()
    %cst_95 = arith.constant dense<0.000000e+00> : vector<2x8x8xf32>
    %251 = tpu.matmul %250, %235, %cst_95 {dimension_numbers = #tpu.dot_dimension_numbers<[2], [1], [1], [2], [0, 0, 0, 1, 1, 2], [0], [0]>} : vector<2x8x8xbf16>, vector<2x8x8xbf16>, vector<2x8x8xf32> -> vector<2x8x8xf32>
    "tpu.trace_stop"() : () -> ()
    %252 = arith.truncf %251 : vector<2x8x8xf32> to vector<2x8x8xbf16>
    %253 = vector.shape_cast %252 : vector<2x8x8xbf16> to vector<16x8xbf16>
    %254 = vector.extract_strided_slice %183 {offsets = [16, 0], sizes = [8, 32], strides = [1, 1]} : vector<32x32xbf16> to vector<8x32xbf16>
    %cst_96 = arith.constant dense<0.000000e+00> : vector<16x32xf32>
    %255 = tpu.matmul %253, %254, %cst_96 {dimension_numbers = #tpu.dot_dimension_numbers<[1], [0], [0], [1], [0, 0, 1, 1], [], []>} : vector<16x8xbf16>, vector<8x32xbf16>, vector<16x32xf32> -> vector<16x32xf32>
    %256 = arith.addf %232, %255 : vector<16x32xf32>
    %257 = vector.extract_strided_slice %33 {offsets = [0, 0, 24], sizes = [2, 8, 8], strides = [1, 1, 1]} : vector<2x8x96xbf16> to vector<2x8x8xbf16>
    %258 = vector.extract_strided_slice %33 {offsets = [0, 0, 56], sizes = [2, 8, 8], strides = [1, 1, 1]} : vector<2x8x96xbf16> to vector<2x8x8xbf16>
    %259 = vector.extract_strided_slice %33 {offsets = [0, 0, 88], sizes = [2, 8, 8], strides = [1, 1, 1]} : vector<2x8x96xbf16> to vector<2x8x8xbf16>
    "tpu.trace_start"() <{level = 10 : i32, message = "bld,btd->blt"}> : () -> ()
    %cst_97 = arith.constant dense<0.000000e+00> : vector<2x8x8xf32>
    %260 = tpu.matmul %257, %258, %cst_97 {dimension_numbers = #tpu.dot_dimension_numbers<[2], [2], [1], [1], [0, 0, 0, 1, 1, 1], [0], [0]>} : vector<2x8x8xbf16>, vector<2x8x8xbf16>, vector<2x8x8xf32> -> vector<2x8x8xf32>
    "tpu.trace_stop"() : () -> ()
    %261 = arith.addf %260, %182 : vector<2x8x8xf32>
    %cst_98 = arith.constant dense<0xFF800000> : vector<2x8xf32>
    %262 = vector.multi_reduction <maximumf>, %261, %cst_98 [2] : vector<2x8x8xf32> to vector<2x8xf32>
    %263 = vector.shape_cast %262 : vector<2x8xf32> to vector<2x8x1xf32>
    %264 = vector.broadcast %263 : vector<2x8x1xf32> to vector<2x8x8xf32>
    %265 = arith.subf %261, %264 : vector<2x8x8xf32>
    %266 = math.exp %265 : vector<2x8x8xf32>
    %cst_99 = arith.constant dense<0.000000e+00> : vector<2x8xf32>
    %267 = vector.multi_reduction <add>, %266, %cst_99 [2] : vector<2x8x8xf32> to vector<2x8xf32>
    %268 = vector.shape_cast %267 : vector<2x8xf32> to vector<2x8x1xf32>
    %269 = vector.broadcast %268 : vector<2x8x1xf32> to vector<2x8x8xf32>
    %270 = arith.divf %266, %269 : vector<2x8x8xf32>
    %c3_100 = arith.constant 3 : index
    %c0_101 = arith.constant 0 : index
    %c0_102 = arith.constant 0 : index
    %c0_103 = arith.constant 0 : index
    %271 = vector.load %arg29[%c3_100, %c0_101, %c0_102, %c0_103] : memref<4x2x8x8xf32, #tpu.memory_space<vmem>>, vector<1x2x8x8xf32>
    %272 = vector.shape_cast %271 : vector<1x2x8x8xf32> to vector<2x8x8xf32>
    %273 = vector.shape_cast %270 : vector<2x8x8xf32> to vector<1x2x8x8xf32>
    tpu.vector_store %arg29[%c3_100, %c0_101, %c0_102, %c0_103], %273 {strides = array<i32>} : memref<4x2x8x8xf32, #tpu.memory_space<vmem>>, vector<1x2x8x8xf32>,
    %274 = arith.truncf %270 : vector<2x8x8xf32> to vector<2x8x8xbf16>
    "tpu.trace_start"() <{level = 10 : i32, message = "blt,btd->bld"}> : () -> ()
    %cst_104 = arith.constant dense<0.000000e+00> : vector<2x8x8xf32>
    %275 = tpu.matmul %274, %259, %cst_104 {dimension_numbers = #tpu.dot_dimension_numbers<[2], [1], [1], [2], [0, 0, 0, 1, 1, 2], [0], [0]>} : vector<2x8x8xbf16>, vector<2x8x8xbf16>, vector<2x8x8xf32> -> vector<2x8x8xf32>
    "tpu.trace_stop"() : () -> ()
    %276 = arith.truncf %275 : vector<2x8x8xf32> to vector<2x8x8xbf16>
    %277 = vector.shape_cast %276 : vector<2x8x8xbf16> to vector<16x8xbf16>
    %278 = vector.extract_strided_slice %183 {offsets = [24, 0], sizes = [8, 32], strides = [1, 1]} : vector<32x32xbf16> to vector<8x32xbf16>
    %cst_105 = arith.constant dense<0.000000e+00> : vector<16x32xf32>
    %279 = tpu.matmul %277, %278, %cst_105 {dimension_numbers = #tpu.dot_dimension_numbers<[1], [0], [0], [1], [0, 0, 1, 1], [], []>} : vector<16x8xbf16>, vector<8x32xbf16>, vector<16x32xf32> -> vector<16x32xf32>
    %280 = arith.addf %256, %279 : vector<16x32xf32>
    %c0_106 = arith.constant 0 : index
    %c0_107 = arith.constant 0 : index
    %281 = vector.load %arg11[%c0_106, %c0_107] : memref<1x32xf32, #tpu.memory_space<vmem>>, vector<1x32xf32>
    %282 = vector.broadcast %281 : vector<1x32xf32> to vector<16x32xf32>
    %283 = arith.addf %280, %282 : vector<16x32xf32>
    %284 = arith.addf %283, %25 : vector<16x32xf32>
    %c0_108 = arith.constant 0 : index
    %c0_109 = arith.constant 0 : index
    %285 = vector.load %arg12[%c0_108, %c0_109] : memref<1x32xf32, #tpu.memory_space<vmem>>, vector<1x32xf32>
    %c0_110 = arith.constant 0 : index
    %c0_111 = arith.constant 0 : index
    %286 = vector.load %arg13[%c0_110, %c0_111] : memref<1x32xf32, #tpu.memory_space<vmem>>, vector<1x32xf32>
    %cst_112 = arith.constant dense<0.000000e+00> : vector<16xf32>
    %287 = vector.multi_reduction <add>, %284, %cst_112 [1] : vector<16x32xf32> to vector<16xf32>
    %288 = vector.shape_cast %287 : vector<16xf32> to vector<16x1xf32>
    %cst_113 = arith.constant 3.200000e+01 : f32
    %289 = vector.broadcast %cst_113 : f32 to vector<16x1xf32>
    %290 = arith.divf %288, %289 : vector<16x1xf32>
    %291 = vector.broadcast %290 : vector<16x1xf32> to vector<16x32xf32>
    %292 = arith.subf %284, %291 : vector<16x32xf32>
    %293 = arith.mulf %292, %292 : vector<16x32xf32>
    %cst_114 = arith.constant dense<0.000000e+00> : vector<16xf32>
    %294 = vector.multi_reduction <add>, %293, %cst_114 [1] : vector<16x32xf32> to vector<16xf32>
    %295 = vector.shape_cast %294 : vector<16xf32> to vector<16x1xf32>
    %cst_115 = arith.constant 3.200000e+01 : f32
    %296 = vector.broadcast %cst_115 : f32 to vector<16x1xf32>
    %297 = arith.divf %295, %296 : vector<16x1xf32>
    %298 = vector.broadcast %290 : vector<16x1xf32> to vector<16x32xf32>
    %299 = arith.subf %284, %298 : vector<16x32xf32>
    %cst_116 = arith.constant 9.99999974E-6 : f32
    %300 = vector.broadcast %cst_116 : f32 to vector<16x1xf32>
    %301 = arith.addf %297, %300 : vector<16x1xf32>
    %302 = math.rsqrt %301 : vector<16x1xf32>
    %303 = vector.broadcast %302 : vector<16x1xf32> to vector<16x32xf32>
    %304 = arith.mulf %299, %303 : vector<16x32xf32>
    %305 = vector.broadcast %285 : vector<1x32xf32> to vector<16x32xf32>
    %306 = arith.mulf %304, %305 : vector<16x32xf32>
    %307 = vector.broadcast %286 : vector<1x32xf32> to vector<16x32xf32>
    %308 = arith.addf %306, %307 : vector<16x32xf32>
    %309 = arith.addf %1, %308 : vector<16x32xf32>
    %c0_117 = arith.constant 0 : index
    %c0_118 = arith.constant 0 : index
    %310 = vector.load %arg14[%c0_117, %c0_118] : memref<1x32xf32, #tpu.memory_space<vmem>>, vector<1x32xf32>
    %c0_119 = arith.constant 0 : index
    %c0_120 = arith.constant 0 : index
    %311 = vector.load %arg15[%c0_119, %c0_120] : memref<1x32xf32, #tpu.memory_space<vmem>>, vector<1x32xf32>
    %cst_121 = arith.constant dense<0.000000e+00> : vector<16xf32>
    %312 = vector.multi_reduction <add>, %309, %cst_121 [1] : vector<16x32xf32> to vector<16xf32>
    %313 = vector.shape_cast %312 : vector<16xf32> to vector<16x1xf32>
    %cst_122 = arith.constant 3.200000e+01 : f32
    %314 = vector.broadcast %cst_122 : f32 to vector<16x1xf32>
    %315 = arith.divf %313, %314 : vector<16x1xf32>
    %316 = vector.broadcast %315 : vector<16x1xf32> to vector<16x32xf32>
    %317 = arith.subf %309, %316 : vector<16x32xf32>
    %318 = arith.mulf %317, %317 : vector<16x32xf32>
    %cst_123 = arith.constant dense<0.000000e+00> : vector<16xf32>
    %319 = vector.multi_reduction <add>, %318, %cst_123 [1] : vector<16x32xf32> to vector<16xf32>
    %320 = vector.shape_cast %319 : vector<16xf32> to vector<16x1xf32>
    %cst_124 = arith.constant 3.200000e+01 : f32
    %321 = vector.broadcast %cst_124 : f32 to vector<16x1xf32>
    %322 = arith.divf %320, %321 : vector<16x1xf32>
    %323 = vector.broadcast %315 : vector<16x1xf32> to vector<16x32xf32>
    %324 = arith.subf %309, %323 : vector<16x32xf32>
    %cst_125 = arith.constant 9.99999974E-6 : f32
    %325 = vector.broadcast %cst_125 : f32 to vector<16x1xf32>
    %326 = arith.addf %322, %325 : vector<16x1xf32>
    %327 = math.rsqrt %326 : vector<16x1xf32>
    %328 = vector.broadcast %327 : vector<16x1xf32> to vector<16x32xf32>
    %329 = arith.mulf %324, %328 : vector<16x32xf32>
    %330 = vector.broadcast %310 : vector<1x32xf32> to vector<16x32xf32>
    %331 = arith.mulf %329, %330 : vector<16x32xf32>
    %332 = vector.broadcast %311 : vector<1x32xf32> to vector<16x32xf32>
    %333 = arith.addf %331, %332 : vector<16x32xf32>
    %c0_126 = arith.constant 0 : index
    %c0_127 = arith.constant 0 : index
    %334 = vector.load %arg16[%c0_126, %c0_127] : memref<32x32xbf16, #tpu.memory_space<vmem>>, vector<32x32xbf16>
    %335 = arith.truncf %333 : vector<16x32xf32> to vector<16x32xbf16>
    %cst_128 = arith.constant dense<0.000000e+00> : vector<16x32xf32>
    %336 = tpu.matmul %335, %334, %cst_128 {dimension_numbers = #tpu.dot_dimension_numbers<[1], [0], [0], [1], [0, 0, 1, 1], [], []>} : vector<16x32xbf16>, vector<32x32xbf16>, vector<16x32xf32> -> vector<16x32xf32>
    %c0_129 = arith.constant 0 : index
    %c0_130 = arith.constant 0 : index
    %337 = vector.load %arg17[%c0_129, %c0_130] : memref<1x32xf32, #tpu.memory_space<vmem>>, vector<1x32xf32>
    %338 = vector.broadcast %337 : vector<1x32xf32> to vector<16x32xf32>
    %339 = arith.addf %336, %338 : vector<16x32xf32>
    %340 = arith.truncf %339 : vector<16x32xf32> to vector<16x32xbf16>
    %341 = vector.shape_cast %340 : vector<16x32xbf16> to vector<2x8x32xbf16>
    %c0_131 = arith.constant 0 : index
    %c0_132 = arith.constant 0 : index
    %c0_133 = arith.constant 0 : index
    %342 = vector.load %arg2[%c0_131, %c0_132, %c0_133] : memref<2x8x32xf32, #tpu.memory_space<vmem>>, vector<2x8x32xf32>
    %343 = vector.shape_cast %342 : vector<2x8x32xf32> to vector<16x32xf32>
    %c0_134 = arith.constant 0 : index
    %c0_135 = arith.constant 0 : index
    %344 = vector.load %arg18[%c0_134, %c0_135] : memref<32x64xbf16, #tpu.memory_space<vmem>>, vector<32x64xbf16>
    %345 = arith.truncf %343 : vector<16x32xf32> to vector<16x32xbf16>
    %cst_136 = arith.constant dense<0.000000e+00> : vector<16x64xf32>
    %346 = tpu.matmul %345, %344, %cst_136 {dimension_numbers = #tpu.dot_dimension_numbers<[1], [0], [0], [1], [0, 0, 1, 1], [], []>} : vector<16x32xbf16>, vector<32x64xbf16>, vector<16x64xf32> -> vector<16x64xf32>
    %c0_137 = arith.constant 0 : index
    %c0_138 = arith.constant 0 : index
    %347 = vector.load %arg19[%c0_137, %c0_138] : memref<1x64xf32, #tpu.memory_space<vmem>>, vector<1x64xf32>
    %348 = vector.broadcast %347 : vector<1x64xf32> to vector<16x64xf32>
    %349 = arith.addf %346, %348 : vector<16x64xf32>
    %350 = arith.truncf %349 : vector<16x64xf32> to vector<16x64xbf16>
    %351 = vector.shape_cast %350 : vector<16x64xbf16> to vector<2x8x64xbf16>
    %c0_139 = arith.constant 0 : index
    %c0_140 = arith.constant 0 : index
    %352 = vector.load %arg20[%c0_139, %c0_140] : memref<32x32xbf16, #tpu.memory_space<vmem>>, vector<32x32xbf16>
    %cst_141 = arith.constant 0.000000e+00 : f32
    %353 = vector.broadcast %cst_141 : f32 to vector<16x32xf32>
    %cst_142 = arith.constant 0.000000e+00 : f32
    %354 = vector.broadcast %cst_142 : f32 to vector<2x8x8xf32>
    %355 = vector.extract_strided_slice %341 {offsets = [0, 0, 0], sizes = [2, 8, 8], strides = [1, 1, 1]} : vector<2x8x32xbf16> to vector<2x8x8xbf16>
    %356 = vector.extract_strided_slice %351 {offsets = [0, 0, 0], sizes = [2, 8, 8], strides = [1, 1, 1]} : vector<2x8x64xbf16> to vector<2x8x8xbf16>
    %357 = vector.extract_strided_slice %351 {offsets = [0, 0, 32], sizes = [2, 8, 8], strides = [1, 1, 1]} : vector<2x8x64xbf16> to vector<2x8x8xbf16>
    "tpu.trace_start"() <{level = 10 : i32, message = "bld,btd->blt"}> : () -> ()
    %cst_143 = arith.constant dense<0.000000e+00> : vector<2x8x8xf32>
    %358 = tpu.matmul %355, %356, %cst_143 {dimension_numbers = #tpu.dot_dimension_numbers<[2], [2], [1], [1], [0, 0, 0, 1, 1, 1], [0], [0]>} : vector<2x8x8xbf16>, vector<2x8x8xbf16>, vector<2x8x8xf32> -> vector<2x8x8xf32>
    "tpu.trace_stop"() : () -> ()
    %cst_144 = arith.constant dense<0xFF800000> : vector<2x8xf32>
    %359 = vector.multi_reduction <maximumf>, %358, %cst_144 [2] : vector<2x8x8xf32> to vector<2x8xf32>
    %360 = vector.shape_cast %359 : vector<2x8xf32> to vector<2x8x1xf32>
    %361 = vector.broadcast %360 : vector<2x8x1xf32> to vector<2x8x8xf32>
    %362 = arith.subf %358, %361 : vector<2x8x8xf32>
    %363 = math.exp %362 : vector<2x8x8xf32>
    %cst_145 = arith.constant dense<0.000000e+00> : vector<2x8xf32>
    %364 = vector.multi_reduction <add>, %363, %cst_145 [2] : vector<2x8x8xf32> to vector<2x8xf32>
    %365 = vector.shape_cast %364 : vector<2x8xf32> to vector<2x8x1xf32>
    %366 = vector.broadcast %365 : vector<2x8x1xf32> to vector<2x8x8xf32>
    %367 = arith.divf %363, %366 : vector<2x8x8xf32>
    %368 = arith.addf %354, %367 : vector<2x8x8xf32>
    %369 = arith.truncf %367 : vector<2x8x8xf32> to vector<2x8x8xbf16>
    "tpu.trace_start"() <{level = 10 : i32, message = "blt,btd->bld"}> : () -> ()
    %cst_146 = arith.constant dense<0.000000e+00> : vector<2x8x8xf32>
    %370 = tpu.matmul %369, %357, %cst_146 {dimension_numbers = #tpu.dot_dimension_numbers<[2], [1], [1], [2], [0, 0, 0, 1, 1, 2], [0], [0]>} : vector<2x8x8xbf16>, vector<2x8x8xbf16>, vector<2x8x8xf32> -> vector<2x8x8xf32>
    "tpu.trace_stop"() : () -> ()
    %371 = arith.truncf %370 : vector<2x8x8xf32> to vector<2x8x8xbf16>
    %372 = vector.shape_cast %371 : vector<2x8x8xbf16> to vector<16x8xbf16>
    %373 = vector.extract_strided_slice %352 {offsets = [0, 0], sizes = [8, 32], strides = [1, 1]} : vector<32x32xbf16> to vector<8x32xbf16>
    %cst_147 = arith.constant dense<0.000000e+00> : vector<16x32xf32>
    %374 = tpu.matmul %372, %373, %cst_147 {dimension_numbers = #tpu.dot_dimension_numbers<[1], [0], [0], [1], [0, 0, 1, 1], [], []>} : vector<16x8xbf16>, vector<8x32xbf16>, vector<16x32xf32> -> vector<16x32xf32>
    %375 = arith.addf %353, %374 : vector<16x32xf32>
    %376 = vector.extract_strided_slice %341 {offsets = [0, 0, 8], sizes = [2, 8, 8], strides = [1, 1, 1]} : vector<2x8x32xbf16> to vector<2x8x8xbf16>
    %377 = vector.extract_strided_slice %351 {offsets = [0, 0, 8], sizes = [2, 8, 8], strides = [1, 1, 1]} : vector<2x8x64xbf16> to vector<2x8x8xbf16>
    %378 = vector.extract_strided_slice %351 {offsets = [0, 0, 40], sizes = [2, 8, 8], strides = [1, 1, 1]} : vector<2x8x64xbf16> to vector<2x8x8xbf16>
    "tpu.trace_start"() <{level = 10 : i32, message = "bld,btd->blt"}> : () -> ()
    %cst_148 = arith.constant dense<0.000000e+00> : vector<2x8x8xf32>
    %379 = tpu.matmul %376, %377, %cst_148 {dimension_numbers = #tpu.dot_dimension_numbers<[2], [2], [1], [1], [0, 0, 0, 1, 1, 1], [0], [0]>} : vector<2x8x8xbf16>, vector<2x8x8xbf16>, vector<2x8x8xf32> -> vector<2x8x8xf32>
    "tpu.trace_stop"() : () -> ()
    %cst_149 = arith.constant dense<0xFF800000> : vector<2x8xf32>
    %380 = vector.multi_reduction <maximumf>, %379, %cst_149 [2] : vector<2x8x8xf32> to vector<2x8xf32>
    %381 = vector.shape_cast %380 : vector<2x8xf32> to vector<2x8x1xf32>
    %382 = vector.broadcast %381 : vector<2x8x1xf32> to vector<2x8x8xf32>
    %383 = arith.subf %379, %382 : vector<2x8x8xf32>
    %384 = math.exp %383 : vector<2x8x8xf32>
    %cst_150 = arith.constant dense<0.000000e+00> : vector<2x8xf32>
    %385 = vector.multi_reduction <add>, %384, %cst_150 [2] : vector<2x8x8xf32> to vector<2x8xf32>
    %386 = vector.shape_cast %385 : vector<2x8xf32> to vector<2x8x1xf32>
    %387 = vector.broadcast %386 : vector<2x8x1xf32> to vector<2x8x8xf32>
    %388 = arith.divf %384, %387 : vector<2x8x8xf32>
    %389 = arith.addf %368, %388 : vector<2x8x8xf32>
    %390 = arith.truncf %388 : vector<2x8x8xf32> to vector<2x8x8xbf16>
    "tpu.trace_start"() <{level = 10 : i32, message = "blt,btd->bld"}> : () -> ()
    %cst_151 = arith.constant dense<0.000000e+00> : vector<2x8x8xf32>
    %391 = tpu.matmul %390, %378, %cst_151 {dimension_numbers = #tpu.dot_dimension_numbers<[2], [1], [1], [2], [0, 0, 0, 1, 1, 2], [0], [0]>} : vector<2x8x8xbf16>, vector<2x8x8xbf16>, vector<2x8x8xf32> -> vector<2x8x8xf32>
    "tpu.trace_stop"() : () -> ()
    %392 = arith.truncf %391 : vector<2x8x8xf32> to vector<2x8x8xbf16>
    %393 = vector.shape_cast %392 : vector<2x8x8xbf16> to vector<16x8xbf16>
    %394 = vector.extract_strided_slice %352 {offsets = [8, 0], sizes = [8, 32], strides = [1, 1]} : vector<32x32xbf16> to vector<8x32xbf16>
    %cst_152 = arith.constant dense<0.000000e+00> : vector<16x32xf32>
    %395 = tpu.matmul %393, %394, %cst_152 {dimension_numbers = #tpu.dot_dimension_numbers<[1], [0], [0], [1], [0, 0, 1, 1], [], []>} : vector<16x8xbf16>, vector<8x32xbf16>, vector<16x32xf32> -> vector<16x32xf32>
    %396 = arith.addf %375, %395 : vector<16x32xf32>
    %397 = vector.extract_strided_slice %341 {offsets = [0, 0, 16], sizes = [2, 8, 8], strides = [1, 1, 1]} : vector<2x8x32xbf16> to vector<2x8x8xbf16>
    %398 = vector.extract_strided_slice %351 {offsets = [0, 0, 16], sizes = [2, 8, 8], strides = [1, 1, 1]} : vector<2x8x64xbf16> to vector<2x8x8xbf16>
    %399 = vector.extract_strided_slice %351 {offsets = [0, 0, 48], sizes = [2, 8, 8], strides = [1, 1, 1]} : vector<2x8x64xbf16> to vector<2x8x8xbf16>
    "tpu.trace_start"() <{level = 10 : i32, message = "bld,btd->blt"}> : () -> ()
    %cst_153 = arith.constant dense<0.000000e+00> : vector<2x8x8xf32>
    %400 = tpu.matmul %397, %398, %cst_153 {dimension_numbers = #tpu.dot_dimension_numbers<[2], [2], [1], [1], [0, 0, 0, 1, 1, 1], [0], [0]>} : vector<2x8x8xbf16>, vector<2x8x8xbf16>, vector<2x8x8xf32> -> vector<2x8x8xf32>
    "tpu.trace_stop"() : () -> ()
    %cst_154 = arith.constant dense<0xFF800000> : vector<2x8xf32>
    %401 = vector.multi_reduction <maximumf>, %400, %cst_154 [2] : vector<2x8x8xf32> to vector<2x8xf32>
    %402 = vector.shape_cast %401 : vector<2x8xf32> to vector<2x8x1xf32>
    %403 = vector.broadcast %402 : vector<2x8x1xf32> to vector<2x8x8xf32>
    %404 = arith.subf %400, %403 : vector<2x8x8xf32>
    %405 = math.exp %404 : vector<2x8x8xf32>
    %cst_155 = arith.constant dense<0.000000e+00> : vector<2x8xf32>
    %406 = vector.multi_reduction <add>, %405, %cst_155 [2] : vector<2x8x8xf32> to vector<2x8xf32>
    %407 = vector.shape_cast %406 : vector<2x8xf32> to vector<2x8x1xf32>
    %408 = vector.broadcast %407 : vector<2x8x1xf32> to vector<2x8x8xf32>
    %409 = arith.divf %405, %408 : vector<2x8x8xf32>
    %410 = arith.addf %389, %409 : vector<2x8x8xf32>
    %411 = arith.truncf %409 : vector<2x8x8xf32> to vector<2x8x8xbf16>
    "tpu.trace_start"() <{level = 10 : i32, message = "blt,btd->bld"}> : () -> ()
    %cst_156 = arith.constant dense<0.000000e+00> : vector<2x8x8xf32>
    %412 = tpu.matmul %411, %399, %cst_156 {dimension_numbers = #tpu.dot_dimension_numbers<[2], [1], [1], [2], [0, 0, 0, 1, 1, 2], [0], [0]>} : vector<2x8x8xbf16>, vector<2x8x8xbf16>, vector<2x8x8xf32> -> vector<2x8x8xf32>
    "tpu.trace_stop"() : () -> ()
    %413 = arith.truncf %412 : vector<2x8x8xf32> to vector<2x8x8xbf16>
    %414 = vector.shape_cast %413 : vector<2x8x8xbf16> to vector<16x8xbf16>
    %415 = vector.extract_strided_slice %352 {offsets = [16, 0], sizes = [8, 32], strides = [1, 1]} : vector<32x32xbf16> to vector<8x32xbf16>
    %cst_157 = arith.constant dense<0.000000e+00> : vector<16x32xf32>
    %416 = tpu.matmul %414, %415, %cst_157 {dimension_numbers = #tpu.dot_dimension_numbers<[1], [0], [0], [1], [0, 0, 1, 1], [], []>} : vector<16x8xbf16>, vector<8x32xbf16>, vector<16x32xf32> -> vector<16x32xf32>
    %417 = arith.addf %396, %416 : vector<16x32xf32>
    %418 = vector.extract_strided_slice %341 {offsets = [0, 0, 24], sizes = [2, 8, 8], strides = [1, 1, 1]} : vector<2x8x32xbf16> to vector<2x8x8xbf16>
    %419 = vector.extract_strided_slice %351 {offsets = [0, 0, 24], sizes = [2, 8, 8], strides = [1, 1, 1]} : vector<2x8x64xbf16> to vector<2x8x8xbf16>
    %420 = vector.extract_strided_slice %351 {offsets = [0, 0, 56], sizes = [2, 8, 8], strides = [1, 1, 1]} : vector<2x8x64xbf16> to vector<2x8x8xbf16>
    "tpu.trace_start"() <{level = 10 : i32, message = "bld,btd->blt"}> : () -> ()
    %cst_158 = arith.constant dense<0.000000e+00> : vector<2x8x8xf32>
    %421 = tpu.matmul %418, %419, %cst_158 {dimension_numbers = #tpu.dot_dimension_numbers<[2], [2], [1], [1], [0, 0, 0, 1, 1, 1], [0], [0]>} : vector<2x8x8xbf16>, vector<2x8x8xbf16>, vector<2x8x8xf32> -> vector<2x8x8xf32>
    "tpu.trace_stop"() : () -> ()
    %cst_159 = arith.constant dense<0xFF800000> : vector<2x8xf32>
    %422 = vector.multi_reduction <maximumf>, %421, %cst_159 [2] : vector<2x8x8xf32> to vector<2x8xf32>
    %423 = vector.shape_cast %422 : vector<2x8xf32> to vector<2x8x1xf32>
    %424 = vector.broadcast %423 : vector<2x8x1xf32> to vector<2x8x8xf32>
    %425 = arith.subf %421, %424 : vector<2x8x8xf32>
    %426 = math.exp %425 : vector<2x8x8xf32>
    %cst_160 = arith.constant dense<0.000000e+00> : vector<2x8xf32>
    %427 = vector.multi_reduction <add>, %426, %cst_160 [2] : vector<2x8x8xf32> to vector<2x8xf32>
    %428 = vector.shape_cast %427 : vector<2x8xf32> to vector<2x8x1xf32>
    %429 = vector.broadcast %428 : vector<2x8x1xf32> to vector<2x8x8xf32>
    %430 = arith.divf %426, %429 : vector<2x8x8xf32>
    %431 = arith.addf %410, %430 : vector<2x8x8xf32>
    %432 = arith.truncf %430 : vector<2x8x8xf32> to vector<2x8x8xbf16>
    "tpu.trace_start"() <{level = 10 : i32, message = "blt,btd->bld"}> : () -> ()
    %cst_161 = arith.constant dense<0.000000e+00> : vector<2x8x8xf32>
    %433 = tpu.matmul %432, %420, %cst_161 {dimension_numbers = #tpu.dot_dimension_numbers<[2], [1], [1], [2], [0, 0, 0, 1, 1, 2], [0], [0]>} : vector<2x8x8xbf16>, vector<2x8x8xbf16>, vector<2x8x8xf32> -> vector<2x8x8xf32>
    "tpu.trace_stop"() : () -> ()
    %434 = arith.truncf %433 : vector<2x8x8xf32> to vector<2x8x8xbf16>
    %435 = vector.shape_cast %434 : vector<2x8x8xbf16> to vector<16x8xbf16>
    %436 = vector.extract_strided_slice %352 {offsets = [24, 0], sizes = [8, 32], strides = [1, 1]} : vector<32x32xbf16> to vector<8x32xbf16>
    %cst_162 = arith.constant dense<0.000000e+00> : vector<16x32xf32>
    %437 = tpu.matmul %435, %436, %cst_162 {dimension_numbers = #tpu.dot_dimension_numbers<[1], [0], [0], [1], [0, 0, 1, 1], [], []>} : vector<16x8xbf16>, vector<8x32xbf16>, vector<16x32xf32> -> vector<16x32xf32>
    %438 = arith.addf %417, %437 : vector<16x32xf32>
    %c0_163 = arith.constant 0 : index
    %c0_164 = arith.constant 0 : index
    %439 = vector.load %arg21[%c0_163, %c0_164] : memref<1x32xf32, #tpu.memory_space<vmem>>, vector<1x32xf32>
    %440 = vector.broadcast %439 : vector<1x32xf32> to vector<16x32xf32>
    %441 = arith.addf %438, %440 : vector<16x32xf32>
    %442 = arith.addf %309, %441 : vector<16x32xf32>
    %cst_165 = arith.constant 2.500000e-01 : f32
    %443 = vector.broadcast %cst_165 : f32 to vector<2x8x8xf32>
    %444 = arith.mulf %431, %443 : vector<2x8x8xf32>
    %c0_166 = arith.constant 0 : index
    %c0_167 = arith.constant 0 : index
    %c0_168 = arith.constant 0 : index
    %445 = vector.load %arg30[%c0_166, %c0_167, %c0_168] : memref<2x8x8xf32, #tpu.memory_space<vmem>>, vector<2x8x8xf32>
    tpu.vector_store %arg30[%c0_166, %c0_167, %c0_168], %444 {strides = array<i32>} : memref<2x8x8xf32, #tpu.memory_space<vmem>>, vector<2x8x8xf32>,
    %c0_169 = arith.constant 0 : index
    %c0_170 = arith.constant 0 : index
    %446 = vector.load %arg22[%c0_169, %c0_170] : memref<1x32xf32, #tpu.memory_space<vmem>>, vector<1x32xf32>
    %c0_171 = arith.constant 0 : index
    %c0_172 = arith.constant 0 : index
    %447 = vector.load %arg23[%c0_171, %c0_172] : memref<1x32xf32, #tpu.memory_space<vmem>>, vector<1x32xf32>
    %cst_173 = arith.constant dense<0.000000e+00> : vector<16xf32>
    %448 = vector.multi_reduction <add>, %442, %cst_173 [1] : vector<16x32xf32> to vector<16xf32>
    %449 = vector.shape_cast %448 : vector<16xf32> to vector<16x1xf32>
    %cst_174 = arith.constant 3.200000e+01 : f32
    %450 = vector.broadcast %cst_174 : f32 to vector<16x1xf32>
    %451 = arith.divf %449, %450 : vector<16x1xf32>
    %452 = vector.broadcast %451 : vector<16x1xf32> to vector<16x32xf32>
    %453 = arith.subf %442, %452 : vector<16x32xf32>
    %454 = arith.mulf %453, %453 : vector<16x32xf32>
    %cst_175 = arith.constant dense<0.000000e+00> : vector<16xf32>
    %455 = vector.multi_reduction <add>, %454, %cst_175 [1] : vector<16x32xf32> to vector<16xf32>
    %456 = vector.shape_cast %455 : vector<16xf32> to vector<16x1xf32>
    %cst_176 = arith.constant 3.200000e+01 : f32
    %457 = vector.broadcast %cst_176 : f32 to vector<16x1xf32>
    %458 = arith.divf %456, %457 : vector<16x1xf32>
    %459 = vector.broadcast %451 : vector<16x1xf32> to vector<16x32xf32>
    %460 = arith.subf %442, %459 : vector<16x32xf32>
    %cst_177 = arith.constant 9.99999974E-6 : f32
    %461 = vector.broadcast %cst_177 : f32 to vector<16x1xf32>
    %462 = arith.addf %458, %461 : vector<16x1xf32>
    %463 = math.rsqrt %462 : vector<16x1xf32>
    %464 = vector.broadcast %463 : vector<16x1xf32> to vector<16x32xf32>
    %465 = arith.mulf %460, %464 : vector<16x32xf32>
    %466 = vector.broadcast %446 : vector<1x32xf32> to vector<16x32xf32>
    %467 = arith.mulf %465, %466 : vector<16x32xf32>
    %468 = vector.broadcast %447 : vector<1x32xf32> to vector<16x32xf32>
    %469 = arith.addf %467, %468 : vector<16x32xf32>
    %c0_178 = arith.constant 0 : index
    %c0_179 = arith.constant 0 : index
    %470 = vector.load %arg24[%c0_178, %c0_179] : memref<32x64xbf16, #tpu.memory_space<vmem>>, vector<32x64xbf16>
    %471 = arith.truncf %469 : vector<16x32xf32> to vector<16x32xbf16>
    %cst_180 = arith.constant dense<0.000000e+00> : vector<16x64xf32>
    %472 = tpu.matmul %471, %470, %cst_180 {dimension_numbers = #tpu.dot_dimension_numbers<[1], [0], [0], [1], [0, 0, 1, 1], [], []>} : vector<16x32xbf16>, vector<32x64xbf16>, vector<16x64xf32> -> vector<16x64xf32>
    %c0_181 = arith.constant 0 : index
    %c0_182 = arith.constant 0 : index
    %473 = vector.load %arg25[%c0_181, %c0_182] : memref<1x64xf32, #tpu.memory_space<vmem>>, vector<1x64xf32>
    %474 = vector.broadcast %473 : vector<1x64xf32> to vector<16x64xf32>
    %475 = arith.addf %472, %474 : vector<16x64xf32>
    %cst_183 = arith.constant 0.000000e+00 : f32
    %476 = vector.broadcast %cst_183 : f32 to vector<16x64xf32>
    %477 = arith.maximumf %475, %476 : vector<16x64xf32>
    %c0_184 = arith.constant 0 : index
    %c0_185 = arith.constant 0 : index
    %478 = vector.load %arg26[%c0_184, %c0_185] : memref<64x32xbf16, #tpu.memory_space<vmem>>, vector<64x32xbf16>
    %479 = arith.truncf %477 : vector<16x64xf32> to vector<16x64xbf16>
    %cst_186 = arith.constant dense<0.000000e+00> : vector<16x32xf32>
    %480 = tpu.matmul %479, %478, %cst_186 {dimension_numbers = #tpu.dot_dimension_numbers<[1], [0], [0], [1], [0, 0, 1, 1], [], []>} : vector<16x64xbf16>, vector<64x32xbf16>, vector<16x32xf32> -> vector<16x32xf32>
    %c0_187 = arith.constant 0 : index
    %c0_188 = arith.constant 0 : index
    %481 = vector.load %arg27[%c0_187, %c0_188] : memref<1x32xf32, #tpu.memory_space<vmem>>, vector<1x32xf32>
    %482 = vector.broadcast %481 : vector<1x32xf32> to vector<16x32xf32>
    %483 = arith.addf %480, %482 : vector<16x32xf32>
    %484 = arith.addf %442, %483 : vector<16x32xf32>
    %485 = vector.shape_cast %484 : vector<16x32xf32> to vector<2x8x32xf32>
    %c0_189 = arith.constant 0 : index
    %c0_190 = arith.constant 0 : index
    %c0_191 = arith.constant 0 : index
    %486 = vector.load %arg28[%c0_189, %c0_190, %c0_191] : memref<2x8x32xf32, #tpu.memory_space<vmem>>, vector<2x8x32xf32>
    tpu.vector_store %arg28[%c0_189, %c0_190, %c0_191], %485 {strides = array<i32>} : memref<2x8x32xf32, #tpu.memory_space<vmem>>, vector<2x8x32xf32>,
    return
  }
  func.func @transform_0(%arg0: i32) -> (i32, i32, i32) {
    %c0_i32 = arith.constant 0 : i32
    %c0_i32_0 = arith.constant 0 : i32
    %c0_i32_1 = arith.constant 0 : i32
    return %arg0, %c0_i32, %c0_i32_0 : i32, i32, i32
  }
  func.func @transform_1(%arg0: i32) -> (i32, i32, i32) {
    %c0_i32 = arith.constant 0 : i32
    %c0_i32_0 = arith.constant 0 : i32
    %c0_i32_1 = arith.constant 0 : i32
    return %arg0, %c0_i32, %c0_i32_0 : i32, i32, i32
  }
  func.func @transform_2(%arg0: i32) -> (i32, i32, i32, i32) {
    %c0_i32 = arith.constant 0 : i32
    %c0_i32_0 = arith.constant 0 : i32
    %c0_i32_1 = arith.constant 0 : i32
    %c0_i32_2 = arith.constant 0 : i32
    return %arg0, %c0_i32, %c0_i32_0, %c0_i32_1 : i32, i32, i32, i32
  }
  func.func @transform_3(%arg0: i32) -> (i32, i32) {
    %c0_i32 = arith.constant 0 : i32
    %c0_i32_0 = arith.constant 0 : i32
    %c0_i32_1 = arith.constant 0 : i32
    return %c0_i32, %c0_i32_0 : i32, i32
  }
  func.func @transform_4(%arg0: i32) -> (i32, i32) {
    %c0_i32 = arith.constant 0 : i32
    %c0_i32_0 = arith.constant 0 : i32
    %c0_i32_1 = arith.constant 0 : i32
    return %c0_i32, %c0_i32_0 : i32, i32
  }
  func.func @transform_5(%arg0: i32) -> (i32, i32) {
    %c0_i32 = arith.constant 0 : i32
    %c0_i32_0 = arith.constant 0 : i32
    %c0_i32_1 = arith.constant 0 : i32
    return %c0_i32, %c0_i32_0 : i32, i32
  }
  func.func @transform_6(%arg0: i32) -> (i32, i32) {
    %c0_i32 = arith.constant 0 : i32
    %c0_i32_0 = arith.constant 0 : i32
    %c0_i32_1 = arith.constant 0 : i32
    return %c0_i32, %c0_i32_0 : i32, i32
  }
  func.func @transform_7(%arg0: i32) -> (i32, i32) {
    %c0_i32 = arith.constant 0 : i32
    %c0_i32_0 = arith.constant 0 : i32
    %c0_i32_1 = arith.constant 0 : i32
    return %c0_i32, %c0_i32_0 : i32, i32
  }
  func.func @transform_8(%arg0: i32) -> i32 {
    %c0_i32 = arith.constant 0 : i32
    %c0_i32_0 = arith.constant 0 : i32
    return %c0_i32 : i32
  }
  func.func @transform_9(%arg0: i32) -> (i32, i32) {
    %c0_i32 = arith.constant 0 : i32
    %c0_i32_0 = arith.constant 0 : i32
    %c0_i32_1 = arith.constant 0 : i32
    return %c0_i32, %c0_i32_0 : i32, i32
  }
  func.func @transform_10(%arg0: i32) -> (i32, i32) {
    %c0_i32 = arith.constant 0 : i32
    %c0_i32_0 = arith.constant 0 : i32
    %c0_i32_1 = arith.constant 0 : i32
    return %c0_i32, %c0_i32_0 : i32, i32
  }
  func.func @transform_11(%arg0: i32) -> (i32, i32) {
    %c0_i32 = arith.constant 0 : i32
    %c0_i32_0 = arith.constant 0 : i32
    %c0_i32_1 = arith.constant 0 : i32
    return %c0_i32, %c0_i32_0 : i32, i32
  }
  func.func @transform_12(%arg0: i32) -> (i32, i32) {
    %c0_i32 = arith.constant 0 : i32
    %c0_i32_0 = arith.constant 0 : i32
    %c0_i32_1 = arith.constant 0 : i32
    return %c0_i32, %c0_i32_0 : i32, i32
  }
  func.func @transform_13(%arg0: i32) -> (i32, i32) {
    %c0_i32 = arith.constant 0 : i32
    %c0_i32_0 = arith.constant 0 : i32
    %c0_i32_1 = arith.constant 0 : i32
    return %c0_i32, %c0_i32_0 : i32, i32
  }
  func.func @transform_14(%arg0: i32) -> (i32, i32) {
    %c0_i32 = arith.constant 0 : i32
    %c0_i32_0 = arith.constant 0 : i32
    %c0_i32_1 = arith.constant 0 : i32
    return %c0_i32, %c0_i32_0 : i32, i32
  }
  func.func @transform_15(%arg0: i32) -> (i32, i32) {
    %c0_i32 = arith.constant 0 : i32
    %c0_i32_0 = arith.constant 0 : i32
    %c0_i32_1 = arith.constant 0 : i32
    return %c0_i32, %c0_i32_0 : i32, i32
  }
  func.func @transform_16(%arg0: i32) -> (i32, i32) {
    %c0_i32 = arith.constant 0 : i32
    %c0_i32_0 = arith.constant 0 : i32
    %c0_i32_1 = arith.constant 0 : i32
    return %c0_i32, %c0_i32_0 : i32, i32
  }
  func.func @transform_17(%arg0: i32) -> (i32, i32) {
    %c0_i32 = arith.constant 0 : i32
    %c0_i32_0 = arith.constant 0 : i32
    %c0_i32_1 = arith.constant 0 : i32
    return %c0_i32, %c0_i32_0 : i32, i32
  }
  func.func @transform_18(%arg0: i32) -> (i32, i32) {
    %c0_i32 = arith.constant 0 : i32
    %c0_i32_0 = arith.constant 0 : i32
    %c0_i32_1 = arith.constant 0 : i32
    return %c0_i32, %c0_i32_0 : i32, i32
  }
  func.func @transform_19(%arg0: i32) -> (i32, i32) {
    %c0_i32 = arith.constant 0 : i32
    %c0_i32_0 = arith.constant 0 : i32
    %c0_i32_1 = arith.constant 0 : i32
    return %c0_i32, %c0_i32_0 : i32, i32
  }
  func.func @transform_20(%arg0: i32) -> (i32, i32) {
    %c0_i32 = arith.constant 0 : i32
    %c0_i32_0 = arith.constant 0 : i32
    %c0_i32_1 = arith.constant 0 : i32
    return %c0_i32, %c0_i32_0 : i32, i32
  }
  func.func @transform_21(%arg0: i32) -> (i32, i32) {
    %c0_i32 = arith.constant 0 : i32
    %c0_i32_0 = arith.constant 0 : i32
    %c0_i32_1 = arith.constant 0 : i32
    return %c0_i32, %c0_i32_0 : i32, i32
  }
  func.func @transform_22(%arg0: i32) -> (i32, i32) {
    %c0_i32 = arith.constant 0 : i32
    %c0_i32_0 = arith.constant 0 : i32
    %c0_i32_1 = arith.constant 0 : i32
    return %c0_i32, %c0_i32_0 : i32, i32
  }
  func.func @transform_23(%arg0: i32) -> (i32, i32) {
    %c0_i32 = arith.constant 0 : i32
    %c0_i32_0 = arith.constant 0 : i32
    %c0_i32_1 = arith.constant 0 : i32
    return %c0_i32, %c0_i32_0 : i32, i32
  }
  func.func @transform_24(%arg0: i32) -> (i32, i32) {
    %c0_i32 = arith.constant 0 : i32
    %c0_i32_0 = arith.constant 0 : i32
    %c0_i32_1 = arith.constant 0 : i32
    return %c0_i32, %c0_i32_0 : i32, i32
  }
  func.func @transform_25(%arg0: i32) -> (i32, i32) {
    %c0_i32 = arith.constant 0 : i32
    %c0_i32_0 = arith.constant 0 : i32
    %c0_i32_1 = arith.constant 0 : i32
    return %c0_i32, %c0_i32_0 : i32, i32
  }
  func.func @transform_26(%arg0: i32) -> (i32, i32) {
    %c0_i32 = arith.constant 0 : i32
    %c0_i32_0 = arith.constant 0 : i32
    %c0_i32_1 = arith.constant 0 : i32
    return %c0_i32, %c0_i32_0 : i32, i32
  }
  func.func @transform_27(%arg0: i32) -> (i32, i32, i32) {
    %c0_i32 = arith.constant 0 : i32
    %c0_i32_0 = arith.constant 0 : i32
    %c0_i32_1 = arith.constant 0 : i32
    return %arg0, %c0_i32, %c0_i32_0 : i32, i32, i32
  }
  func.func @transform_28(%arg0: i32) -> (i32, i32, i32, i32) {
    %c0_i32 = arith.constant 0 : i32
    %c0_i32_0 = arith.constant 0 : i32
    %c0_i32_1 = arith.constant 0 : i32
    %c0_i32_2 = arith.constant 0 : i32
    return %c0_i32, %arg0, %c0_i32_0, %c0_i32_1 : i32, i32, i32, i32
  }
  func.func @transform_29(%arg0: i32) -> (i32, i32, i32) {
    %c0_i32 = arith.constant 0 : i32
    %c0_i32_0 = arith.constant 0 : i32
    %c0_i32_1 = arith.constant 0 : i32
    return %arg0, %c0_i32, %c0_i32_0 : i32, i32, i32
  }
}

</mosaic_0001>

<llo_original>
// kernel: transformer_spatial_decoder_layer.1
$region0: #{transformer_spatial_decoder_layer.1}
  #allocation0 [shape = 'u32[]', space=smem, size = 0x4, offset = 0x4, fixed_abs, tag = 'smem constant byte address 0x4 - core index']
  #allocation1 [shape = 'u32[144,128]{1,0:T(1,128)}', space=vmem, size = 0x12000, scoped, tag = 'internal scratch']
  %s0 = inlined_call_operand.smem [shape: u32[30], index: -1, kind: input, shape index: {}]
  %s1 = sld [smem:[%s0]]
  %s2 = scalar_lea.smem %s0, 1
  %s3 = sld [smem:[%s2]]
  %s4 = scalar_lea.smem %s0, 2
  %s5 = sld [smem:[%s4]]
  %s6 = scalar_lea.smem %s0, 3
  %s7 = sld [smem:[%s6]]
  %s8 = scalar_lea.smem %s0, 4
  %s9 = sld [smem:[%s8]]
  %s10 = scalar_lea.smem %s0, 5
  %s11 = sld [smem:[%s10]]
  %s12 = scalar_lea.smem %s0, 6
  %s13 = sld [smem:[%s12]]
  %s14 = scalar_lea.smem %s0, 7
  %s15 = sld [smem:[%s14]]
  %s16 = scalar_lea.smem %s0, 8
  %s17 = sld [smem:[%s16]]
  %s18 = scalar_lea.smem %s0, 9
  %s19 = sld [smem:[%s18]]
  %s20 = scalar_lea.smem %s0, 10
  %s21 = sld [smem:[%s20]]
  %s22 = scalar_lea.smem %s0, 11
  %s23 = sld [smem:[%s22]]
  %s24 = scalar_lea.smem %s0, 12
  %s25 = sld [smem:[%s24]]
  %s26 = scalar_lea.smem %s0, 13
  %s27 = sld [smem:[%s26]]
  %s28 = scalar_lea.smem %s0, 14
  %s29 = sld [smem:[%s28]]
  %s30 = scalar_lea.smem %s0, 15
  %s31 = sld [smem:[%s30]]
  %s32 = scalar_lea.smem %s0, 16
  %s33 = sld [smem:[%s32]]
  %s34 = scalar_lea.smem %s0, 17
  %s35 = sld [smem:[%s34]]
  %s36 = scalar_lea.smem %s0, 18
  %s37 = sld [smem:[%s36]]
  %s38 = scalar_lea.smem %s0, 19
  %s39 = sld [smem:[%s38]]
  %s40 = scalar_lea.smem %s0, 20
  %s41 = sld [smem:[%s40]]
  %s42 = scalar_lea.smem %s0, 21
  %s43 = sld [smem:[%s42]]
  %s44 = scalar_lea.smem %s0, 22
  %s45 = sld [smem:[%s44]]
  %s46 = scalar_lea.smem %s0, 23
  %s47 = sld [smem:[%s46]]
  %s48 = scalar_lea.smem %s0, 24
  %s49 = sld [smem:[%s48]]
  %s50 = scalar_lea.smem %s0, 25
  %s51 = sld [smem:[%s50]]
  %s52 = scalar_lea.smem %s0, 26
  %s53 = sld [smem:[%s52]]
  %s54 = scalar_lea.smem %s0, 27
  %s55 = sld [smem:[%s54]]
  %s56 = scalar_lea.smem %s0, 28
  %s57 = sld [smem:[%s56]]
  %s58 = scalar_lea.smem %s0, 29
  %s59 = sld [smem:[%s58]]
  %60 = xla_tuple %s55, %s57, %s59
  %s61 = sld [smem:[#allocation0]]
  $region186: #{transformer_spatial_decoder_layer.1} parent=0
    _
  %s63 = ssub.s32 1, %s61
  %s64 = scalar_select 0, %s63, %s61
  $region1: #{transformer_spatial_decoder_layer.1} parent=0
    #allocation2 [shape = 'u8[4096]{0}', space=smem, size = 0x1000, scoped, tag = 'input window, operand 7, single buffered']
    #allocation3 [shape = 's32[1]{0}', space=sflag, size = 0x4, scoped, tag = 'scoped memory for transformer_spatial_decoder_layer.1']
    #allocation4 [shape = 's32[1]{0}', space=sflag, size = 0x4, scoped, tag = 'scoped memory for transformer_spatial_decoder_layer.1']
    #allocation5 [shape = 's32[1]{0}', space=sflag, size = 0x4, scoped, tag = 'scoped memory for transformer_spatial_decoder_layer.1']
    #allocation6 [shape = 'u8[512]{0}', space=smem, size = 0x200, scoped, tag = 'input window, operand 8, single buffered']
    #allocation7 [shape = 's32[1]{0}', space=sflag, size = 0x4, scoped, tag = 'scoped memory for transformer_spatial_decoder_layer.1']
    #allocation8 [shape = 'u8[8192]{0}', space=vmem, size = 0x2000, scoped, tag = 'input window, operand 9, single buffered']
    #allocation9 [shape = 'u8[8192]{0}', space=vmem, size = 0x2000, scoped, tag = 'input window, operand 15, single buffered']
    #allocation10 [shape = 's32[1]{0}', space=sflag, size = 0x4, scoped, tag = 'scoped memory for transformer_spatial_decoder_layer.1']
    #allocation11 [shape = 'u8[8192]{0}', space=vmem, size = 0x2000, scoped, tag = 'input window, operand 17, single buffered']
    #allocation12 [shape = 'u8[512]{0}', space=vmem, size = 0x400, scoped, tag = 'input window, operand 18, single buffered']
    #allocation13 [shape = 's32[1]{0}', space=sflag, size = 0x4, scoped, tag = 'scoped memory for transformer_spatial_decoder_layer.1']
    #allocation14 [shape = 'u8[8192]{0}', space=vmem, size = 0x2000, scoped, tag = 'input window, operand 19, single buffered']
    #allocation15 [shape = 'u8[512]{0}', space=vmem, size = 0x400, scoped, tag = 'input window, operand 20, single buffered']
    #allocation16 [shape = 's32[1]{0}', space=sflag, size = 0x4, scoped, tag = 'scoped memory for transformer_spatial_decoder_layer.1']
    #allocation17 [shape = 'u8[512]{0}', space=vmem, size = 0x400, scoped, tag = 'input window, operand 21, single buffered']
    #allocation18 [shape = 'u8[512]{0}', space=vmem, size = 0x400, scoped, tag = 'input window, operand 22, single buffered']
    #allocation19 [shape = 's32[1]{0}', space=sflag, size = 0x4, scoped, tag = 'scoped memory for transformer_spatial_decoder_layer.1']
    #allocation20 [shape = 'u8[8192]{0}', space=vmem, size = 0x2000, scoped, tag = 'input window, operand 23, single buffered']
    #allocation21 [shape = 'u8[512]{0}', space=vmem, size = 0x400, scoped, tag = 'input window, operand 24, single buffered']
    #allocation22 [shape = 's32[1]{0}', space=sflag, size = 0x4, scoped, tag = 'scoped memory for transformer_spatial_decoder_layer.1']
    #allocation23 [shape = 'u8[512]{0}', space=vmem, size = 0x400, scoped, tag = 'input window, operand 26, single buffered']
    #allocation24 [shape = 'u8[8192]{0}', space=vmem, size = 0x2000, scoped, tag = 'output window, operand 0, single buffered']
    #allocation25 [shape = 'u8[32768]{0}', space=vmem, size = 0x8000, scoped, tag = 'output window, operand 1, single buffered']
    #allocation26 [shape = 's32[1]{0}', space=sflag, size = 0x4, scoped, tag = 'scoped memory for transformer_spatial_decoder_layer.1']
    #allocation27 [shape = 'u8[8192]{0}', space=vmem, size = 0x2000, scoped, tag = 'output window, operand 2, single buffered']
    %65 = vsyncpa [#allocation5], 0
    %66 = vsyncpa [#allocation7], 0
    %67 = vsyncpa [#allocation3], 0
    %68 = vsyncpa [#allocation10], 0
    %69 = vsyncpa [#allocation13], 0
    %70 = vsyncpa [#allocation16], 0
    %71 = vsyncpa [#allocation19], 0
    %72 = vsyncpa [#allocation22], 0
    %73 = vsyncpa [#allocation4], 0
    %74 = vsyncpa [#allocation26], 0
    // Predicated region
    $region2: #{transformer_spatial_decoder_layer.1} parent=1 // pred_check
      _
    $region3: #{transformer_spatial_decoder_layer.1} parent=1 // pred_check_branch
      %76 = sbr.rel (0) target = $region5
    $region4: #{transformer_spatial_decoder_layer.1} parent=1 // pred_region
      _
    $region5: #{transformer_spatial_decoder_layer.1} parent=1 // pred_fallthru
      _
    // Predicated region
    $region6: #{transformer_spatial_decoder_layer.1} parent=1 // pred_check
      _
    $region7: #{transformer_spatial_decoder_layer.1} parent=1 // pred_check_branch
      %78 = sbr.rel (0) target = $region9
    $region8: #{transformer_spatial_decoder_layer.1} parent=1 // pred_region
      _
    $region9: #{transformer_spatial_decoder_layer.1} parent=1 // pred_fallthru
      _
    // Predicated region
    $region10: #{transformer_spatial_decoder_layer.1} parent=1 // pred_check
      _
    $region11: #{transformer_spatial_decoder_layer.1} parent=1 // pred_check_branch
      %80 = sbr.rel (0) target = $region13
    $region12: #{transformer_spatial_decoder_layer.1} parent=1 // pred_region
      _
    $region13: #{transformer_spatial_decoder_layer.1} parent=1 // pred_fallthru
      _
    // Predicated region
    $region14: #{transformer_spatial_decoder_layer.1} parent=1 // pred_check
      _
    $region15: #{transformer_spatial_decoder_layer.1} parent=1 // pred_check_branch
      %82 = sbr.rel (0) target = $region17
    $region16: #{transformer_spatial_decoder_layer.1} parent=1 // pred_region
      _
    $region17: #{transformer_spatial_decoder_layer.1} parent=1 // pred_fallthru
      _
    // Predicated region
    $region18: #{transformer_spatial_decoder_layer.1} parent=1 // pred_check
      _
    $region19: #{transformer_spatial_decoder_layer.1} parent=1 // pred_check_branch
      %84 = sbr.rel (0) target = $region21
    $region20: #{transformer_spatial_decoder_layer.1} parent=1 // pred_region
      _
    $region21: #{transformer_spatial_decoder_layer.1} parent=1 // pred_fallthru
      _
    // Predicated region
    $region22: #{transformer_spatial_decoder_layer.1} parent=1 // pred_check
      _
    $region23: #{transformer_spatial_decoder_layer.1} parent=1 // pred_check_branch
      %86 = sbr.rel (0) target = $region25
    $region24: #{transformer_spatial_decoder_layer.1} parent=1 // pred_region
      _
    $region25: #{transformer_spatial_decoder_layer.1} parent=1 // pred_fallthru
      _
    // Predicated region
    $region26: #{transformer_spatial_decoder_layer.1} parent=1 // pred_check
      _
    $region27: #{transformer_spatial_decoder_layer.1} parent=1 // pred_check_branch
      %88 = sbr.rel (0) target = $region29
    $region28: #{transformer_spatial_decoder_layer.1} parent=1 // pred_region
      _
    $region29: #{transformer_spatial_decoder_layer.1} parent=1 // pred_fallthru
      _
    // Predicated region
    $region30: #{transformer_spatial_decoder_layer.1} parent=1 // pred_check
      _
    $region31: #{transformer_spatial_decoder_layer.1} parent=1 // pred_check_branch
      %90 = sbr.rel (0) target = $region33
    $region32: #{transformer_spatial_decoder_layer.1} parent=1 // pred_region
      %s92 = ssub.s32 128, 128
      %93 = vsyncadd [#allocation5], %s92
      %s95 = sshll.u32 %s15, 4
      %s96 = int_to_ptr.vmem [resolvable:$true] %s95
      %98 = dma.vmem_to_smem %s96, 128, [#allocation2], [#allocation5]
    $region33: #{transformer_spatial_decoder_layer.1} parent=1 // pred_fallthru
      _
    // Predicated region
    $region34: #{transformer_spatial_decoder_layer.1} parent=1 // pred_check
      _
    $region35: #{transformer_spatial_decoder_layer.1} parent=1 // pred_check_branch
      %100 = sbr.rel (0) target = $region37
    $region36: #{transformer_spatial_decoder_layer.1} parent=1 // pred_region
      %s102 = ssub.s32 16, 16
      %103 = vsyncadd [#allocation7], %s102
      %s105 = sshll.u32 %s17, 4
      %s106 = int_to_ptr.vmem [resolvable:$true] %s105
      %108 = dma.vmem_to_smem %s106, 16, [#allocation6], [#allocation7]
    $region37: #{transformer_spatial_decoder_layer.1} parent=1 // pred_fallthru
      _
    // Predicated region
    $region38: #{transformer_spatial_decoder_layer.1} parent=1 // pred_check
      _
    $region39: #{transformer_spatial_decoder_layer.1} parent=1 // pred_check_branch
      %110 = sbr.rel (0) target = $region41
    $region40: #{transformer_spatial_decoder_layer.1} parent=1 // pred_region
      %s112 = ssub.s32 256, 256
      %113 = vsyncadd [#allocation3], %s112
      %s114 = sshll.u32 [#allocation8], 4
      %s115 = int_to_ptr.vmem [resolvable:$true] %s114
      %120 = dma.hbm_to_vmem [thread:$0]  %s19, 256, %s115, [#allocation3], 64, 64, 4
    $region41: #{transformer_spatial_decoder_layer.1} parent=1 // pred_fallthru
      _
    // Predicated region
    $region42: #{transformer_spatial_decoder_layer.1} parent=1 // pred_check
      _
    $region43: #{transformer_spatial_decoder_layer.1} parent=1 // pred_check_branch
      %122 = sbr.rel (0) target = $region45
    $region44: #{transformer_spatial_decoder_layer.1} parent=1 // pred_region
      _
    $region45: #{transformer_spatial_decoder_layer.1} parent=1 // pred_fallthru
      _
    // Predicated region
    $region46: #{transformer_spatial_decoder_layer.1} parent=1 // pred_check
      _
    $region47: #{transformer_spatial_decoder_layer.1} parent=1 // pred_check_branch
      %124 = sbr.rel (0) target = $region49
    $region48: #{transformer_spatial_decoder_layer.1} parent=1 // pred_region
      _
    $region49: #{transformer_spatial_decoder_layer.1} parent=1 // pred_fallthru
      _
    // Predicated region
    $region50: #{transformer_spatial_decoder_layer.1} parent=1 // pred_check
      _
    $region51: #{transformer_spatial_decoder_layer.1} parent=1 // pred_check_branch
      %126 = sbr.rel (0) target = $region53
    $region52: #{transformer_spatial_decoder_layer.1} parent=1 // pred_region
      _
    $region53: #{transformer_spatial_decoder_layer.1} parent=1 // pred_fallthru
      _
    // Predicated region
    $region54: #{transformer_spatial_decoder_layer.1} parent=1 // pred_check
      _
    $region55: #{transformer_spatial_decoder_layer.1} parent=1 // pred_check_branch
      %128 = sbr.rel (0) target = $region57
    $region56: #{transformer_spatial_decoder_layer.1} parent=1 // pred_region
      _
    $region57: #{transformer_spatial_decoder_layer.1} parent=1 // pred_fallthru
      _
    // Predicated region
    $region58: #{transformer_spatial_decoder_layer.1} parent=1 // pred_check
      _
    $region59: #{transformer_spatial_decoder_layer.1} parent=1 // pred_check_branch
      %130 = sbr.rel (0) target = $region61
    $region60: #{transformer_spatial_decoder_layer.1} parent=1 // pred_region
      _
    $region61: #{transformer_spatial_decoder_layer.1} parent=1 // pred_fallthru
      _
    // Predicated region
    $region62: #{transformer_spatial_decoder_layer.1} parent=1 // pred_check
      _
    $region63: #{transformer_spatial_decoder_layer.1} parent=1 // pred_check_branch
      %132 = sbr.rel (0) target = $region65
    $region64: #{transformer_spatial_decoder_layer.1} parent=1 // pred_region
      %s134 = ssub.s32 256, 256
      %135 = vsyncadd [#allocation10], %s134
      %s136 = sshll.u32 [#allocation9], 4
      %s137 = int_to_ptr.vmem [resolvable:$true] %s136
      %142 = dma.hbm_to_vmem [thread:$0]  %s31, 256, %s137, [#allocation10], 64, 64, 4
    $region65: #{transformer_spatial_decoder_layer.1} parent=1 // pred_fallthru
      _
    // Predicated region
    $region66: #{transformer_spatial_decoder_layer.1} parent=1 // pred_check
      _
    $region67: #{transformer_spatial_decoder_layer.1} parent=1 // pred_check_branch
      %144 = sbr.rel (0) target = $region69
    $region68: #{transformer_spatial_decoder_layer.1} parent=1 // pred_region
      _
    $region69: #{transformer_spatial_decoder_layer.1} parent=1 // pred_fallthru
      _
    // Predicated region
    $region70: #{transformer_spatial_decoder_layer.1} parent=1 // pred_check
      _
    $region71: #{transformer_spatial_decoder_layer.1} parent=1 // pred_check_branch
      %146 = sbr.rel (0) target = $region73
    $region72: #{transformer_spatial_decoder_layer.1} parent=1 // pred_region
      %s148 = ssub.s32 256, 256
      %149 = vsyncadd [#allocation10], %s148
      %s150 = sshll.u32 [#allocation11], 4
      %s151 = int_to_ptr.vmem [resolvable:$true] %s150
      %156 = dma.hbm_to_vmem [thread:$0]  %s35, 256, %s151, [#allocation10], 64, 64, 4
    $region73: #{transformer_spatial_decoder_layer.1} parent=1 // pred_fallthru
      _
    // Predicated region
    $region74: #{transformer_spatial_decoder_layer.1} parent=1 // pred_check
      _
    $region75: #{transformer_spatial_decoder_layer.1} parent=1 // pred_check_branch
      %158 = sbr.rel (0) target = $region77
    $region76: #{transformer_spatial_decoder_layer.1} parent=1 // pred_region
      %s160 = ssub.s32 16, 16
      %161 = vsyncadd [#allocation13], %s160
      %s163 = sshll.u32 [#allocation12], 4
      %s164 = int_to_ptr.vmem [resolvable:$true] %s163
      %166 = dma.hbm_to_vmem [thread:$0]  %s37, 16, %s164, [#allocation13]
    $region77: #{transformer_spatial_decoder_layer.1} parent=1 // pred_fallthru
      _
    // Predicated region
    $region78: #{transformer_spatial_decoder_layer.1} parent=1 // pred_check
      _
    $region79: #{transformer_spatial_decoder_layer.1} parent=1 // pred_check_branch
      %168 = sbr.rel (0) target = $region81
    $region80: #{transformer_spatial_decoder_layer.1} parent=1 // pred_region
      %s170 = ssub.s32 256, 256
      %171 = vsyncadd [#allocation13], %s170
      %s172 = sshll.u32 [#allocation14], 4
      %s173 = int_to_ptr.vmem [resolvable:$true] %s172
      %178 = dma.hbm_to_vmem [thread:$0]  %s39, 256, %s173, [#allocation13], 64, 64, 4
    $region81: #{transformer_spatial_decoder_layer.1} parent=1 // pred_fallthru
      _
    // Predicated region
    $region82: #{transformer_spatial_decoder_layer.1} parent=1 // pred_check
      _
    $region83: #{transformer_spatial_decoder_layer.1} parent=1 // pred_check_branch
      %180 = sbr.rel (0) target = $region85
    $region84: #{transformer_spatial_decoder_layer.1} parent=1 // pred_region
      %s182 = ssub.s32 16, 16
      %183 = vsyncadd [#allocation16], %s182
      %s185 = sshll.u32 [#allocation15], 4
      %s186 = int_to_ptr.vmem [resolvable:$true] %s185
      %188 = dma.hbm_to_vmem [thread:$0]  %s41, 16, %s186, [#allocation16]
    $region85: #{transformer_spatial_decoder_layer.1} parent=1 // pred_fallthru
      _
    // Predicated region
    $region86: #{transformer_spatial_decoder_layer.1} parent=1 // pred_check
      _
    $region87: #{transformer_spatial_decoder_layer.1} parent=1 // pred_check_branch
      %190 = sbr.rel (0) target = $region89
    $region88: #{transformer_spatial_decoder_layer.1} parent=1 // pred_region
      %s192 = ssub.s32 16, 16
      %193 = vsyncadd [#allocation16], %s192
      %s195 = sshll.u32 [#allocation17], 4
      %s196 = int_to_ptr.vmem [resolvable:$true] %s195
      %198 = dma.hbm_to_vmem [thread:$0]  %s43, 16, %s196, [#allocation16]
    $region89: #{transformer_spatial_decoder_layer.1} parent=1 // pred_fallthru
      _
    // Predicated region
    $region90: #{transformer_spatial_decoder_layer.1} parent=1 // pred_check
      _
    $region91: #{transformer_spatial_decoder_layer.1} parent=1 // pred_check_branch
      %200 = sbr.rel (0) target = $region93
    $region92: #{transformer_spatial_decoder_layer.1} parent=1 // pred_region
      %s202 = ssub.s32 16, 16
      %203 = vsyncadd [#allocation19], %s202
      %s205 = sshll.u32 [#allocation18], 4
      %s206 = int_to_ptr.vmem [resolvable:$true] %s205
      %208 = dma.hbm_to_vmem [thread:$0]  %s45, 16, %s206, [#allocation19]
    $region93: #{transformer_spatial_decoder_layer.1} parent=1 // pred_fallthru
      _
    // Predicated region
    $region94: #{transformer_spatial_decoder_layer.1} parent=1 // pred_check
      _
    $region95: #{transformer_spatial_decoder_layer.1} parent=1 // pred_check_branch
      %210 = sbr.rel (0) target = $region97
    $region96: #{transformer_spatial_decoder_layer.1} parent=1 // pred_region
      %s212 = ssub.s32 256, 256
      %213 = vsyncadd [#allocation19], %s212
      %s214 = sshll.u32 [#allocation20], 4
      %s215 = int_to_ptr.vmem [resolvable:$true] %s214
      %220 = dma.hbm_to_vmem [thread:$0]  %s47, 256, %s215, [#allocation19], 64, 64, 4
    $region97: #{transformer_spatial_decoder_layer.1} parent=1 // pred_fallthru
      _
    // Predicated region
    $region98: #{transformer_spatial_decoder_layer.1} parent=1 // pred_check
      _
    $region99: #{transformer_spatial_decoder_layer.1} parent=1 // pred_check_branch
      %222 = sbr.rel (0) target = $region101
    $region100: #{transformer_spatial_decoder_layer.1} parent=1 // pred_region
      %s224 = ssub.s32 16, 16
      %225 = vsyncadd [#allocation22], %s224
      %s227 = sshll.u32 [#allocation21], 4
      %s228 = int_to_ptr.vmem [resolvable:$true] %s227
      %230 = dma.hbm_to_vmem [thread:$0]  %s49, 16, %s228, [#allocation22]
    $region101: #{transformer_spatial_decoder_layer.1} parent=1 // pred_fallthru
      _
    // Predicated region
    $region102: #{transformer_spatial_decoder_layer.1} parent=1 // pred_check
      _
    $region103: #{transformer_spatial_decoder_layer.1} parent=1 // pred_check_branch
      %232 = sbr.rel (0) target = $region105
    $region104: #{transformer_spatial_decoder_layer.1} parent=1 // pred_region
      _
    $region105: #{transformer_spatial_decoder_layer.1} parent=1 // pred_fallthru
      _
    // Predicated region
    $region106: #{transformer_spatial_decoder_layer.1} parent=1 // pred_check
      _
    $region107: #{transformer_spatial_decoder_layer.1} parent=1 // pred_check_branch
      %234 = sbr.rel (0) target = $region109
    $region108: #{transformer_spatial_decoder_layer.1} parent=1 // pred_region
      %s236 = ssub.s32 16, 16
      %237 = vsyncadd [#allocation22], %s236
      %s239 = sshll.u32 [#allocation23], 4
      %s240 = int_to_ptr.vmem [resolvable:$true] %s239
      %242 = dma.hbm_to_vmem [thread:$0]  %s53, 16, %s240, [#allocation22]
    $region109: #{transformer_spatial_decoder_layer.1} parent=1 // pred_fallthru
      _
    // Predicated region
    $region110: #{transformer_spatial_decoder_layer.1} parent=1 // pred_check
      _
    $region111: #{transformer_spatial_decoder_layer.1} parent=1 // pred_check_branch
      %244 = sbr.rel (0) target = $region113
    $region112: #{transformer_spatial_decoder_layer.1} parent=1 // pred_region
      %245 = dma.done [#allocation5], 128
    $region113: #{transformer_spatial_decoder_layer.1} parent=1 // pred_fallthru
      _
    // Predicated region
    $region114: #{transformer_spatial_decoder_layer.1} parent=1 // pred_check
      _
    $region115: #{transformer_spatial_decoder_layer.1} parent=1 // pred_check_branch
      %247 = sbr.rel (0) target = $region117
    $region116: #{transformer_spatial_decoder_layer.1} parent=1 // pred_region
      %248 = dma.done [#allocation7], 16
    $region117: #{transformer_spatial_decoder_layer.1} parent=1 // pred_fallthru
      _
    // Predicated region
    $region118: #{transformer_spatial_decoder_layer.1} parent=1 // pred_check
      _
    $region119: #{transformer_spatial_decoder_layer.1} parent=1 // pred_check_branch
      %250 = sbr.rel (0) target = $region121
    $region120: #{transformer_spatial_decoder_layer.1} parent=1 // pred_region
      %251 = dma.done [#allocation3], 256
    $region121: #{transformer_spatial_decoder_layer.1} parent=1 // pred_fallthru
      _
    // Predicated region
    $region122: #{transformer_spatial_decoder_layer.1} parent=1 // pred_check
      _
    $region123: #{transformer_spatial_decoder_layer.1} parent=1 // pred_check_branch
      %253 = sbr.rel (0) target = $region125
    $region124: #{transformer_spatial_decoder_layer.1} parent=1 // pred_region
      %254 = dma.done [#allocation10], 256
    $region125: #{transformer_spatial_decoder_layer.1} parent=1 // pred_fallthru
      _
    // Predicated region
    $region126: #{transformer_spatial_decoder_layer.1} parent=1 // pred_check
      _
    $region127: #{transformer_spatial_decoder_layer.1} parent=1 // pred_check_branch
      %256 = sbr.rel (0) target = $region129
    $region128: #{transformer_spatial_decoder_layer.1} parent=1 // pred_region
      %257 = dma.done [#allocation10], 256
    $region129: #{transformer_spatial_decoder_layer.1} parent=1 // pred_fallthru
      _
    // Predicated region
    $region130: #{transformer_spatial_decoder_layer.1} parent=1 // pred_check
      _
    $region131: #{transformer_spatial_decoder_layer.1} parent=1 // pred_check_branch
      %259 = sbr.rel (0) target = $region133
    $region132: #{transformer_spatial_decoder_layer.1} parent=1 // pred_region
      %260 = dma.done [#allocation13], 16
    $region133: #{transformer_spatial_decoder_layer.1} parent=1 // pred_fallthru
      _
    // Predicated region
    $region134: #{transformer_spatial_decoder_layer.1} parent=1 // pred_check
      _
    $region135: #{transformer_spatial_decoder_layer.1} parent=1 // pred_check_branch
      %262 = sbr.rel (0) target = $region137
    $region136: #{transformer_spatial_decoder_layer.1} parent=1 // pred_region
      %263 = dma.done [#allocation13], 256
    $region137: #{transformer_spatial_decoder_layer.1} parent=1 // pred_fallthru
      _
    // Predicated region
    $region138: #{transformer_spatial_decoder_layer.1} parent=1 // pred_check
      _
    $region139: #{transformer_spatial_decoder_layer.1} parent=1 // pred_check_branch
      %265 = sbr.rel (0) target = $region141
    $region140: #{transformer_spatial_decoder_layer.1} parent=1 // pred_region
      %266 = dma.done [#allocation16], 16
    $region141: #{transformer_spatial_decoder_layer.1} parent=1 // pred_fallthru
      _
    // Predicated region
    $region142: #{transformer_spatial_decoder_layer.1} parent=1 // pred_check
      _
    $region143: #{transformer_spatial_decoder_layer.1} parent=1 // pred_check_branch
      %268 = sbr.rel (0) target = $region145
    $region144: #{transformer_spatial_decoder_layer.1} parent=1 // pred_region
      %269 = dma.done [#allocation16], 16
    $region145: #{transformer_spatial_decoder_layer.1} parent=1 // pred_fallthru
      _
    // Predicated region
    $region146: #{transformer_spatial_decoder_layer.1} parent=1 // pred_check
      _
    $region147: #{transformer_spatial_decoder_layer.1} parent=1 // pred_check_branch
      %271 = sbr.rel (0) target = $region149
    $region148: #{transformer_spatial_decoder_layer.1} parent=1 // pred_region
      %272 = dma.done [#allocation19], 16
    $region149: #{transformer_spatial_decoder_layer.1} parent=1 // pred_fallthru
      _
    // Predicated region
    $region150: #{transformer_spatial_decoder_layer.1} parent=1 // pred_check
      _
    $region151: #{transformer_spatial_decoder_layer.1} parent=1 // pred_check_branch
      %274 = sbr.rel (0) target = $region153
    $region152: #{transformer_spatial_decoder_layer.1} parent=1 // pred_region
      %275 = dma.done [#allocation19], 256
    $region153: #{transformer_spatial_decoder_layer.1} parent=1 // pred_fallthru
      _
    // Predicated region
    $region154: #{transformer_spatial_decoder_layer.1} parent=1 // pred_check
      _
    $region155: #{transformer_spatial_decoder_layer.1} parent=1 // pred_check_branch
      %277 = sbr.rel (0) target = $region157
    $region156: #{transformer_spatial_decoder_layer.1} parent=1 // pred_region
      %278 = dma.done [#allocation22], 16
    $region157: #{transformer_spatial_decoder_layer.1} parent=1 // pred_fallthru
      _
    // Predicated region
    $region158: #{transformer_spatial_decoder_layer.1} parent=1 // pred_check
      _
    $region159: #{transformer_spatial_decoder_layer.1} parent=1 // pred_check_branch
      %280 = sbr.rel (0) target = $region161
    $region160: #{transformer_spatial_decoder_layer.1} parent=1 // pred_region
      %281 = dma.done [#allocation22], 16
    $region161: #{transformer_spatial_decoder_layer.1} parent=1 // pred_fallthru
      _
    %282 = sfence
    %v284 = vld [vmem:[%s1] sm:$0xff]
    %v285 = vld [vmem:[%s1 + $0x8] sm:$0xff]
    %v286 = vld [vmem:[%s7] sm:$0x1]
    %v287 = vld [vmem:[%s9] sm:$0x1]
    %vm288 = vcmask 261120
    %v289 = vsel %vm288, %v284, 0.0
    %290 = vadd.xlane.f32.xlu0 %v289
    %v291 = vpop.xlane.xlu0 %290
    %v292 = vsel %vm288, %v285, 0.0
    %293 = vadd.xlane.f32.xlu0 %v292
    %v294 = vpop.xlane.xlu0 %293
    %v295 = vrcp.pop 32.0
    %v296 = vmul.f32 %v291, %v295
    %v297 = vmul.f32 %v294, %v295
    %v298 = vsub.f32 %v284, %v296
    %v299 = vsub.f32 %v285, %v297
    %v300 = vmul.f32 %v298, %v298
    %v301 = vmul.f32 %v299, %v299
    %v302 = vsel %vm288, %v300, 0.0
    %303 = vadd.xlane.f32.xlu0 %v302
    %v304 = vpop.xlane.xlu0 %303
    %v305 = vsel %vm288, %v301, 0.0
    %306 = vadd.xlane.f32.xlu0 %v305
    %v307 = vpop.xlane.xlu0 %306
    %v308 = vmul.f32 %v304, %v295
    %v309 = vmul.f32 %v307, %v295
    %v310 = vadd.f32 %v308, 1e-05
    %v311 = vadd.f32 %v309, 1e-05
    %v312 = vrsqrt.pop %v310
    %v313 = vrsqrt.pop %v311
    %v314 = vmul.f32 %v298, %v312
    %v315 = vmul.f32 %v299, %v313
    %v317 = vlaneseq
    %v318 = vshrl.u32 %v317, 7
    %v319 = vsub.s32 0, %v318
    %v320 = vrot.slane %v286, %v319
    %v322 = vmul.f32 %v314, %v320
    %v323 = vmul.f32 %v315, %v320
    %v325 = vlaneseq
    %v326 = vshrl.u32 %v325, 7
    %v327 = vsub.s32 0, %v326
    %v328 = vrot.slane %v287, %v327
    %v330 = vadd.f32 %v322, %v328
    %v331 = vadd.f32 %v323, %v328
    %v332 = vld [vmem:[%s11] sm:$0xf]
    %v333 = vld [vmem:[%s11 + $0x4] sm:$0xf]
    %v334 = vld [vmem:[%s11 + $0x8] sm:$0xf]
    %v335 = vld [vmem:[%s11 + $0xc] sm:$0xf]
    %v336 = vpack.c.bf16 %v331, %v330
    %v337 = vld [vmem:[%s13] sm:$0x1]
    %v339 = vlaneseq
    %v340 = vshrl.u32 %v339, 7
    %v341 = vsub.s32 0, %v340
    %v342 = vrot.slane %v337, %v341
    %v348 = vunpack.c.l.b16 %v332
    %v349 = vunpack.c.l.b16 %v333
    %v350 = vunpack.c.l.b16 %v334
    %v351 = vunpack.c.l.b16 %v335
    %v352 = vpack.c.b16 %v349, %v348
    %v353 = vpack.c.b16 %v351, %v350
    %v357 = vsel %vm288, %v336, 0
    %359 = vmatprep.subr.bf16.mxu0 0
    %360 = vmatpush1.bf16.msra.mxu0 %v352
    %361 = vmatprep.subr.bf16.mxu0 0
    %362 = vmatpush1.bf16.msra.mxu0 %v353
    %363 = vmatprep.subr.bf16.mxu0 0
    %364 = vmatpush1.bf16.msra.mxu0 0
    %365 = vmatprep.subr.bf16.mxu0 0
    %366 = vmatpush1.bf16.msra.mxu0 0
    %367 = vmatprep.subr.bf16.mxu0 0
    %368 = vmatpush1.bf16.msra.mxu0 0
    %369 = vmatprep.subr.bf16.mxu0 0
    %370 = vmatpush1.bf16.msra.mxu0 0
    %371 = vmatprep.subr.bf16.mxu0 0
    %372 = vmatpush1.bf16.msra.mxu0 0
    %373 = vmatprep.subr.bf16.mxu0 0
    %374 = vmatpush1.bf16.msra.mxu0 0
    %375 = vmatprep.subr.bf16.mxu0 0
    %376 = vmatpush1.bf16.msra.mxu0 0
    %377 = vmatprep.subr.bf16.mxu0 0
    %378 = vmatpush1.bf16.msra.mxu0 0
    %379 = vmatprep.subr.bf16.mxu0 0
    %380 = vmatpush1.bf16.msra.mxu0 0
    %381 = vmatprep.subr.bf16.mxu0 0
    %382 = vmatpush1.bf16.msra.mxu0 0
    %383 = vmatprep.subr.bf16.mxu0 0
    %384 = vmatpush1.bf16.msra.mxu0 0
    %385 = vmatprep.subr.bf16.mxu0 0
    %386 = vmatpush1.bf16.msra.mxu0 0
    %387 = vmatprep.subr.bf16.mxu0 0
    %388 = vmatpush1.bf16.msra.mxu0 0
    %389 = vmatprep.subr.bf16.mxu0 0
    %390 = vmatpush1.bf16.msra.mxu0 0
    %391 = vmatprep.mubr.bf16.mxu0 0
    %392 = vmatmul.mubr.bf16.gmra.mrb[0].mxu0 %v357
    %v393 = vpop.f32.mrb[0].mxu0
    %v394 = vadd.f32 %v342, %v393
    %v395 = vpop.f32.mrb[0].mxu0
    %v396 = vpop.f32.mrb[0].mxu0
    %v397 = vadd.f32 %v342, %v396
    %v398 = vpop.f32.mrb[0].mxu0
    %399 = vdwg.mxu0
    %v400 = vpack.c.bf16 %v397, %v394
    %v402 = vunpack.c.l.b16 %v400
    %v403 = vunpack.c.h.b16 %v400
    %v404 = vpack.c.b16 %v402, %v402
    %v405 = vpack.c.b16 %v403, %v403
    %v406 = vld [vmem:[%s5] sm:$0xff]
    %v407 = vld [vmem:[%s5 + $0x8] sm:$0xff]
    %v408 = vld [vmem:[%s5 + $0x10] sm:$0xff]
    %v409 = vld [vmem:[%s5 + $0x18] sm:$0xff]
    %v410 = vld [vmem:[%s5 + $0x20] sm:$0xff]
    %v411 = vld [vmem:[%s5 + $0x28] sm:$0xff]
    %v412 = vld [vmem:[%s5 + $0x30] sm:$0xff]
    %v413 = vld [vmem:[%s5 + $0x38] sm:$0xff]
    %v414 = vld [vmem:[%s5 + $0x40] sm:$0xff]
    %v415 = vld [vmem:[%s5 + $0x48] sm:$0xff]
    %s416 = sld [smem:[#allocation2]]
    %v417 = vstv %s416
    %v418 = vmul.f32 %v406, %v417
    %v419 = vmul.f32 %v411, %v417
    %s420 = sld [smem:[#allocation2 + $0x80]]
    %v421 = vstv %s420
    %v422 = vmul.f32 %v407, %v421
    %v423 = vmul.f32 %v412, %v421
    %v424 = vadd.f32 %v418, %v422
    %v425 = vadd.f32 %v419, %v423
    %s426 = sld [smem:[#allocation2 + $0x100]]
    %v427 = vstv %s426
    %v428 = vmul.f32 %v408, %v427
    %v429 = vmul.f32 %v413, %v427
    %v430 = vadd.f32 %v424, %v428
    %v431 = vadd.f32 %v425, %v429
    %s432 = sld [smem:[#allocation2 + $0x180]]
    %v433 = vstv %s432
    %v434 = vmul.f32 %v409, %v433
    %v435 = vmul.f32 %v414, %v433
    %v436 = vadd.f32 %v430, %v434
    %v437 = vadd.f32 %v431, %v435
    %s438 = sld [smem:[#allocation2 + $0x200]]
    %v439 = vstv %s438
    %v440 = vmul.f32 %v410, %v439
    %v441 = vmul.f32 %v415, %v439
    %v442 = vadd.f32 %v436, %v440
    %v443 = vadd.f32 %v437, %v441
    %s444 = sld [smem:[#allocation6]]
    %v445 = vstv %s444
    %v446 = vadd.f32 %v442, %v445
    %v447 = vadd.f32 %v443, %v445
    %v448 = vmax.f32 %v446, 0.0
    %v449 = vmax.f32 %v447, 0.0
    %v450 = vmax.f32 %v448, 1e-06
    %v451 = vmax.f32 %v449, 1e-06
    %v452 = vlog2.pop %v450
    %v453 = vmul.f32 %v452, 0.6931472
    %v454 = vlog2.pop %v451
    %v455 = vmul.f32 %v454, 0.6931472
    %s456 = sld [smem:[#allocation2 + $0x1]]
    %v457 = vstv %s456
    %v458 = vmul.f32 %v406, %v457
    %v459 = vmul.f32 %v411, %v457
    %s460 = sld [smem:[#allocation2 + $0x81]]
    %v461 = vstv %s460
    %v462 = vmul.f32 %v407, %v461
    %v463 = vmul.f32 %v412, %v461
    %v464 = vadd.f32 %v458, %v462
    %v465 = vadd.f32 %v459, %v463
    %s466 = sld [smem:[#allocation2 + $0x101]]
    %v467 = vstv %s466
    %v468 = vmul.f32 %v408, %v467
    %v469 = vmul.f32 %v413, %v467
    %v470 = vadd.f32 %v464, %v468
    %v471 = vadd.f32 %v465, %v469
    %s472 = sld [smem:[#allocation2 + $0x181]]
    %v473 = vstv %s472
    %v474 = vmul.f32 %v409, %v473
    %v475 = vmul.f32 %v414, %v473
    %v476 = vadd.f32 %v470, %v474
    %v477 = vadd.f32 %v471, %v475
    %s478 = sld [smem:[#allocation2 + $0x201]]
    %v479 = vstv %s478
    %v480 = vmul.f32 %v410, %v479
    %v481 = vmul.f32 %v415, %v479
    %v482 = vadd.f32 %v476, %v480
    %v483 = vadd.f32 %v477, %v481
    %s484 = sld [smem:[#allocation6 + $0x1]]
    %v485 = vstv %s484
    %v486 = vadd.f32 %v482, %v485
    %v487 = vadd.f32 %v483, %v485
    %v488 = vmax.f32 %v486, 0.0
    %v489 = vmax.f32 %v487, 0.0
    %v490 = vmax.f32 %v488, 1e-06
    %v491 = vmax.f32 %v489, 1e-06
    %v492 = vlog2.pop %v490
    %v493 = vmul.f32 %v492, 0.6931472
    %v494 = vlog2.pop %v491
    %v495 = vmul.f32 %v494, 0.6931472
    %s496 = sld [smem:[#allocation2 + $0x2]]
    %v497 = vstv %s496
    %v498 = vmul.f32 %v406, %v497
    %v499 = vmul.f32 %v411, %v497
    %s500 = sld [smem:[#allocation2 + $0x82]]
    %v501 = vstv %s500
    %v502 = vmul.f32 %v407, %v501
    %v503 = vmul.f32 %v412, %v501
    %v504 = vadd.f32 %v498, %v502
    %v505 = vadd.f32 %v499, %v503
    %s506 = sld [smem:[#allocation2 + $0x102]]
    %v507 = vstv %s506
    %v508 = vmul.f32 %v408, %v507
    %v509 = vmul.f32 %v413, %v507
    %v510 = vadd.f32 %v504, %v508
    %v511 = vadd.f32 %v505, %v509
    %s512 = sld [smem:[#allocation2 + $0x182]]
    %v513 = vstv %s512
    %v514 = vmul.f32 %v409, %v513
    %v515 = vmul.f32 %v414, %v513
    %v516 = vadd.f32 %v510, %v514
    %v517 = vadd.f32 %v511, %v515
    %s518 = sld [smem:[#allocation2 + $0x202]]
    %v519 = vstv %s518
    %v520 = vmul.f32 %v410, %v519
    %v521 = vmul.f32 %v415, %v519
    %v522 = vadd.f32 %v516, %v520
    %v523 = vadd.f32 %v517, %v521
    %s524 = sld [smem:[#allocation6 + $0x2]]
    %v525 = vstv %s524
    %v526 = vadd.f32 %v522, %v525
    %v527 = vadd.f32 %v523, %v525
    %v528 = vmax.f32 %v526, 0.0
    %v529 = vmax.f32 %v527, 0.0
    %v530 = vmax.f32 %v528, 1e-06
    %v531 = vmax.f32 %v529, 1e-06
    %v532 = vlog2.pop %v530
    %v533 = vmul.f32 %v532, 0.6931472
    %v534 = vlog2.pop %v531
    %v535 = vmul.f32 %v534, 0.6931472
    %s536 = sld [smem:[#allocation2 + $0x3]]
    %v537 = vstv %s536
    %v538 = vmul.f32 %v406, %v537
    %v539 = vmul.f32 %v411, %v537
    %s540 = sld [smem:[#allocation2 + $0x83]]
    %v541 = vstv %s540
    %v542 = vmul.f32 %v407, %v541
    %v543 = vmul.f32 %v412, %v541
    %v544 = vadd.f32 %v538, %v542
    %v545 = vadd.f32 %v539, %v543
    %s546 = sld [smem:[#allocation2 + $0x103]]
    %v547 = vstv %s546
    %v548 = vmul.f32 %v408, %v547
    %v549 = vmul.f32 %v413, %v547
    %v550 = vadd.f32 %v544, %v548
    %v551 = vadd.f32 %v545, %v549
    %s552 = sld [smem:[#allocation2 + $0x183]]
    %v553 = vstv %s552
    %v554 = vmul.f32 %v409, %v553
    %v555 = vmul.f32 %v414, %v553
    %v556 = vadd.f32 %v550, %v554
    %v557 = vadd.f32 %v551, %v555
    %s558 = sld [smem:[#allocation2 + $0x203]]
    %v559 = vstv %s558
    %v560 = vmul.f32 %v410, %v559
    %v561 = vmul.f32 %v415, %v559
    %v562 = vadd.f32 %v556, %v560
    %v563 = vadd.f32 %v557, %v561
    %s564 = sld [smem:[#allocation6 + $0x3]]
    %v565 = vstv %s564
    %v566 = vadd.f32 %v562, %v565
    %v567 = vadd.f32 %v563, %v565
    %v568 = vmax.f32 %v566, 0.0
    %v569 = vmax.f32 %v567, 0.0
    %v570 = vmax.f32 %v568, 1e-06
    %v571 = vmax.f32 %v569, 1e-06
    %v572 = vlog2.pop %v570
    %v573 = vmul.f32 %v572, 0.6931472
    %v574 = vlog2.pop %v571
    %v575 = vmul.f32 %v574, 0.6931472
    %v576 = vld [vmem:[#allocation8] sm:$0xf]
    %v577 = vld [vmem:[#allocation8 + $0x4] sm:$0xf]
    %v578 = vld [vmem:[#allocation8 + $0x8] sm:$0xf]
    %v579 = vld [vmem:[#allocation8 + $0xc] sm:$0xf]
    %580 = vrot.lane.b32.xlu0 %v404, 96
    %v581 = vpop.permute.xlu0 %580
    %vm582 = vcmask 64512
    %v584 = vsel %vm582, %v404, 0
    %v587 = vsel %vm582, %v581, 0
    %589 = vmatprep.subr.bf16.mxu0 0
    %590 = vmatpush1.bf16.xpose.msra.mxu0 %v587
    %591 = vmatprep.subr.bf16.mxu0 0
    %592 = vmatpush1.bf16.xpose.msra.mxu0 0
    %593 = vmatprep.subr.bf16.mxu0 0
    %594 = vmatpush1.bf16.xpose.msra.mxu0 0
    %595 = vmatprep.subr.bf16.mxu0 0
    %596 = vmatpush1.bf16.xpose.msra.mxu0 0
    %597 = vmatprep.subr.bf16.mxu0 0
    %598 = vmatpush1.bf16.xpose.msra.mxu0 0
    %599 = vmatprep.subr.bf16.mxu0 0
    %600 = vmatpush1.bf16.xpose.msra.mxu0 0
    %601 = vmatprep.subr.bf16.mxu0 0
    %602 = vmatpush1.bf16.xpose.msra.mxu0 0
    %603 = vmatprep.subr.bf16.mxu0 0
    %604 = vmatpush1.bf16.xpose.msra.mxu0 0
    %605 = vmatprep.subr.bf16.mxu0 0
    %606 = vmatpush1.bf16.xpose.msra.mxu0 0
    %607 = vmatprep.subr.bf16.mxu0 0
    %608 = vmatpush1.bf16.xpose.msra.mxu0 0
    %609 = vmatprep.subr.bf16.mxu0 0
    %610 = vmatpush1.bf16.xpose.msra.mxu0 0
    %611 = vmatprep.subr.bf16.mxu0 0
    %612 = vmatpush1.bf16.xpose.msra.mxu0 0
    %613 = vmatprep.subr.bf16.mxu0 0
    %614 = vmatpush1.bf16.xpose.msra.mxu0 0
    %615 = vmatprep.subr.bf16.mxu0 0
    %616 = vmatpush1.bf16.xpose.msra.mxu0 0
    %617 = vmatprep.subr.bf16.mxu0 0
    %618 = vmatpush1.bf16.xpose.msra.mxu0 0
    %619 = vmatprep.subr.bf16.mxu0 0
    %620 = vmatpush1.bf16.xpose.msra.mxu0 0
    %621 = vmatprep.mubr.bf16.mxu0 0
    %622 = vmatmul.mubr.bf16.gmra.mrb[0].mxu0 %v584
    %v623 = vpop.f32.mrb[0].mxu0
    %v624 = vadd.f32 %v453, %v623
    %v625 = vpop.f32.mrb[0].mxu0
    %v626 = vpop.f32.mrb[0].mxu0
    %v627 = vpop.f32.mrb[0].mxu0
    %628 = vdwg.mxu0
    %629 = vrot.lane.b32.xlu0 %v405, 96
    %v630 = vpop.permute.xlu0 %629
    %v632 = vsel %vm582, %v405, 0
    %v635 = vsel %vm582, %v630, 0
    %637 = vmatprep.subr.bf16.mxu0 0
    %638 = vmatpush1.bf16.xpose.msra.mxu0 %v635
    %639 = vmatprep.subr.bf16.mxu0 0
    %640 = vmatpush1.bf16.xpose.msra.mxu0 0
    %641 = vmatprep.subr.bf16.mxu0 0
    %642 = vmatpush1.bf16.xpose.msra.mxu0 0
    %643 = vmatprep.subr.bf16.mxu0 0
    %644 = vmatpush1.bf16.xpose.msra.mxu0 0
    %645 = vmatprep.subr.bf16.mxu0 0
    %646 = vmatpush1.bf16.xpose.msra.mxu0 0
    %647 = vmatprep.subr.bf16.mxu0 0
    %648 = vmatpush1.bf16.xpose.msra.mxu0 0
    %649 = vmatprep.subr.bf16.mxu0 0
    %650 = vmatpush1.bf16.xpose.msra.mxu0 0
    %651 = vmatprep.subr.bf16.mxu0 0
    %652 = vmatpush1.bf16.xpose.msra.mxu0 0
    %653 = vmatprep.subr.bf16.mxu0 0
    %654 = vmatpush1.bf16.xpose.msra.mxu0 0
    %655 = vmatprep.subr.bf16.mxu0 0
    %656 = vmatpush1.bf16.xpose.msra.mxu0 0
    %657 = vmatprep.subr.bf16.mxu0 0
    %658 = vmatpush1.bf16.xpose.msra.mxu0 0
    %659 = vmatprep.subr.bf16.mxu0 0
    %660 = vmatpush1.bf16.xpose.msra.mxu0 0
    %661 = vmatprep.subr.bf16.mxu0 0
    %662 = vmatpush1.bf16.xpose.msra.mxu0 0
    %663 = vmatprep.subr.bf16.mxu0 0
    %664 = vmatpush1.bf16.xpose.msra.mxu0 0
    %665 = vmatprep.subr.bf16.mxu0 0
    %666 = vmatpush1.bf16.xpose.msra.mxu0 0
    %667 = vmatprep.subr.bf16.mxu0 0
    %668 = vmatpush1.bf16.xpose.msra.mxu0 0
    %669 = vmatprep.mubr.bf16.mxu0 0
    %670 = vmatmul.mubr.bf16.gmra.mrb[0].mxu0 %v632
    %v671 = vpop.f32.mrb[0].mxu0
    %v672 = vadd.f32 %v455, %v671
    %v673 = vpop.f32.mrb[0].mxu0
    %v674 = vpop.f32.mrb[0].mxu0
    %v675 = vpop.f32.mrb[0].mxu0
    %676 = vdwg.mxu0
    %v677 = vsel %vm582, %v624, -inf
    %678 = vmax.xlane.f32.xlu0 %v677
    %v679 = vpop.xlane.xlu0 %678
    %v680 = vsel %vm582, %v672, -inf
    %681 = vmax.xlane.f32.xlu0 %v680
    %v682 = vpop.xlane.xlu0 %681
    %v683 = vsub.f32 %v624, %v679
    %v684 = vsub.f32 %v672, %v682
    %v685 = vmul.f32 %v683, 1.442695
    %v686 = vpow.pop %v685
    %v687 = vmul.f32 %v684, 1.442695
    %v688 = vpow.pop %v687
    %v689 = vsel %vm582, %v686, 0.0
    %690 = vadd.xlane.f32.xlu0 %v689
    %v691 = vpop.xlane.xlu0 %690
    %v692 = vsel %vm582, %v688, 0.0
    %693 = vadd.xlane.f32.xlu0 %v692
    %v694 = vpop.xlane.xlu0 %693
    %v695 = vrcp.pop %v691
    %v696 = vmul.f32 %v686, %v695
    %v697 = vrcp.pop %v694
    %v698 = vmul.f32 %v688, %v697
    %699 = vst.msk [vmem:[#allocation25] sm:$0xff] %vm582, %v696
    %700 = vst.msk [vmem:[#allocation25 + $0x8] sm:$0xff] %vm582, %v698
    %v701 = vpack.c.bf16 %v696, %v696
    %v702 = vpack.c.bf16 %v698, %v698
    %703 = vrot.lane.b32.xlu0 %v404, 64
    %v704 = vpop.permute.xlu0 %703
    %v706 = vsel %vm582, %v701, 0
    %vm708 = vcmask 1043456
    %v710 = vsel %vm708, %v704, 0
    %712 = vmatprep.subr.bf16.mxu0 0
    %713 = vmatpush1.bf16.msra.mxu0 %v710
    %714 = vmatprep.subr.bf16.mxu0 0
    %715 = vmatpush1.bf16.msra.mxu0 0
    %716 = vmatprep.subr.bf16.mxu0 0
    %717 = vmatpush1.bf16.msra.mxu0 0
    %718 = vmatprep.subr.bf16.mxu0 0
    %719 = vmatpush1.bf16.msra.mxu0 0
    %720 = vmatprep.subr.bf16.mxu0 0
    %721 = vmatpush1.bf16.msra.mxu0 0
    %722 = vmatprep.subr.bf16.mxu0 0
    %723 = vmatpush1.bf16.msra.mxu0 0
    %724 = vmatprep.subr.bf16.mxu0 0
    %725 = vmatpush1.bf16.msra.mxu0 0
    %726 = vmatprep.subr.bf16.mxu0 0
    %727 = vmatpush1.bf16.msra.mxu0 0
    %728 = vmatprep.subr.bf16.mxu0 0
    %729 = vmatpush1.bf16.msra.mxu0 0
    %730 = vmatprep.subr.bf16.mxu0 0
    %731 = vmatpush1.bf16.msra.mxu0 0
    %732 = vmatprep.subr.bf16.mxu0 0
    %733 = vmatpush1.bf16.msra.mxu0 0
    %734 = vmatprep.subr.bf16.mxu0 0
    %735 = vmatpush1.bf16.msra.mxu0 0
    %736 = vmatprep.subr.bf16.mxu0 0
    %737 = vmatpush1.bf16.msra.mxu0 0
    %738 = vmatprep.subr.bf16.mxu0 0
    %739 = vmatpush1.bf16.msra.mxu0 0
    %740 = vmatprep.subr.bf16.mxu0 0
    %741 = vmatpush1.bf16.msra.mxu0 0
    %742 = vmatprep.subr.bf16.mxu0 0
    %743 = vmatpush1.bf16.msra.mxu0 0
    %744 = vmatprep.mubr.bf16.mxu0 0
    %745 = vmatmul.mubr.bf16.gmra.mrb[0].mxu0 %v706
    %v746 = vpop.f32.mrb[0].mxu0
    %v747 = vadd.f32 0.0, %v746
    %v748 = vpop.f32.mrb[0].mxu0
    %v749 = vpop.f32.mrb[0].mxu0
    %v750 = vpop.f32.mrb[0].mxu0
    %751 = vdwg.mxu0
    %752 = vrot.lane.b32.xlu0 %v405, 64
    %v753 = vpop.permute.xlu0 %752
    %v755 = vsel %vm582, %v702, 0
    %v758 = vsel %vm708, %v753, 0
    %760 = vmatprep.subr.bf16.mxu0 0
    %761 = vmatpush1.bf16.msra.mxu0 %v758
    %762 = vmatprep.subr.bf16.mxu0 0
    %763 = vmatpush1.bf16.msra.mxu0 0
    %764 = vmatprep.subr.bf16.mxu0 0
    %765 = vmatpush1.bf16.msra.mxu0 0
    %766 = vmatprep.subr.bf16.mxu0 0
    %767 = vmatpush1.bf16.msra.mxu0 0
    %768 = vmatprep.subr.bf16.mxu0 0
    %769 = vmatpush1.bf16.msra.mxu0 0
    %770 = vmatprep.subr.bf16.mxu0 0
    %771 = vmatpush1.bf16.msra.mxu0 0
    %772 = vmatprep.subr.bf16.mxu0 0
    %773 = vmatpush1.bf16.msra.mxu0 0
    %774 = vmatprep.subr.bf16.mxu0 0
    %775 = vmatpush1.bf16.msra.mxu0 0
    %776 = vmatprep.subr.bf16.mxu0 0
    %777 = vmatpush1.bf16.msra.mxu0 0
    %778 = vmatprep.subr.bf16.mxu0 0
    %779 = vmatpush1.bf16.msra.mxu0 0
    %780 = vmatprep.subr.bf16.mxu0 0
    %781 = vmatpush1.bf16.msra.mxu0 0
    %782 = vmatprep.subr.bf16.mxu0 0
    %783 = vmatpush1.bf16.msra.mxu0 0
    %784 = vmatprep.subr.bf16.mxu0 0
    %785 = vmatpush1.bf16.msra.mxu0 0
    %786 = vmatprep.subr.bf16.mxu0 0
    %787 = vmatpush1.bf16.msra.mxu0 0
    %788 = vmatprep.subr.bf16.mxu0 0
    %789 = vmatpush1.bf16.msra.mxu0 0
    %790 = vmatprep.subr.bf16.mxu0 0
    %791 = vmatpush1.bf16.msra.mxu0 0
    %792 = vmatprep.mubr.bf16.mxu0 0
    %793 = vmatmul.mubr.bf16.gmra.mrb[0].mxu0 %v755
    %v794 = vpop.f32.mrb[0].mxu0
    %v795 = vadd.f32 0.0, %v794
    %v796 = vpop.f32.mrb[0].mxu0
    %v797 = vpop.f32.mrb[0].mxu0
    %v798 = vpop.f32.mrb[0].mxu0
    %799 = vdwg.mxu0
    %v800 = vpack.c.bf16 %v747, %v747
    %v801 = vpack.c.bf16 %v795, %v795
    %802 = vrot.lane.b32.xlu0 %v404, 120
    %v803 = vpop.permute.xlu0 %802
    %804 = vrot.lane.b32.xlu0 %v404, 88
    %v805 = vpop.permute.xlu0 %804
    %v807 = vsel %vm582, %v803, 0
    %v810 = vsel %vm582, %v805, 0
    %812 = vmatprep.subr.bf16.mxu0 0
    %813 = vmatpush1.bf16.xpose.msra.mxu0 %v810
    %814 = vmatprep.subr.bf16.mxu0 0
    %815 = vmatpush1.bf16.xpose.msra.mxu0 0
    %816 = vmatprep.subr.bf16.mxu0 0
    %817 = vmatpush1.bf16.xpose.msra.mxu0 0
    %818 = vmatprep.subr.bf16.mxu0 0
    %819 = vmatpush1.bf16.xpose.msra.mxu0 0
    %820 = vmatprep.subr.bf16.mxu0 0
    %821 = vmatpush1.bf16.xpose.msra.mxu0 0
    %822 = vmatprep.subr.bf16.mxu0 0
    %823 = vmatpush1.bf16.xpose.msra.mxu0 0
    %824 = vmatprep.subr.bf16.mxu0 0
    %825 = vmatpush1.bf16.xpose.msra.mxu0 0
    %826 = vmatprep.subr.bf16.mxu0 0
    %827 = vmatpush1.bf16.xpose.msra.mxu0 0
    %828 = vmatprep.subr.bf16.mxu0 0
    %829 = vmatpush1.bf16.xpose.msra.mxu0 0
    %830 = vmatprep.subr.bf16.mxu0 0
    %831 = vmatpush1.bf16.xpose.msra.mxu0 0
    %832 = vmatprep.subr.bf16.mxu0 0
    %833 = vmatpush1.bf16.xpose.msra.mxu0 0
    %834 = vmatprep.subr.bf16.mxu0 0
    %835 = vmatpush1.bf16.xpose.msra.mxu0 0
    %836 = vmatprep.subr.bf16.mxu0 0
    %837 = vmatpush1.bf16.xpose.msra.mxu0 0
    %838 = vmatprep.subr.bf16.mxu0 0
    %839 = vmatpush1.bf16.xpose.msra.mxu0 0
    %840 = vmatprep.subr.bf16.mxu0 0
    %841 = vmatpush1.bf16.xpose.msra.mxu0 0
    %842 = vmatprep.subr.bf16.mxu0 0
    %843 = vmatpush1.bf16.xpose.msra.mxu0 0
    %844 = vmatprep.mubr.bf16.mxu0 0
    %845 = vmatmul.mubr.bf16.gmra.mrb[0].mxu0 %v807
    %v846 = vpop.f32.mrb[0].mxu0
    %v847 = vadd.f32 %v493, %v846
    %v848 = vpop.f32.mrb[0].mxu0
    %v849 = vpop.f32.mrb[0].mxu0
    %v850 = vpop.f32.mrb[0].mxu0
    %851 = vdwg.mxu0
    %852 = vrot.lane.b32.xlu0 %v405, 120
    %v853 = vpop.permute.xlu0 %852
    %854 = vrot.lane.b32.xlu0 %v405, 88
    %v855 = vpop.permute.xlu0 %854
    %v857 = vsel %vm582, %v853, 0
    %v860 = vsel %vm582, %v855, 0
    %862 = vmatprep.subr.bf16.mxu0 0
    %863 = vmatpush1.bf16.xpose.msra.mxu0 %v860
    %864 = vmatprep.subr.bf16.mxu0 0
    %865 = vmatpush1.bf16.xpose.msra.mxu0 0
    %866 = vmatprep.subr.bf16.mxu0 0
    %867 = vmatpush1.bf16.xpose.msra.mxu0 0
    %868 = vmatprep.subr.bf16.mxu0 0
    %869 = vmatpush1.bf16.xpose.msra.mxu0 0
    %870 = vmatprep.subr.bf16.mxu0 0
    %871 = vmatpush1.bf16.xpose.msra.mxu0 0
    %872 = vmatprep.subr.bf16.mxu0 0
    %873 = vmatpush1.bf16.xpose.msra.mxu0 0
    %874 = vmatprep.subr.bf16.mxu0 0
    %875 = vmatpush1.bf16.xpose.msra.mxu0 0
    %876 = vmatprep.subr.bf16.mxu0 0
    %877 = vmatpush1.bf16.xpose.msra.mxu0 0
    %878 = vmatprep.subr.bf16.mxu0 0
    %879 = vmatpush1.bf16.xpose.msra.mxu0 0
    %880 = vmatprep.subr.bf16.mxu0 0
    %881 = vmatpush1.bf16.xpose.msra.mxu0 0
    %882 = vmatprep.subr.bf16.mxu0 0
    %883 = vmatpush1.bf16.xpose.msra.mxu0 0
    %884 = vmatprep.subr.bf16.mxu0 0
    %885 = vmatpush1.bf16.xpose.msra.mxu0 0
    %886 = vmatprep.subr.bf16.mxu0 0
    %887 = vmatpush1.bf16.xpose.msra.mxu0 0
    %888 = vmatprep.subr.bf16.mxu0 0
    %889 = vmatpush1.bf16.xpose.msra.mxu0 0
    %890 = vmatprep.subr.bf16.mxu0 0
    %891 = vmatpush1.bf16.xpose.msra.mxu0 0
    %892 = vmatprep.subr.bf16.mxu0 0
    %893 = vmatpush1.bf16.xpose.msra.mxu0 0
    %894 = vmatprep.mubr.bf16.mxu0 0
    %895 = vmatmul.mubr.bf16.gmra.mrb[0].mxu0 %v857
    %v896 = vpop.f32.mrb[0].mxu0
    %v897 = vadd.f32 %v495, %v896
    %v898 = vpop.f32.mrb[0].mxu0
    %v899 = vpop.f32.mrb[0].mxu0
    %v900 = vpop.f32.mrb[0].mxu0
    %901 = vdwg.mxu0
    %v902 = vsel %vm582, %v847, -inf
    %903 = vmax.xlane.f32.xlu0 %v902
    %v904 = vpop.xlane.xlu0 %903
    %v905 = vsel %vm582, %v897, -inf
    %906 = vmax.xlane.f32.xlu0 %v905
    %v907 = vpop.xlane.xlu0 %906
    %v908 = vsub.f32 %v847, %v904
    %v909 = vsub.f32 %v897, %v907
    %v910 = vmul.f32 %v908, 1.442695
    %v911 = vpow.pop %v910
    %v912 = vmul.f32 %v909, 1.442695
    %v913 = vpow.pop %v912
    %v914 = vsel %vm582, %v911, 0.0
    %915 = vadd.xlane.f32.xlu0 %v914
    %v916 = vpop.xlane.xlu0 %915
    %v917 = vsel %vm582, %v913, 0.0
    %918 = vadd.xlane.f32.xlu0 %v917
    %v919 = vpop.xlane.xlu0 %918
    %v920 = vrcp.pop %v916
    %v921 = vmul.f32 %v911, %v920
    %v922 = vrcp.pop %v919
    %v923 = vmul.f32 %v913, %v922
    %s924 = scalar_lea.vmem [#allocation25], 16
    %925 = vst.msk [vmem:[%s924] sm:$0xff] %vm582, %v921
    %926 = vst.msk [vmem:[%s924 + $0x8] sm:$0xff] %vm582, %v923
    %v927 = vpack.c.bf16 %v921, %v921
    %v928 = vpack.c.bf16 %v923, %v923
    %929 = vrot.lane.b32.xlu0 %v404, 56
    %v930 = vpop.permute.xlu0 %929
    %v932 = vsel %vm582, %v927, 0
    %v935 = vsel %vm708, %v930, 0
    %937 = vmatprep.subr.bf16.mxu0 0
    %938 = vmatpush1.bf16.msra.mxu0 %v935
    %939 = vmatprep.subr.bf16.mxu0 0
    %940 = vmatpush1.bf16.msra.mxu0 0
    %941 = vmatprep.subr.bf16.mxu0 0
    %942 = vmatpush1.bf16.msra.mxu0 0
    %943 = vmatprep.subr.bf16.mxu0 0
    %944 = vmatpush1.bf16.msra.mxu0 0
    %945 = vmatprep.subr.bf16.mxu0 0
    %946 = vmatpush1.bf16.msra.mxu0 0
    %947 = vmatprep.subr.bf16.mxu0 0
    %948 = vmatpush1.bf16.msra.mxu0 0
    %949 = vmatprep.subr.bf16.mxu0 0
    %950 = vmatpush1.bf16.msra.mxu0 0
    %951 = vmatprep.subr.bf16.mxu0 0
    %952 = vmatpush1.bf16.msra.mxu0 0
    %953 = vmatprep.subr.bf16.mxu0 0
    %954 = vmatpush1.bf16.msra.mxu0 0
    %955 = vmatprep.subr.bf16.mxu0 0
    %956 = vmatpush1.bf16.msra.mxu0 0
    %957 = vmatprep.subr.bf16.mxu0 0
    %958 = vmatpush1.bf16.msra.mxu0 0
    %959 = vmatprep.subr.bf16.mxu0 0
    %960 = vmatpush1.bf16.msra.mxu0 0
    %961 = vmatprep.subr.bf16.mxu0 0
    %962 = vmatpush1.bf16.msra.mxu0 0
    %963 = vmatprep.subr.bf16.mxu0 0
    %964 = vmatpush1.bf16.msra.mxu0 0
    %965 = vmatprep.subr.bf16.mxu0 0
    %966 = vmatpush1.bf16.msra.mxu0 0
    %967 = vmatprep.subr.bf16.mxu0 0
    %968 = vmatpush1.bf16.msra.mxu0 0
    %969 = vmatprep.mubr.bf16.mxu0 0
    %970 = vmatmul.mubr.bf16.gmra.mrb[0].mxu0 %v932
    %v971 = vpop.f32.mrb[0].mxu0
    %v972 = vadd.f32 0.0, %v971
    %v973 = vpop.f32.mrb[0].mxu0
    %v974 = vpop.f32.mrb[0].mxu0
    %v975 = vpop.f32.mrb[0].mxu0
    %976 = vdwg.mxu0
    %977 = vrot.lane.b32.xlu0 %v405, 56
    %v978 = vpop.permute.xlu0 %977
    %v980 = vsel %vm582, %v928, 0
    %v983 = vsel %vm708, %v978, 0
    %985 = vmatprep.subr.bf16.mxu0 0
    %986 = vmatpush1.bf16.msra.mxu0 %v983
    %987 = vmatprep.subr.bf16.mxu0 0
    %988 = vmatpush1.bf16.msra.mxu0 0
    %989 = vmatprep.subr.bf16.mxu0 0
    %990 = vmatpush1.bf16.msra.mxu0 0
    %991 = vmatprep.subr.bf16.mxu0 0
    %992 = vmatpush1.bf16.msra.mxu0 0
    %993 = vmatprep.subr.bf16.mxu0 0
    %994 = vmatpush1.bf16.msra.mxu0 0
    %995 = vmatprep.subr.bf16.mxu0 0
    %996 = vmatpush1.bf16.msra.mxu0 0
    %997 = vmatprep.subr.bf16.mxu0 0
    %998 = vmatpush1.bf16.msra.mxu0 0
    %999 = vmatprep.subr.bf16.mxu0 0
    %1000 = vmatpush1.bf16.msra.mxu0 0
    %1001 = vmatprep.subr.bf16.mxu0 0
    %1002 = vmatpush1.bf16.msra.mxu0 0
    %1003 = vmatprep.subr.bf16.mxu0 0
    %1004 = vmatpush1.bf16.msra.mxu0 0
    %1005 = vmatprep.subr.bf16.mxu0 0
    %1006 = vmatpush1.bf16.msra.mxu0 0
    %1007 = vmatprep.subr.bf16.mxu0 0
    %1008 = vmatpush1.bf16.msra.mxu0 0
    %1009 = vmatprep.subr.bf16.mxu0 0
    %1010 = vmatpush1.bf16.msra.mxu0 0
    %1011 = vmatprep.subr.bf16.mxu0 0
    %1012 = vmatpush1.bf16.msra.mxu0 0
    %1013 = vmatprep.subr.bf16.mxu0 0
    %1014 = vmatpush1.bf16.msra.mxu0 0
    %1015 = vmatprep.subr.bf16.mxu0 0
    %1016 = vmatpush1.bf16.msra.mxu0 0
    %1017 = vmatprep.mubr.bf16.mxu0 0
    %1018 = vmatmul.mubr.bf16.gmra.mrb[0].mxu0 %v980
    %v1019 = vpop.f32.mrb[0].mxu0
    %v1020 = vadd.f32 0.0, %v1019
    %v1021 = vpop.f32.mrb[0].mxu0
    %v1022 = vpop.f32.mrb[0].mxu0
    %v1023 = vpop.f32.mrb[0].mxu0
    %1024 = vdwg.mxu0
    %v1025 = vpack.c.bf16 %v972, %v972
    %v1026 = vpack.c.bf16 %v1020, %v1020
    %v1029 = vunpack.c.l.b16 %v1025
    %v1030 = vunpack.c.l.b16 %v1026
    %v1031 = vpack.c.b16 %v1030, %v1029
    %v1033 = vsel %vm582, %v1031, 0
    %v1036 = vsel %vm708, %v577, 0
    %1038 = vmatprep.subr.bf16.mxu0 0
    %1039 = vmatpush1.bf16.msra.mxu0 %v1036
    %1040 = vmatprep.subr.bf16.mxu0 0
    %1041 = vmatpush1.bf16.msra.mxu0 0
    %1042 = vmatprep.subr.bf16.mxu0 0
    %1043 = vmatpush1.bf16.msra.mxu0 0
    %1044 = vmatprep.subr.bf16.mxu0 0
    %1045 = vmatpush1.bf16.msra.mxu0 0
    %1046 = vmatprep.subr.bf16.mxu0 0
    %1047 = vmatpush1.bf16.msra.mxu0 0
    %1048 = vmatprep.subr.bf16.mxu0 0
    %1049 = vmatpush1.bf16.msra.mxu0 0
    %1050 = vmatprep.subr.bf16.mxu0 0
    %1051 = vmatpush1.bf16.msra.mxu0 0
    %1052 = vmatprep.subr.bf16.mxu0 0
    %1053 = vmatpush1.bf16.msra.mxu0 0
    %1054 = vmatprep.subr.bf16.mxu0 0
    %1055 = vmatpush1.bf16.msra.mxu0 0
    %1056 = vmatprep.subr.bf16.mxu0 0
    %1057 = vmatpush1.bf16.msra.mxu0 0
    %1058 = vmatprep.subr.bf16.mxu0 0
    %1059 = vmatpush1.bf16.msra.mxu0 0
    %1060 = vmatprep.subr.bf16.mxu0 0
    %1061 = vmatpush1.bf16.msra.mxu0 0
    %1062 = vmatprep.subr.bf16.mxu0 0
    %1063 = vmatpush1.bf16.msra.mxu0 0
    %1064 = vmatprep.subr.bf16.mxu0 0
    %1065 = vmatpush1.bf16.msra.mxu0 0
    %1066 = vmatprep.subr.bf16.mxu0 0
    %1067 = vmatpush1.bf16.msra.mxu0 0
    %1068 = vmatprep.subr.bf16.mxu0 0
    %1069 = vmatpush1.bf16.msra.mxu0 0
    %1070 = vmatprep.mubr.bf16.mxu0 0
    %1071 = vmatmul.mubr.bf16.gmra.mrb[0].mxu0 %v1033
    %v1072 = vpop.f32.mrb[0].mxu0
    %v1073 = vadd.f32 0.0, %v1072
    %v1074 = vpop.f32.mrb[0].mxu0
    %v1075 = vpop.f32.mrb[0].mxu0
    %v1076 = vadd.f32 0.0, %v1075
    %v1077 = vpop.f32.mrb[0].mxu0
    %1078 = vdwg.mxu0
    %v1081 = vunpack.c.l.b16 %v800
    %v1082 = vunpack.c.l.b16 %v801
    %v1083 = vpack.c.b16 %v1082, %v1081
    %v1085 = vsel %vm582, %v1083, 0
    %v1088 = vsel %vm708, %v576, 0
    %1090 = vmatprep.subr.bf16.mxu0 0
    %1091 = vmatpush1.bf16.msra.mxu0 %v1088
    %1092 = vmatprep.subr.bf16.mxu0 0
    %1093 = vmatpush1.bf16.msra.mxu0 0
    %1094 = vmatprep.subr.bf16.mxu0 0
    %1095 = vmatpush1.bf16.msra.mxu0 0
    %1096 = vmatprep.subr.bf16.mxu0 0
    %1097 = vmatpush1.bf16.msra.mxu0 0
    %1098 = vmatprep.subr.bf16.mxu0 0
    %1099 = vmatpush1.bf16.msra.mxu0 0
    %1100 = vmatprep.subr.bf16.mxu0 0
    %1101 = vmatpush1.bf16.msra.mxu0 0
    %1102 = vmatprep.subr.bf16.mxu0 0
    %1103 = vmatpush1.bf16.msra.mxu0 0
    %1104 = vmatprep.subr.bf16.mxu0 0
    %1105 = vmatpush1.bf16.msra.mxu0 0
    %1106 = vmatprep.subr.bf16.mxu0 0
    %1107 = vmatpush1.bf16.msra.mxu0 0
    %1108 = vmatprep.subr.bf16.mxu0 0
    %1109 = vmatpush1.bf16.msra.mxu0 0
    %1110 = vmatprep.subr.bf16.mxu0 0
    %1111 = vmatpush1.bf16.msra.mxu0 0
    %1112 = vmatprep.subr.bf16.mxu0 0
    %1113 = vmatpush1.bf16.msra.mxu0 0
    %1114 = vmatprep.subr.bf16.mxu0 0
    %1115 = vmatpush1.bf16.msra.mxu0 0
    %1116 = vmatprep.subr.bf16.mxu0 0
    %1117 = vmatpush1.bf16.msra.mxu0 0
    %1118 = vmatprep.subr.bf16.mxu0 0
    %1119 = vmatpush1.bf16.msra.mxu0 0
    %1120 = vmatprep.subr.bf16.mxu0 0
    %1121 = vmatpush1.bf16.msra.mxu0 0
    %1122 = vmatprep.mubr.bf16.mxu0 0
    %1123 = vmatmul.mubr.bf16.gmra.mrb[0].mxu0 %v1085
    %v1124 = vpop.f32.mrb[0].mxu0
    %v1125 = vadd.f32 %v1073, %v1124
    %v1126 = vpop.f32.mrb[0].mxu0
    %v1127 = vpop.f32.mrb[0].mxu0
    %v1128 = vadd.f32 %v1076, %v1127
    %v1129 = vpop.f32.mrb[0].mxu0
    %1130 = vdwg.mxu0
    %1131 = vrot.lane.b32.xlu0 %v404, 112
    %v1132 = vpop.permute.xlu0 %1131
    %1133 = vrot.lane.b32.xlu0 %v404, 80
    %v1134 = vpop.permute.xlu0 %1133
    %v1136 = vsel %vm582, %v1132, 0
    %v1139 = vsel %vm582, %v1134, 0
    %1141 = vmatprep.subr.bf16.mxu0 0
    %1142 = vmatpush1.bf16.xpose.msra.mxu0 %v1139
    %1143 = vmatprep.subr.bf16.mxu0 0
    %1144 = vmatpush1.bf16.xpose.msra.mxu0 0
    %1145 = vmatprep.subr.bf16.mxu0 0
    %1146 = vmatpush1.bf16.xpose.msra.mxu0 0
    %1147 = vmatprep.subr.bf16.mxu0 0
    %1148 = vmatpush1.bf16.xpose.msra.mxu0 0
    %1149 = vmatprep.subr.bf16.mxu0 0
    %1150 = vmatpush1.bf16.xpose.msra.mxu0 0
    %1151 = vmatprep.subr.bf16.mxu0 0
    %1152 = vmatpush1.bf16.xpose.msra.mxu0 0
    %1153 = vmatprep.subr.bf16.mxu0 0
    %1154 = vmatpush1.bf16.xpose.msra.mxu0 0
    %1155 = vmatprep.subr.bf16.mxu0 0
    %1156 = vmatpush1.bf16.xpose.msra.mxu0 0
    %1157 = vmatprep.subr.bf16.mxu0 0
    %1158 = vmatpush1.bf16.xpose.msra.mxu0 0
    %1159 = vmatprep.subr.bf16.mxu0 0
    %1160 = vmatpush1.bf16.xpose.msra.mxu0 0
    %1161 = vmatprep.subr.bf16.mxu0 0
    %1162 = vmatpush1.bf16.xpose.msra.mxu0 0
    %1163 = vmatprep.subr.bf16.mxu0 0
    %1164 = vmatpush1.bf16.xpose.msra.mxu0 0
    %1165 = vmatprep.subr.bf16.mxu0 0
    %1166 = vmatpush1.bf16.xpose.msra.mxu0 0
    %1167 = vmatprep.subr.bf16.mxu0 0
    %1168 = vmatpush1.bf16.xpose.msra.mxu0 0
    %1169 = vmatprep.subr.bf16.mxu0 0
    %1170 = vmatpush1.bf16.xpose.msra.mxu0 0
    %1171 = vmatprep.subr.bf16.mxu0 0
    %1172 = vmatpush1.bf16.xpose.msra.mxu0 0
    %1173 = vmatprep.mubr.bf16.mxu0 0
    %1174 = vmatmul.mubr.bf16.gmra.mrb[0].mxu0 %v1136
    %v1175 = vpop.f32.mrb[0].mxu0
    %v1176 = vadd.f32 %v533, %v1175
    %v1177 = vpop.f32.mrb[0].mxu0
    %v1178 = vpop.f32.mrb[0].mxu0
    %v1179 = vpop.f32.mrb[0].mxu0
    %1180 = vdwg.mxu0
    %1181 = vrot.lane.b32.xlu0 %v405, 112
    %v1182 = vpop.permute.xlu0 %1181
    %1183 = vrot.lane.b32.xlu0 %v405, 80
    %v1184 = vpop.permute.xlu0 %1183
    %v1186 = vsel %vm582, %v1182, 0
    %v1189 = vsel %vm582, %v1184, 0
    %1191 = vmatprep.subr.bf16.mxu0 0
    %1192 = vmatpush1.bf16.xpose.msra.mxu0 %v1189
    %1193 = vmatprep.subr.bf16.mxu0 0
    %1194 = vmatpush1.bf16.xpose.msra.mxu0 0
    %1195 = vmatprep.subr.bf16.mxu0 0
    %1196 = vmatpush1.bf16.xpose.msra.mxu0 0
    %1197 = vmatprep.subr.bf16.mxu0 0
    %1198 = vmatpush1.bf16.xpose.msra.mxu0 0
    %1199 = vmatprep.subr.bf16.mxu0 0
    %1200 = vmatpush1.bf16.xpose.msra.mxu0 0
    %1201 = vmatprep.subr.bf16.mxu0 0
    %1202 = vmatpush1.bf16.xpose.msra.mxu0 0
    %1203 = vmatprep.subr.bf16.mxu0 0
    %1204 = vmatpush1.bf16.xpose.msra.mxu0 0
    %1205 = vmatprep.subr.bf16.mxu0 0
    %1206 = vmatpush1.bf16.xpose.msra.mxu0 0
    %1207 = vmatprep.subr.bf16.mxu0 0
    %1208 = vmatpush1.bf16.xpose.msra.mxu0 0
    %1209 = vmatprep.subr.bf16.mxu0 0
    %1210 = vmatpush1.bf16.xpose.msra.mxu0 0
    %1211 = vmatprep.subr.bf16.mxu0 0
    %1212 = vmatpush1.bf16.xpose.msra.mxu0 0
    %1213 = vmatprep.subr.bf16.mxu0 0
    %1214 = vmatpush1.bf16.xpose.msra.mxu0 0
    %1215 = vmatprep.subr.bf16.mxu0 0
    %1216 = vmatpush1.bf16.xpose.msra.mxu0 0
    %1217 = vmatprep.subr.bf16.mxu0 0
    %1218 = vmatpush1.bf16.xpose.msra.mxu0 0
    %1219 = vmatprep.subr.bf16.mxu0 0
    %1220 = vmatpush1.bf16.xpose.msra.mxu0 0
    %1221 = vmatprep.subr.bf16.mxu0 0
    %1222 = vmatpush1.bf16.xpose.msra.mxu0 0
    %1223 = vmatprep.mubr.bf16.mxu0 0
    %1224 = vmatmul.mubr.bf16.gmra.mrb[0].mxu0 %v1186
    %v1225 = vpop.f32.mrb[0].mxu0
    %v1226 = vadd.f32 %v535, %v1225
    %v1227 = vpop.f32.mrb[0].mxu0
    %v1228 = vpop.f32.mrb[0].mxu0
    %v1229 = vpop.f32.mrb[0].mxu0
    %1230 = vdwg.mxu0
    %v1231 = vsel %vm582, %v1176, -inf
    %1232 = vmax.xlane.f32.xlu0 %v1231
    %v1233 = vpop.xlane.xlu0 %1232
    %v1234 = vsel %vm582, %v1226, -inf
    %1235 = vmax.xlane.f32.xlu0 %v1234
    %v1236 = vpop.xlane.xlu0 %1235
    %v1237 = vsub.f32 %v1176, %v1233
    %v1238 = vsub.f32 %v1226, %v1236
    %v1239 = vmul.f32 %v1237, 1.442695
    %v1240 = vpow.pop %v1239
    %v1241 = vmul.f32 %v1238, 1.442695
    %v1242 = vpow.pop %v1241
    %v1243 = vsel %vm582, %v1240, 0.0
    %1244 = vadd.xlane.f32.xlu0 %v1243
    %v1245 = vpop.xlane.xlu0 %1244
    %v1246 = vsel %vm582, %v1242, 0.0
    %1247 = vadd.xlane.f32.xlu0 %v1246
    %v1248 = vpop.xlane.xlu0 %1247
    %v1249 = vrcp.pop %v1245
    %v1250 = vmul.f32 %v1240, %v1249
    %v1251 = vrcp.pop %v1248
    %v1252 = vmul.f32 %v1242, %v1251
    %s1253 = scalar_lea.vmem [#allocation25], 32
    %1254 = vst.msk [vmem:[%s1253] sm:$0xff] %vm582, %v1250
    %1255 = vst.msk [vmem:[%s1253 + $0x8] sm:$0xff] %vm582, %v1252
    %v1256 = vpack.c.bf16 %v1250, %v1250
    %v1257 = vpack.c.bf16 %v1252, %v1252
    %1258 = vrot.lane.b32.xlu0 %v404, 48
    %v1259 = vpop.permute.xlu0 %1258
    %v1261 = vsel %vm582, %v1256, 0
    %v1264 = vsel %vm708, %v1259, 0
    %1266 = vmatprep.subr.bf16.mxu0 0
    %1267 = vmatpush1.bf16.msra.mxu0 %v1264
    %1268 = vmatprep.subr.bf16.mxu0 0
    %1269 = vmatpush1.bf16.msra.mxu0 0
    %1270 = vmatprep.subr.bf16.mxu0 0
    %1271 = vmatpush1.bf16.msra.mxu0 0
    %1272 = vmatprep.subr.bf16.mxu0 0
    %1273 = vmatpush1.bf16.msra.mxu0 0
    %1274 = vmatprep.subr.bf16.mxu0 0
    %1275 = vmatpush1.bf16.msra.mxu0 0
    %1276 = vmatprep.subr.bf16.mxu0 0
    %1277 = vmatpush1.bf16.msra.mxu0 0
    %1278 = vmatprep.subr.bf16.mxu0 0
    %1279 = vmatpush1.bf16.msra.mxu0 0
    %1280 = vmatprep.subr.bf16.mxu0 0
    %1281 = vmatpush1.bf16.msra.mxu0 0
    %1282 = vmatprep.subr.bf16.mxu0 0
    %1283 = vmatpush1.bf16.msra.mxu0 0
    %1284 = vmatprep.subr.bf16.mxu0 0
    %1285 = vmatpush1.bf16.msra.mxu0 0
    %1286 = vmatprep.subr.bf16.mxu0 0
    %1287 = vmatpush1.bf16.msra.mxu0 0
    %1288 = vmatprep.subr.bf16.mxu0 0
    %1289 = vmatpush1.bf16.msra.mxu0 0
    %1290 = vmatprep.subr.bf16.mxu0 0
    %1291 = vmatpush1.bf16.msra.mxu0 0
    %1292 = vmatprep.subr.bf16.mxu0 0
    %1293 = vmatpush1.bf16.msra.mxu0 0
    %1294 = vmatprep.subr.bf16.mxu0 0
    %1295 = vmatpush1.bf16.msra.mxu0 0
    %1296 = vmatprep.subr.bf16.mxu0 0
    %1297 = vmatpush1.bf16.msra.mxu0 0
    %1298 = vmatprep.mubr.bf16.mxu0 0
    %1299 = vmatmul.mubr.bf16.gmra.mrb[0].mxu0 %v1261
    %v1300 = vpop.f32.mrb[0].mxu0
    %v1301 = vadd.f32 0.0, %v1300
    %v1302 = vpop.f32.mrb[0].mxu0
    %v1303 = vpop.f32.mrb[0].mxu0
    %v1304 = vpop.f32.mrb[0].mxu0
    %1305 = vdwg.mxu0
    %1306 = vrot.lane.b32.xlu0 %v405, 48
    %v1307 = vpop.permute.xlu0 %1306
    %v1309 = vsel %vm582, %v1257, 0
    %v1312 = vsel %vm708, %v1307, 0
    %1314 = vmatprep.subr.bf16.mxu0 0
    %1315 = vmatpush1.bf16.msra.mxu0 %v1312
    %1316 = vmatprep.subr.bf16.mxu0 0
    %1317 = vmatpush1.bf16.msra.mxu0 0
    %1318 = vmatprep.subr.bf16.mxu0 0
    %1319 = vmatpush1.bf16.msra.mxu0 0
    %1320 = vmatprep.subr.bf16.mxu0 0
    %1321 = vmatpush1.bf16.msra.mxu0 0
    %1322 = vmatprep.subr.bf16.mxu0 0
    %1323 = vmatpush1.bf16.msra.mxu0 0
    %1324 = vmatprep.subr.bf16.mxu0 0
    %1325 = vmatpush1.bf16.msra.mxu0 0
    %1326 = vmatprep.subr.bf16.mxu0 0
    %1327 = vmatpush1.bf16.msra.mxu0 0
    %1328 = vmatprep.subr.bf16.mxu0 0
    %1329 = vmatpush1.bf16.msra.mxu0 0
    %1330 = vmatprep.subr.bf16.mxu0 0
    %1331 = vmatpush1.bf16.msra.mxu0 0
    %1332 = vmatprep.subr.bf16.mxu0 0
    %1333 = vmatpush1.bf16.msra.mxu0 0
    %1334 = vmatprep.subr.bf16.mxu0 0
    %1335 = vmatpush1.bf16.msra.mxu0 0
    %1336 = vmatprep.subr.bf16.mxu0 0
    %1337 = vmatpush1.bf16.msra.mxu0 0
    %1338 = vmatprep.subr.bf16.mxu0 0
    %1339 = vmatpush1.bf16.msra.mxu0 0
    %1340 = vmatprep.subr.bf16.mxu0 0
    %1341 = vmatpush1.bf16.msra.mxu0 0
    %1342 = vmatprep.subr.bf16.mxu0 0
    %1343 = vmatpush1.bf16.msra.mxu0 0
    %1344 = vmatprep.subr.bf16.mxu0 0
    %1345 = vmatpush1.bf16.msra.mxu0 0
    %1346 = vmatprep.mubr.bf16.mxu0 0
    %1347 = vmatmul.mubr.bf16.gmra.mrb[0].mxu0 %v1309
    %v1348 = vpop.f32.mrb[0].mxu0
    %v1349 = vadd.f32 0.0, %v1348
    %v1350 = vpop.f32.mrb[0].mxu0
    %v1351 = vpop.f32.mrb[0].mxu0
    %v1352 = vpop.f32.mrb[0].mxu0
    %1353 = vdwg.mxu0
    %v1354 = vpack.c.bf16 %v1301, %v1301
    %v1355 = vpack.c.bf16 %v1349, %v1349
    %v1358 = vunpack.c.l.b16 %v1354
    %v1359 = vunpack.c.l.b16 %v1355
    %v1360 = vpack.c.b16 %v1359, %v1358
    %v1362 = vsel %vm582, %v1360, 0
    %v1365 = vsel %vm708, %v578, 0
    %1367 = vmatprep.subr.bf16.mxu0 0
    %1368 = vmatpush1.bf16.msra.mxu0 %v1365
    %1369 = vmatprep.subr.bf16.mxu0 0
    %1370 = vmatpush1.bf16.msra.mxu0 0
    %1371 = vmatprep.subr.bf16.mxu0 0
    %1372 = vmatpush1.bf16.msra.mxu0 0
    %1373 = vmatprep.subr.bf16.mxu0 0
    %1374 = vmatpush1.bf16.msra.mxu0 0
    %1375 = vmatprep.subr.bf16.mxu0 0
    %1376 = vmatpush1.bf16.msra.mxu0 0
    %1377 = vmatprep.subr.bf16.mxu0 0
    %1378 = vmatpush1.bf16.msra.mxu0 0
    %1379 = vmatprep.subr.bf16.mxu0 0
    %1380 = vmatpush1.bf16.msra.mxu0 0
    %1381 = vmatprep.subr.bf16.mxu0 0
    %1382 = vmatpush1.bf16.msra.mxu0 0
    %1383 = vmatprep.subr.bf16.mxu0 0
    %1384 = vmatpush1.bf16.msra.mxu0 0
    %1385 = vmatprep.subr.bf16.mxu0 0
    %1386 = vmatpush1.bf16.msra.mxu0 0
    %1387 = vmatprep.subr.bf16.mxu0 0
    %1388 = vmatpush1.bf16.msra.mxu0 0
    %1389 = vmatprep.subr.bf16.mxu0 0
    %1390 = vmatpush1.bf16.msra.mxu0 0
    %1391 = vmatprep.subr.bf16.mxu0 0
    %1392 = vmatpush1.bf16.msra.mxu0 0
    %1393 = vmatprep.subr.bf16.mxu0 0
    %1394 = vmatpush1.bf16.msra.mxu0 0
    %1395 = vmatprep.subr.bf16.mxu0 0
    %1396 = vmatpush1.bf16.msra.mxu0 0
    %1397 = vmatprep.subr.bf16.mxu0 0
    %1398 = vmatpush1.bf16.msra.mxu0 0
    %1399 = vmatprep.mubr.bf16.mxu0 0
    %1400 = vmatmul.mubr.bf16.gmra.mrb[0].mxu0 %v1362
    %v1401 = vpop.f32.mrb[0].mxu0
    %v1402 = vadd.f32 0.0, %v1401
    %v1403 = vpop.f32.mrb[0].mxu0
    %v1404 = vpop.f32.mrb[0].mxu0
    %v1405 = vadd.f32 0.0, %v1404
    %v1406 = vpop.f32.mrb[0].mxu0
    %1407 = vdwg.mxu0
    %v1408 = vadd.f32 %v1125, %v1402
    %v1409 = vadd.f32 %v1128, %v1405
    %1410 = vrot.lane.b32.xlu0 %v404, 104
    %v1411 = vpop.permute.xlu0 %1410
    %1412 = vrot.lane.b32.xlu0 %v404, 72
    %v1413 = vpop.permute.xlu0 %1412
    %v1415 = vsel %vm582, %v1411, 0
    %v1418 = vsel %vm582, %v1413, 0
    %1420 = vmatprep.subr.bf16.mxu0 0
    %1421 = vmatpush1.bf16.xpose.msra.mxu0 %v1418
    %1422 = vmatprep.subr.bf16.mxu0 0
    %1423 = vmatpush1.bf16.xpose.msra.mxu0 0
    %1424 = vmatprep.subr.bf16.mxu0 0
    %1425 = vmatpush1.bf16.xpose.msra.mxu0 0
    %1426 = vmatprep.subr.bf16.mxu0 0
    %1427 = vmatpush1.bf16.xpose.msra.mxu0 0
    %1428 = vmatprep.subr.bf16.mxu0 0
    %1429 = vmatpush1.bf16.xpose.msra.mxu0 0
    %1430 = vmatprep.subr.bf16.mxu0 0
    %1431 = vmatpush1.bf16.xpose.msra.mxu0 0
    %1432 = vmatprep.subr.bf16.mxu0 0
    %1433 = vmatpush1.bf16.xpose.msra.mxu0 0
    %1434 = vmatprep.subr.bf16.mxu0 0
    %1435 = vmatpush1.bf16.xpose.msra.mxu0 0
    %1436 = vmatprep.subr.bf16.mxu0 0
    %1437 = vmatpush1.bf16.xpose.msra.mxu0 0
    %1438 = vmatprep.subr.bf16.mxu0 0
    %1439 = vmatpush1.bf16.xpose.msra.mxu0 0
    %1440 = vmatprep.subr.bf16.mxu0 0
    %1441 = vmatpush1.bf16.xpose.msra.mxu0 0
    %1442 = vmatprep.subr.bf16.mxu0 0
    %1443 = vmatpush1.bf16.xpose.msra.mxu0 0
    %1444 = vmatprep.subr.bf16.mxu0 0
    %1445 = vmatpush1.bf16.xpose.msra.mxu0 0
    %1446 = vmatprep.subr.bf16.mxu0 0
    %1447 = vmatpush1.bf16.xpose.msra.mxu0 0
    %1448 = vmatprep.subr.bf16.mxu0 0
    %1449 = vmatpush1.bf16.xpose.msra.mxu0 0
    %1450 = vmatprep.subr.bf16.mxu0 0
    %1451 = vmatpush1.bf16.xpose.msra.mxu0 0
    %1452 = vmatprep.mubr.bf16.mxu0 0
    %1453 = vmatmul.mubr.bf16.gmra.mrb[0].mxu0 %v1415
    %v1454 = vpop.f32.mrb[0].mxu0
    %v1455 = vadd.f32 %v573, %v1454
    %v1456 = vpop.f32.mrb[0].mxu0
    %v1457 = vpop.f32.mrb[0].mxu0
    %v1458 = vpop.f32.mrb[0].mxu0
    %1459 = vdwg.mxu0
    %1460 = vrot.lane.b32.xlu0 %v405, 104
    %v1461 = vpop.permute.xlu0 %1460
    %1462 = vrot.lane.b32.xlu0 %v405, 72
    %v1463 = vpop.permute.xlu0 %1462
    %v1465 = vsel %vm582, %v1461, 0
    %v1468 = vsel %vm582, %v1463, 0
    %1470 = vmatprep.subr.bf16.mxu0 0
    %1471 = vmatpush1.bf16.xpose.msra.mxu0 %v1468
    %1472 = vmatprep.subr.bf16.mxu0 0
    %1473 = vmatpush1.bf16.xpose.msra.mxu0 0
    %1474 = vmatprep.subr.bf16.mxu0 0
    %1475 = vmatpush1.bf16.xpose.msra.mxu0 0
    %1476 = vmatprep.subr.bf16.mxu0 0
    %1477 = vmatpush1.bf16.xpose.msra.mxu0 0
    %1478 = vmatprep.subr.bf16.mxu0 0
    %1479 = vmatpush1.bf16.xpose.msra.mxu0 0
    %1480 = vmatprep.subr.bf16.mxu0 0
    %1481 = vmatpush1.bf16.xpose.msra.mxu0 0
    %1482 = vmatprep.subr.bf16.mxu0 0
    %1483 = vmatpush1.bf16.xpose.msra.mxu0 0
    %1484 = vmatprep.subr.bf16.mxu0 0
    %1485 = vmatpush1.bf16.xpose.msra.mxu0 0
    %1486 = vmatprep.subr.bf16.mxu0 0
    %1487 = vmatpush1.bf16.xpose.msra.mxu0 0
    %1488 = vmatprep.subr.bf16.mxu0 0
    %1489 = vmatpush1.bf16.xpose.msra.mxu0 0
    %1490 = vmatprep.subr.bf16.mxu0 0
    %1491 = vmatpush1.bf16.xpose.msra.mxu0 0
    %1492 = vmatprep.subr.bf16.mxu0 0
    %1493 = vmatpush1.bf16.xpose.msra.mxu0 0
    %1494 = vmatprep.subr.bf16.mxu0 0
    %1495 = vmatpush1.bf16.xpose.msra.mxu0 0
    %1496 = vmatprep.subr.bf16.mxu0 0
    %1497 = vmatpush1.bf16.xpose.msra.mxu0 0
    %1498 = vmatprep.subr.bf16.mxu0 0
    %1499 = vmatpush1.bf16.xpose.msra.mxu0 0
    %1500 = vmatprep.subr.bf16.mxu0 0
    %1501 = vmatpush1.bf16.xpose.msra.mxu0 0
    %1502 = vmatprep.mubr.bf16.mxu0 0
    %1503 = vmatmul.mubr.bf16.gmra.mrb[0].mxu0 %v1465
    %v1504 = vpop.f32.mrb[0].mxu0
    %v1505 = vadd.f32 %v575, %v1504
    %v1506 = vpop.f32.mrb[0].mxu0
    %v1507 = vpop.f32.mrb[0].mxu0
    %v1508 = vpop.f32.mrb[0].mxu0
    %1509 = vdwg.mxu0
    %v1510 = vsel %vm582, %v1455, -inf
    %1511 = vmax.xlane.f32.xlu0 %v1510
    %v1512 = vpop.xlane.xlu0 %1511
    %v1513 = vsel %vm582, %v1505, -inf
    %1514 = vmax.xlane.f32.xlu0 %v1513
    %v1515 = vpop.xlane.xlu0 %1514
    %v1516 = vsub.f32 %v1455, %v1512
    %v1517 = vsub.f32 %v1505, %v1515
    %v1518 = vmul.f32 %v1516, 1.442695
    %v1519 = vpow.pop %v1518
    %v1520 = vmul.f32 %v1517, 1.442695
    %v1521 = vpow.pop %v1520
    %v1522 = vsel %vm582, %v1519, 0.0
    %1523 = vadd.xlane.f32.xlu0 %v1522
    %v1524 = vpop.xlane.xlu0 %1523
    %v1525 = vsel %vm582, %v1521, 0.0
    %1526 = vadd.xlane.f32.xlu0 %v1525
    %v1527 = vpop.xlane.xlu0 %1526
    %v1528 = vrcp.pop %v1524
    %v1529 = vmul.f32 %v1519, %v1528
    %v1530 = vrcp.pop %v1527
    %v1531 = vmul.f32 %v1521, %v1530
    %s1532 = scalar_lea.vmem [#allocation25], 48
    %1533 = vst.msk [vmem:[%s1532] sm:$0xff] %vm582, %v1529
    %1534 = vst.msk [vmem:[%s1532 + $0x8] sm:$0xff] %vm582, %v1531
    %v1535 = vpack.c.bf16 %v1529, %v1529
    %v1536 = vpack.c.bf16 %v1531, %v1531
    %1537 = vrot.lane.b32.xlu0 %v404, 40
    %v1538 = vpop.permute.xlu0 %1537
    %v1540 = vsel %vm582, %v1535, 0
    %v1543 = vsel %vm708, %v1538, 0
    %1545 = vmatprep.subr.bf16.mxu0 0
    %1546 = vmatpush1.bf16.msra.mxu0 %v1543
    %1547 = vmatprep.subr.bf16.mxu0 0
    %1548 = vmatpush1.bf16.msra.mxu0 0
    %1549 = vmatprep.subr.bf16.mxu0 0
    %1550 = vmatpush1.bf16.msra.mxu0 0
    %1551 = vmatprep.subr.bf16.mxu0 0
    %1552 = vmatpush1.bf16.msra.mxu0 0
    %1553 = vmatprep.subr.bf16.mxu0 0
    %1554 = vmatpush1.bf16.msra.mxu0 0
    %1555 = vmatprep.subr.bf16.mxu0 0
    %1556 = vmatpush1.bf16.msra.mxu0 0
    %1557 = vmatprep.subr.bf16.mxu0 0
    %1558 = vmatpush1.bf16.msra.mxu0 0
    %1559 = vmatprep.subr.bf16.mxu0 0
    %1560 = vmatpush1.bf16.msra.mxu0 0
    %1561 = vmatprep.subr.bf16.mxu0 0
    %1562 = vmatpush1.bf16.msra.mxu0 0
    %1563 = vmatprep.subr.bf16.mxu0 0
    %1564 = vmatpush1.bf16.msra.mxu0 0
    %1565 = vmatprep.subr.bf16.mxu0 0
    %1566 = vmatpush1.bf16.msra.mxu0 0
    %1567 = vmatprep.subr.bf16.mxu0 0
    %1568 = vmatpush1.bf16.msra.mxu0 0
    %1569 = vmatprep.subr.bf16.mxu0 0
    %1570 = vmatpush1.bf16.msra.mxu0 0
    %1571 = vmatprep.subr.bf16.mxu0 0
    %1572 = vmatpush1.bf16.msra.mxu0 0
    %1573 = vmatprep.subr.bf16.mxu0 0
    %1574 = vmatpush1.bf16.msra.mxu0 0
    %1575 = vmatprep.subr.bf16.mxu0 0
    %1576 = vmatpush1.bf16.msra.mxu0 0
    %1577 = vmatprep.mubr.bf16.mxu0 0
    %1578 = vmatmul.mubr.bf16.gmra.mrb[0].mxu0 %v1540
    %v1579 = vpop.f32.mrb[0].mxu0
    %v1580 = vadd.f32 0.0, %v1579
    %v1581 = vpop.f32.mrb[0].mxu0
    %v1582 = vpop.f32.mrb[0].mxu0
    %v1583 = vpop.f32.mrb[0].mxu0
    %1584 = vdwg.mxu0
    %1585 = vrot.lane.b32.xlu0 %v405, 40
    %v1586 = vpop.permute.xlu0 %1585
    %v1588 = vsel %vm582, %v1536, 0
    %v1591 = vsel %vm708, %v1586, 0
    %1593 = vmatprep.subr.bf16.mxu0 0
    %1594 = vmatpush1.bf16.msra.mxu0 %v1591
    %1595 = vmatprep.subr.bf16.mxu0 0
    %1596 = vmatpush1.bf16.msra.mxu0 0
    %1597 = vmatprep.subr.bf16.mxu0 0
    %1598 = vmatpush1.bf16.msra.mxu0 0
    %1599 = vmatprep.subr.bf16.mxu0 0
    %1600 = vmatpush1.bf16.msra.mxu0 0
    %1601 = vmatprep.subr.bf16.mxu0 0
    %1602 = vmatpush1.bf16.msra.mxu0 0
    %1603 = vmatprep.subr.bf16.mxu0 0
    %1604 = vmatpush1.bf16.msra.mxu0 0
    %1605 = vmatprep.subr.bf16.mxu0 0
    %1606 = vmatpush1.bf16.msra.mxu0 0
    %1607 = vmatprep.subr.bf16.mxu0 0
    %1608 = vmatpush1.bf16.msra.mxu0 0
    %1609 = vmatprep.subr.bf16.mxu0 0
    %1610 = vmatpush1.bf16.msra.mxu0 0
    %1611 = vmatprep.subr.bf16.mxu0 0
    %1612 = vmatpush1.bf16.msra.mxu0 0
    %1613 = vmatprep.subr.bf16.mxu0 0
    %1614 = vmatpush1.bf16.msra.mxu0 0
    %1615 = vmatprep.subr.bf16.mxu0 0
    %1616 = vmatpush1.bf16.msra.mxu0 0
    %1617 = vmatprep.subr.bf16.mxu0 0
    %1618 = vmatpush1.bf16.msra.mxu0 0
    %1619 = vmatprep.subr.bf16.mxu0 0
    %1620 = vmatpush1.bf16.msra.mxu0 0
    %1621 = vmatprep.subr.bf16.mxu0 0
    %1622 = vmatpush1.bf16.msra.mxu0 0
    %1623 = vmatprep.subr.bf16.mxu0 0
    %1624 = vmatpush1.bf16.msra.mxu0 0
    %1625 = vmatprep.mubr.bf16.mxu0 0
    %1626 = vmatmul.mubr.bf16.gmra.mrb[0].mxu0 %v1588
    %v1627 = vpop.f32.mrb[0].mxu0
    %v1628 = vadd.f32 0.0, %v1627
    %v1629 = vpop.f32.mrb[0].mxu0
    %v1630 = vpop.f32.mrb[0].mxu0
    %v1631 = vpop.f32.mrb[0].mxu0
    %1632 = vdwg.mxu0
    %v1633 = vpack.c.bf16 %v1580, %v1580
    %v1634 = vpack.c.bf16 %v1628, %v1628
    %v1637 = vunpack.c.l.b16 %v1633
    %v1638 = vunpack.c.l.b16 %v1634
    %v1639 = vpack.c.b16 %v1638, %v1637
    %v1641 = vsel %vm582, %v1639, 0
    %v1644 = vsel %vm708, %v579, 0
    %1646 = vmatprep.subr.bf16.mxu0 0
    %1647 = vmatpush1.bf16.msra.mxu0 %v1644
    %1648 = vmatprep.subr.bf16.mxu0 0
    %1649 = vmatpush1.bf16.msra.mxu0 0
    %1650 = vmatprep.subr.bf16.mxu0 0
    %1651 = vmatpush1.bf16.msra.mxu0 0
    %1652 = vmatprep.subr.bf16.mxu0 0
    %1653 = vmatpush1.bf16.msra.mxu0 0
    %1654 = vmatprep.subr.bf16.mxu0 0
    %1655 = vmatpush1.bf16.msra.mxu0 0
    %1656 = vmatprep.subr.bf16.mxu0 0
    %1657 = vmatpush1.bf16.msra.mxu0 0
    %1658 = vmatprep.subr.bf16.mxu0 0
    %1659 = vmatpush1.bf16.msra.mxu0 0
    %1660 = vmatprep.subr.bf16.mxu0 0
    %1661 = vmatpush1.bf16.msra.mxu0 0
    %1662 = vmatprep.subr.bf16.mxu0 0
    %1663 = vmatpush1.bf16.msra.mxu0 0
    %1664 = vmatprep.subr.bf16.mxu0 0
    %1665 = vmatpush1.bf16.msra.mxu0 0
    %1666 = vmatprep.subr.bf16.mxu0 0
    %1667 = vmatpush1.bf16.msra.mxu0 0
    %1668 = vmatprep.subr.bf16.mxu0 0
    %1669 = vmatpush1.bf16.msra.mxu0 0
    %1670 = vmatprep.subr.bf16.mxu0 0
    %1671 = vmatpush1.bf16.msra.mxu0 0
    %1672 = vmatprep.subr.bf16.mxu0 0
    %1673 = vmatpush1.bf16.msra.mxu0 0
    %1674 = vmatprep.subr.bf16.mxu0 0
    %1675 = vmatpush1.bf16.msra.mxu0 0
    %1676 = vmatprep.subr.bf16.mxu0 0
    %1677 = vmatpush1.bf16.msra.mxu0 0
    %1678 = vmatprep.mubr.bf16.mxu0 0
    %1679 = vmatmul.mubr.bf16.gmra.mrb[0].mxu0 %v1641
    %v1680 = vpop.f32.mrb[0].mxu0
    %v1681 = vadd.f32 0.0, %v1680
    %v1682 = vpop.f32.mrb[0].mxu0
    %v1683 = vpop.f32.mrb[0].mxu0
    %v1684 = vadd.f32 0.0, %v1683
    %v1685 = vpop.f32.mrb[0].mxu0
    %1686 = vdwg.mxu0
    %v1687 = vadd.f32 %v1408, %v1681
    %v1688 = vadd.f32 %v1409, %v1684
    %v1689 = vld [vmem:[%s21] sm:$0x1]
    %v1691 = vlaneseq
    %v1692 = vshrl.u32 %v1691, 7
    %v1693 = vsub.s32 0, %v1692
    %v1694 = vrot.slane %v1689, %v1693
    %v1696 = vadd.f32 %v1687, %v1694
    %v1697 = vadd.f32 %v1688, %v1694
    %v1698 = vadd.f32 %v1696, %v330
    %v1699 = vadd.f32 %v1697, %v331
    %v1700 = vld [vmem:[%s23] sm:$0x1]
    %v1701 = vld [vmem:[%s25] sm:$0x1]
    %v1702 = vsel %vm288, %v1698, 0.0
    %1703 = vadd.xlane.f32.xlu0 %v1702
    %v1704 = vpop.xlane.xlu0 %1703
    %v1705 = vsel %vm288, %v1699, 0.0
    %1706 = vadd.xlane.f32.xlu0 %v1705
    %v1707 = vpop.xlane.xlu0 %1706
    %v1708 = vmul.f32 %v1704, %v295
    %v1709 = vmul.f32 %v1707, %v295
    %v1710 = vsub.f32 %v1698, %v1708
    %v1711 = vsub.f32 %v1699, %v1709
    %v1712 = vmul.f32 %v1710, %v1710
    %v1713 = vmul.f32 %v1711, %v1711
    %v1714 = vsel %vm288, %v1712, 0.0
    %1715 = vadd.xlane.f32.xlu0 %v1714
    %v1716 = vpop.xlane.xlu0 %1715
    %v1717 = vsel %vm288, %v1713, 0.0
    %1718 = vadd.xlane.f32.xlu0 %v1717
    %v1719 = vpop.xlane.xlu0 %1718
    %v1720 = vmul.f32 %v1716, %v295
    %v1721 = vmul.f32 %v1719, %v295
    %v1722 = vadd.f32 %v1720, 1e-05
    %v1723 = vadd.f32 %v1721, 1e-05
    %v1724 = vrsqrt.pop %v1722
    %v1725 = vrsqrt.pop %v1723
    %v1726 = vmul.f32 %v1710, %v1724
    %v1727 = vmul.f32 %v1711, %v1725
    %v1729 = vlaneseq
    %v1730 = vshrl.u32 %v1729, 7
    %v1731 = vsub.s32 0, %v1730
    %v1732 = vrot.slane %v1700, %v1731
    %v1734 = vmul.f32 %v1726, %v1732
    %v1735 = vmul.f32 %v1727, %v1732
    %v1737 = vlaneseq
    %v1738 = vshrl.u32 %v1737, 7
    %v1739 = vsub.s32 0, %v1738
    %v1740 = vrot.slane %v1701, %v1739
    %v1742 = vadd.f32 %v1734, %v1740
    %v1743 = vadd.f32 %v1735, %v1740
    %v1744 = vadd.f32 %v284, %v1742
    %v1745 = vadd.f32 %v285, %v1743
    %v1746 = vld [vmem:[%s27] sm:$0x1]
    %v1747 = vld [vmem:[%s29] sm:$0x1]
    %v1748 = vsel %vm288, %v1744, 0.0
    %1749 = vadd.xlane.f32.xlu0 %v1748
    %v1750 = vpop.xlane.xlu0 %1749
    %v1751 = vsel %vm288, %v1745, 0.0
    %1752 = vadd.xlane.f32.xlu0 %v1751
    %v1753 = vpop.xlane.xlu0 %1752
    %v1754 = vmul.f32 %v1750, %v295
    %v1755 = vmul.f32 %v1753, %v295
    %v1756 = vsub.f32 %v1744, %v1754
    %v1757 = vsub.f32 %v1745, %v1755
    %v1758 = vmul.f32 %v1756, %v1756
    %v1759 = vmul.f32 %v1757, %v1757
    %v1760 = vsel %vm288, %v1758, 0.0
    %1761 = vadd.xlane.f32.xlu0 %v1760
    %v1762 = vpop.xlane.xlu0 %1761
    %v1763 = vsel %vm288, %v1759, 0.0
    %1764 = vadd.xlane.f32.xlu0 %v1763
    %v1765 = vpop.xlane.xlu0 %1764
    %v1766 = vmul.f32 %v1762, %v295
    %v1767 = vmul.f32 %v1765, %v295
    %v1768 = vadd.f32 %v1766, 1e-05
    %v1769 = vadd.f32 %v1767, 1e-05
    %v1770 = vrsqrt.pop %v1768
    %v1771 = vrsqrt.pop %v1769
    %v1772 = vmul.f32 %v1756, %v1770
    %v1773 = vmul.f32 %v1757, %v1771
    %v1775 = vlaneseq
    %v1776 = vshrl.u32 %v1775, 7
    %v1777 = vsub.s32 0, %v1776
    %v1778 = vrot.slane %v1746, %v1777
    %v1780 = vmul.f32 %v1772, %v1778
    %v1781 = vmul.f32 %v1773, %v1778
    %v1783 = vlaneseq
    %v1784 = vshrl.u32 %v1783, 7
    %v1785 = vsub.s32 0, %v1784
    %v1786 = vrot.slane %v1747, %v1785
    %v1788 = vadd.f32 %v1780, %v1786
    %v1789 = vadd.f32 %v1781, %v1786
    %v1790 = vld [vmem:[#allocation9] sm:$0xf]
    %v1791 = vld [vmem:[#allocation9 + $0x4] sm:$0xf]
    %v1792 = vld [vmem:[#allocation9 + $0x8] sm:$0xf]
    %v1793 = vld [vmem:[#allocation9 + $0xc] sm:$0xf]
    %v1794 = vpack.c.bf16 %v1789, %v1788
    %v1795 = vld [vmem:[%s33] sm:$0x1]
    %v1797 = vlaneseq
    %v1798 = vshrl.u32 %v1797, 7
    %v1799 = vsub.s32 0, %v1798
    %v1800 = vrot.slane %v1795, %v1799
    %v1806 = vunpack.c.l.b16 %v1790
    %v1807 = vunpack.c.l.b16 %v1791
    %v1808 = vunpack.c.l.b16 %v1792
    %v1809 = vunpack.c.l.b16 %v1793
    %v1810 = vpack.c.b16 %v1807, %v1806
    %v1811 = vpack.c.b16 %v1809, %v1808
    %v1815 = vsel %vm288, %v1794, 0
    %1817 = vmatprep.subr.bf16.mxu0 0
    %1818 = vmatpush1.bf16.msra.mxu0 %v1810
    %1819 = vmatprep.subr.bf16.mxu0 0
    %1820 = vmatpush1.bf16.msra.mxu0 %v1811
    %1821 = vmatprep.subr.bf16.mxu0 0
    %1822 = vmatpush1.bf16.msra.mxu0 0
    %1823 = vmatprep.subr.bf16.mxu0 0
    %1824 = vmatpush1.bf16.msra.mxu0 0
    %1825 = vmatprep.subr.bf16.mxu0 0
    %1826 = vmatpush1.bf16.msra.mxu0 0
    %1827 = vmatprep.subr.bf16.mxu0 0
    %1828 = vmatpush1.bf16.msra.mxu0 0
    %1829 = vmatprep.subr.bf16.mxu0 0
    %1830 = vmatpush1.bf16.msra.mxu0 0
    %1831 = vmatprep.subr.bf16.mxu0 0
    %1832 = vmatpush1.bf16.msra.mxu0 0
    %1833 = vmatprep.subr.bf16.mxu0 0
    %1834 = vmatpush1.bf16.msra.mxu0 0
    %1835 = vmatprep.subr.bf16.mxu0 0
    %1836 = vmatpush1.bf16.msra.mxu0 0
    %1837 = vmatprep.subr.bf16.mxu0 0
    %1838 = vmatpush1.bf16.msra.mxu0 0
    %1839 = vmatprep.subr.bf16.mxu0 0
    %1840 = vmatpush1.bf16.msra.mxu0 0
    %1841 = vmatprep.subr.bf16.mxu0 0
    %1842 = vmatpush1.bf16.msra.mxu0 0
    %1843 = vmatprep.subr.bf16.mxu0 0
    %1844 = vmatpush1.bf16.msra.mxu0 0
    %1845 = vmatprep.subr.bf16.mxu0 0
    %1846 = vmatpush1.bf16.msra.mxu0 0
    %1847 = vmatprep.subr.bf16.mxu0 0
    %1848 = vmatpush1.bf16.msra.mxu0 0
    %1849 = vmatprep.mubr.bf16.mxu0 0
    %1850 = vmatmul.mubr.bf16.gmra.mrb[0].mxu0 %v1815
    %v1851 = vpop.f32.mrb[0].mxu0
    %v1852 = vadd.f32 %v1800, %v1851
    %v1853 = vpop.f32.mrb[0].mxu0
    %v1854 = vpop.f32.mrb[0].mxu0
    %v1855 = vadd.f32 %v1800, %v1854
    %v1856 = vpop.f32.mrb[0].mxu0
    %1857 = vdwg.mxu0
    %v1858 = vpack.c.bf16 %v1855, %v1852
    %v1860 = vunpack.c.l.b16 %v1858
    %v1861 = vunpack.c.h.b16 %v1858
    %v1862 = vpack.c.b16 %v1860, %v1860
    %v1863 = vpack.c.b16 %v1861, %v1861
    %v1864 = vld [vmem:[%s3] sm:$0xff]
    %v1865 = vld [vmem:[%s3 + $0x8] sm:$0xff]
    %v1866 = vld [vmem:[#allocation11] sm:$0xf]
    %v1867 = vld [vmem:[#allocation11 + $0x4] sm:$0xf]
    %v1868 = vld [vmem:[#allocation11 + $0x8] sm:$0xf]
    %v1869 = vld [vmem:[#allocation11 + $0xc] sm:$0xf]
    %v1870 = vpack.c.bf16 %v1865, %v1864
    %v1871 = vld [vmem:[#allocation12] sm:$0x1]
    %v1873 = vlaneseq
    %v1874 = vshrl.u32 %v1873, 7
    %v1875 = vsub.s32 0, %v1874
    %v1876 = vrot.slane %v1871, %v1875
    %v1882 = vunpack.c.l.b16 %v1866
    %v1883 = vunpack.c.l.b16 %v1867
    %v1884 = vunpack.c.l.b16 %v1868
    %v1885 = vunpack.c.l.b16 %v1869
    %v1886 = vpack.c.b16 %v1883, %v1882
    %v1887 = vpack.c.b16 %v1885, %v1884
    %v1891 = vsel %vm288, %v1870, 0
    %1893 = vmatprep.subr.bf16.mxu0 0
    %1894 = vmatpush1.bf16.msra.mxu0 %v1886
    %1895 = vmatprep.subr.bf16.mxu0 0
    %1896 = vmatpush1.bf16.msra.mxu0 %v1887
    %1897 = vmatprep.subr.bf16.mxu0 0
    %1898 = vmatpush1.bf16.msra.mxu0 0
    %1899 = vmatprep.subr.bf16.mxu0 0
    %1900 = vmatpush1.bf16.msra.mxu0 0
    %1901 = vmatprep.subr.bf16.mxu0 0
    %1902 = vmatpush1.bf16.msra.mxu0 0
    %1903 = vmatprep.subr.bf16.mxu0 0
    %1904 = vmatpush1.bf16.msra.mxu0 0
    %1905 = vmatprep.subr.bf16.mxu0 0
    %1906 = vmatpush1.bf16.msra.mxu0 0
    %1907 = vmatprep.subr.bf16.mxu0 0
    %1908 = vmatpush1.bf16.msra.mxu0 0
    %1909 = vmatprep.subr.bf16.mxu0 0
    %1910 = vmatpush1.bf16.msra.mxu0 0
    %1911 = vmatprep.subr.bf16.mxu0 0
    %1912 = vmatpush1.bf16.msra.mxu0 0
    %1913 = vmatprep.subr.bf16.mxu0 0
    %1914 = vmatpush1.bf16.msra.mxu0 0
    %1915 = vmatprep.subr.bf16.mxu0 0
    %1916 = vmatpush1.bf16.msra.mxu0 0
    %1917 = vmatprep.subr.bf16.mxu0 0
    %1918 = vmatpush1.bf16.msra.mxu0 0
    %1919 = vmatprep.subr.bf16.mxu0 0
    %1920 = vmatpush1.bf16.msra.mxu0 0
    %1921 = vmatprep.subr.bf16.mxu0 0
    %1922 = vmatpush1.bf16.msra.mxu0 0
    %1923 = vmatprep.subr.bf16.mxu0 0
    %1924 = vmatpush1.bf16.msra.mxu0 0
    %1925 = vmatprep.mubr.bf16.mxu0 0
    %1926 = vmatmul.mubr.bf16.gmra.mrb[0].mxu0 %v1891
    %v1927 = vpop.f32.mrb[0].mxu0
    %v1928 = vadd.f32 %v1876, %v1927
    %v1929 = vpop.f32.mrb[0].mxu0
    %v1930 = vpop.f32.mrb[0].mxu0
    %v1931 = vadd.f32 %v1876, %v1930
    %v1932 = vpop.f32.mrb[0].mxu0
    %1933 = vdwg.mxu0
    %v1934 = vpack.c.bf16 %v1931, %v1928
    %v1936 = vunpack.c.l.b16 %v1934
    %v1937 = vunpack.c.h.b16 %v1934
    %v1938 = vpack.c.b16 %v1936, %v1936
    %v1939 = vpack.c.b16 %v1937, %v1937
    %v1940 = vld [vmem:[#allocation14] sm:$0xf]
    %v1941 = vld [vmem:[#allocation14 + $0x4] sm:$0xf]
    %v1942 = vld [vmem:[#allocation14 + $0x8] sm:$0xf]
    %v1943 = vld [vmem:[#allocation14 + $0xc] sm:$0xf]
    %v1945 = vsel %vm582, %v1862, 0
    %v1948 = vsel %vm582, %v1938, 0
    %1950 = vmatprep.subr.bf16.mxu0 0
    %1951 = vmatpush1.bf16.xpose.msra.mxu0 %v1948
    %1952 = vmatprep.subr.bf16.mxu0 0
    %1953 = vmatpush1.bf16.xpose.msra.mxu0 0
    %1954 = vmatprep.subr.bf16.mxu0 0
    %1955 = vmatpush1.bf16.xpose.msra.mxu0 0
    %1956 = vmatprep.subr.bf16.mxu0 0
    %1957 = vmatpush1.bf16.xpose.msra.mxu0 0
    %1958 = vmatprep.subr.bf16.mxu0 0
    %1959 = vmatpush1.bf16.xpose.msra.mxu0 0
    %1960 = vmatprep.subr.bf16.mxu0 0
    %1961 = vmatpush1.bf16.xpose.msra.mxu0 0
    %1962 = vmatprep.subr.bf16.mxu0 0
    %1963 = vmatpush1.bf16.xpose.msra.mxu0 0
    %1964 = vmatprep.subr.bf16.mxu0 0
    %1965 = vmatpush1.bf16.xpose.msra.mxu0 0
    %1966 = vmatprep.subr.bf16.mxu0 0
    %1967 = vmatpush1.bf16.xpose.msra.mxu0 0
    %1968 = vmatprep.subr.bf16.mxu0 0
    %1969 = vmatpush1.bf16.xpose.msra.mxu0 0
    %1970 = vmatprep.subr.bf16.mxu0 0
    %1971 = vmatpush1.bf16.xpose.msra.mxu0 0
    %1972 = vmatprep.subr.bf16.mxu0 0
    %1973 = vmatpush1.bf16.xpose.msra.mxu0 0
    %1974 = vmatprep.subr.bf16.mxu0 0
    %1975 = vmatpush1.bf16.xpose.msra.mxu0 0
    %1976 = vmatprep.subr.bf16.mxu0 0
    %1977 = vmatpush1.bf16.xpose.msra.mxu0 0
    %1978 = vmatprep.subr.bf16.mxu0 0
    %1979 = vmatpush1.bf16.xpose.msra.mxu0 0
    %1980 = vmatprep.subr.bf16.mxu0 0
    %1981 = vmatpush1.bf16.xpose.msra.mxu0 0
    %1982 = vmatprep.mubr.bf16.mxu0 0
    %1983 = vmatmul.mubr.bf16.gmra.mrb[0].mxu0 %v1945
    %v1984 = vpop.f32.mrb[0].mxu0
    %v1985 = vadd.f32 0.0, %v1984
    %v1986 = vpop.f32.mrb[0].mxu0
    %v1987 = vpop.f32.mrb[0].mxu0
    %v1988 = vpop.f32.mrb[0].mxu0
    %1989 = vdwg.mxu0
    %v1991 = vsel %vm582, %v1863, 0
    %v1994 = vsel %vm582, %v1939, 0
    %1996 = vmatprep.subr.bf16.mxu0 0
    %1997 = vmatpush1.bf16.xpose.msra.mxu0 %v1994
    %1998 = vmatprep.subr.bf16.mxu0 0
    %1999 = vmatpush1.bf16.xpose.msra.mxu0 0
    %2000 = vmatprep.subr.bf16.mxu0 0
    %2001 = vmatpush1.bf16.xpose.msra.mxu0 0
    %2002 = vmatprep.subr.bf16.mxu0 0
    %2003 = vmatpush1.bf16.xpose.msra.mxu0 0
    %2004 = vmatprep.subr.bf16.mxu0 0
    %2005 = vmatpush1.bf16.xpose.msra.mxu0 0
    %2006 = vmatprep.subr.bf16.mxu0 0
    %2007 = vmatpush1.bf16.xpose.msra.mxu0 0
    %2008 = vmatprep.subr.bf16.mxu0 0
    %2009 = vmatpush1.bf16.xpose.msra.mxu0 0
    %2010 = vmatprep.subr.bf16.mxu0 0
    %2011 = vmatpush1.bf16.xpose.msra.mxu0 0
    %2012 = vmatprep.subr.bf16.mxu0 0
    %2013 = vmatpush1.bf16.xpose.msra.mxu0 0
    %2014 = vmatprep.subr.bf16.mxu0 0
    %2015 = vmatpush1.bf16.xpose.msra.mxu0 0
    %2016 = vmatprep.subr.bf16.mxu0 0
    %2017 = vmatpush1.bf16.xpose.msra.mxu0 0
    %2018 = vmatprep.subr.bf16.mxu0 0
    %2019 = vmatpush1.bf16.xpose.msra.mxu0 0
    %2020 = vmatprep.subr.bf16.mxu0 0
    %2021 = vmatpush1.bf16.xpose.msra.mxu0 0
    %2022 = vmatprep.subr.bf16.mxu0 0
    %2023 = vmatpush1.bf16.xpose.msra.mxu0 0
    %2024 = vmatprep.subr.bf16.mxu0 0
    %2025 = vmatpush1.bf16.xpose.msra.mxu0 0
    %2026 = vmatprep.subr.bf16.mxu0 0
    %2027 = vmatpush1.bf16.xpose.msra.mxu0 0
    %2028 = vmatprep.mubr.bf16.mxu0 0
    %2029 = vmatmul.mubr.bf16.gmra.mrb[0].mxu0 %v1991
    %v2030 = vpop.f32.mrb[0].mxu0
    %v2031 = vadd.f32 0.0, %v2030
    %v2032 = vpop.f32.mrb[0].mxu0
    %v2033 = vpop.f32.mrb[0].mxu0
    %v2034 = vpop.f32.mrb[0].mxu0
    %2035 = vdwg.mxu0
    %v2036 = vsel %vm582, %v1985, -inf
    %2037 = vmax.xlane.f32.xlu0 %v2036
    %v2038 = vpop.xlane.xlu0 %2037
    %v2039 = vsel %vm582, %v2031, -inf
    %2040 = vmax.xlane.f32.xlu0 %v2039
    %v2041 = vpop.xlane.xlu0 %2040
    %v2042 = vsub.f32 %v1985, %v2038
    %v2043 = vsub.f32 %v2031, %v2041
    %v2044 = vmul.f32 %v2042, 1.442695
    %v2045 = vpow.pop %v2044
    %v2046 = vmul.f32 %v2043, 1.442695
    %v2047 = vpow.pop %v2046
    %v2048 = vsel %vm582, %v2045, 0.0
    %2049 = vadd.xlane.f32.xlu0 %v2048
    %v2050 = vpop.xlane.xlu0 %2049
    %v2051 = vsel %vm582, %v2047, 0.0
    %2052 = vadd.xlane.f32.xlu0 %v2051
    %v2053 = vpop.xlane.xlu0 %2052
    %v2054 = vrcp.pop %v2050
    %v2055 = vmul.f32 %v2045, %v2054
    %v2056 = vrcp.pop %v2053
    %v2057 = vmul.f32 %v2047, %v2056
    %v2058 = vadd.f32 %v2055, 0.0
    %v2059 = vadd.f32 %v2057, 0.0
    %v2060 = vpack.c.bf16 %v2055, %v2055
    %v2061 = vpack.c.bf16 %v2057, %v2057
    %2062 = vrot.lane.b32.xlu0 %v1938, 96
    %v2063 = vpop.permute.xlu0 %2062
    %v2065 = vsel %vm582, %v2060, 0
    %v2068 = vsel %vm708, %v2063, 0
    %2070 = vmatprep.subr.bf16.mxu0 0
    %2071 = vmatpush1.bf16.msra.mxu0 %v2068
    %2072 = vmatprep.subr.bf16.mxu0 0
    %2073 = vmatpush1.bf16.msra.mxu0 0
    %2074 = vmatprep.subr.bf16.mxu0 0
    %2075 = vmatpush1.bf16.msra.mxu0 0
    %2076 = vmatprep.subr.bf16.mxu0 0
    %2077 = vmatpush1.bf16.msra.mxu0 0
    %2078 = vmatprep.subr.bf16.mxu0 0
    %2079 = vmatpush1.bf16.msra.mxu0 0
    %2080 = vmatprep.subr.bf16.mxu0 0
    %2081 = vmatpush1.bf16.msra.mxu0 0
    %2082 = vmatprep.subr.bf16.mxu0 0
    %2083 = vmatpush1.bf16.msra.mxu0 0
    %2084 = vmatprep.subr.bf16.mxu0 0
    %2085 = vmatpush1.bf16.msra.mxu0 0
    %2086 = vmatprep.subr.bf16.mxu0 0
    %2087 = vmatpush1.bf16.msra.mxu0 0
    %2088 = vmatprep.subr.bf16.mxu0 0
    %2089 = vmatpush1.bf16.msra.mxu0 0
    %2090 = vmatprep.subr.bf16.mxu0 0
    %2091 = vmatpush1.bf16.msra.mxu0 0
    %2092 = vmatprep.subr.bf16.mxu0 0
    %2093 = vmatpush1.bf16.msra.mxu0 0
    %2094 = vmatprep.subr.bf16.mxu0 0
    %2095 = vmatpush1.bf16.msra.mxu0 0
    %2096 = vmatprep.subr.bf16.mxu0 0
    %2097 = vmatpush1.bf16.msra.mxu0 0
    %2098 = vmatprep.subr.bf16.mxu0 0
    %2099 = vmatpush1.bf16.msra.mxu0 0
    %2100 = vmatprep.subr.bf16.mxu0 0
    %2101 = vmatpush1.bf16.msra.mxu0 0
    %2102 = vmatprep.mubr.bf16.mxu0 0
    %2103 = vmatmul.mubr.bf16.gmra.mrb[0].mxu0 %v2065
    %v2104 = vpop.f32.mrb[0].mxu0
    %v2105 = vadd.f32 0.0, %v2104
    %v2106 = vpop.f32.mrb[0].mxu0
    %v2107 = vpop.f32.mrb[0].mxu0
    %v2108 = vpop.f32.mrb[0].mxu0
    %2109 = vdwg.mxu0
    %2110 = vrot.lane.b32.xlu0 %v1939, 96
    %v2111 = vpop.permute.xlu0 %2110
    %v2113 = vsel %vm582, %v2061, 0
    %v2116 = vsel %vm708, %v2111, 0
    %2118 = vmatprep.subr.bf16.mxu0 0
    %2119 = vmatpush1.bf16.msra.mxu0 %v2116
    %2120 = vmatprep.subr.bf16.mxu0 0
    %2121 = vmatpush1.bf16.msra.mxu0 0
    %2122 = vmatprep.subr.bf16.mxu0 0
    %2123 = vmatpush1.bf16.msra.mxu0 0
    %2124 = vmatprep.subr.bf16.mxu0 0
    %2125 = vmatpush1.bf16.msra.mxu0 0
    %2126 = vmatprep.subr.bf16.mxu0 0
    %2127 = vmatpush1.bf16.msra.mxu0 0
    %2128 = vmatprep.subr.bf16.mxu0 0
    %2129 = vmatpush1.bf16.msra.mxu0 0
    %2130 = vmatprep.subr.bf16.mxu0 0
    %2131 = vmatpush1.bf16.msra.mxu0 0
    %2132 = vmatprep.subr.bf16.mxu0 0
    %2133 = vmatpush1.bf16.msra.mxu0 0
    %2134 = vmatprep.subr.bf16.mxu0 0
    %2135 = vmatpush1.bf16.msra.mxu0 0
    %2136 = vmatprep.subr.bf16.mxu0 0
    %2137 = vmatpush1.bf16.msra.mxu0 0
    %2138 = vmatprep.subr.bf16.mxu0 0
    %2139 = vmatpush1.bf16.msra.mxu0 0
    %2140 = vmatprep.subr.bf16.mxu0 0
    %2141 = vmatpush1.bf16.msra.mxu0 0
    %2142 = vmatprep.subr.bf16.mxu0 0
    %2143 = vmatpush1.bf16.msra.mxu0 0
    %2144 = vmatprep.subr.bf16.mxu0 0
    %2145 = vmatpush1.bf16.msra.mxu0 0
    %2146 = vmatprep.subr.bf16.mxu0 0
    %2147 = vmatpush1.bf16.msra.mxu0 0
    %2148 = vmatprep.subr.bf16.mxu0 0
    %2149 = vmatpush1.bf16.msra.mxu0 0
    %2150 = vmatprep.mubr.bf16.mxu0 0
    %2151 = vmatmul.mubr.bf16.gmra.mrb[0].mxu0 %v2113
    %v2152 = vpop.f32.mrb[0].mxu0
    %v2153 = vadd.f32 0.0, %v2152
    %v2154 = vpop.f32.mrb[0].mxu0
    %v2155 = vpop.f32.mrb[0].mxu0
    %v2156 = vpop.f32.mrb[0].mxu0
    %2157 = vdwg.mxu0
    %v2158 = vpack.c.bf16 %v2105, %v2105
    %v2159 = vpack.c.bf16 %v2153, %v2153
    %2160 = vrot.lane.b32.xlu0 %v1862, 120
    %v2161 = vpop.permute.xlu0 %2160
    %2162 = vrot.lane.b32.xlu0 %v1938, 120
    %v2163 = vpop.permute.xlu0 %2162
    %v2165 = vsel %vm582, %v2161, 0
    %v2168 = vsel %vm582, %v2163, 0
    %2170 = vmatprep.subr.bf16.mxu0 0
    %2171 = vmatpush1.bf16.xpose.msra.mxu0 %v2168
    %2172 = vmatprep.subr.bf16.mxu0 0
    %2173 = vmatpush1.bf16.xpose.msra.mxu0 0
    %2174 = vmatprep.subr.bf16.mxu0 0
    %2175 = vmatpush1.bf16.xpose.msra.mxu0 0
    %2176 = vmatprep.subr.bf16.mxu0 0
    %2177 = vmatpush1.bf16.xpose.msra.mxu0 0
    %2178 = vmatprep.subr.bf16.mxu0 0
    %2179 = vmatpush1.bf16.xpose.msra.mxu0 0
    %2180 = vmatprep.subr.bf16.mxu0 0
    %2181 = vmatpush1.bf16.xpose.msra.mxu0 0
    %2182 = vmatprep.subr.bf16.mxu0 0
    %2183 = vmatpush1.bf16.xpose.msra.mxu0 0
    %2184 = vmatprep.subr.bf16.mxu0 0
    %2185 = vmatpush1.bf16.xpose.msra.mxu0 0
    %2186 = vmatprep.subr.bf16.mxu0 0
    %2187 = vmatpush1.bf16.xpose.msra.mxu0 0
    %2188 = vmatprep.subr.bf16.mxu0 0
    %2189 = vmatpush1.bf16.xpose.msra.mxu0 0
    %2190 = vmatprep.subr.bf16.mxu0 0
    %2191 = vmatpush1.bf16.xpose.msra.mxu0 0
    %2192 = vmatprep.subr.bf16.mxu0 0
    %2193 = vmatpush1.bf16.xpose.msra.mxu0 0
    %2194 = vmatprep.subr.bf16.mxu0 0
    %2195 = vmatpush1.bf16.xpose.msra.mxu0 0
    %2196 = vmatprep.subr.bf16.mxu0 0
    %2197 = vmatpush1.bf16.xpose.msra.mxu0 0
    %2198 = vmatprep.subr.bf16.mxu0 0
    %2199 = vmatpush1.bf16.xpose.msra.mxu0 0
    %2200 = vmatprep.subr.bf16.mxu0 0
    %2201 = vmatpush1.bf16.xpose.msra.mxu0 0
    %2202 = vmatprep.mubr.bf16.mxu0 0
    %2203 = vmatmul.mubr.bf16.gmra.mrb[0].mxu0 %v2165
    %v2204 = vpop.f32.mrb[0].mxu0
    %v2205 = vadd.f32 0.0, %v2204
    %v2206 = vpop.f32.mrb[0].mxu0
    %v2207 = vpop.f32.mrb[0].mxu0
    %v2208 = vpop.f32.mrb[0].mxu0
    %2209 = vdwg.mxu0
    %2210 = vrot.lane.b32.xlu0 %v1863, 120
    %v2211 = vpop.permute.xlu0 %2210
    %2212 = vrot.lane.b32.xlu0 %v1939, 120
    %v2213 = vpop.permute.xlu0 %2212
    %v2215 = vsel %vm582, %v2211, 0
    %v2218 = vsel %vm582, %v2213, 0
    %2220 = vmatprep.subr.bf16.mxu0 0
    %2221 = vmatpush1.bf16.xpose.msra.mxu0 %v2218
    %2222 = vmatprep.subr.bf16.mxu0 0
    %2223 = vmatpush1.bf16.xpose.msra.mxu0 0
    %2224 = vmatprep.subr.bf16.mxu0 0
    %2225 = vmatpush1.bf16.xpose.msra.mxu0 0
    %2226 = vmatprep.subr.bf16.mxu0 0
    %2227 = vmatpush1.bf16.xpose.msra.mxu0 0
    %2228 = vmatprep.subr.bf16.mxu0 0
    %2229 = vmatpush1.bf16.xpose.msra.mxu0 0
    %2230 = vmatprep.subr.bf16.mxu0 0
    %2231 = vmatpush1.bf16.xpose.msra.mxu0 0
    %2232 = vmatprep.subr.bf16.mxu0 0
    %2233 = vmatpush1.bf16.xpose.msra.mxu0 0
    %2234 = vmatprep.subr.bf16.mxu0 0
    %2235 = vmatpush1.bf16.xpose.msra.mxu0 0
    %2236 = vmatprep.subr.bf16.mxu0 0
    %2237 = vmatpush1.bf16.xpose.msra.mxu0 0
    %2238 = vmatprep.subr.bf16.mxu0 0
    %2239 = vmatpush1.bf16.xpose.msra.mxu0 0
    %2240 = vmatprep.subr.bf16.mxu0 0
    %2241 = vmatpush1.bf16.xpose.msra.mxu0 0
    %2242 = vmatprep.subr.bf16.mxu0 0
    %2243 = vmatpush1.bf16.xpose.msra.mxu0 0
    %2244 = vmatprep.subr.bf16.mxu0 0
    %2245 = vmatpush1.bf16.xpose.msra.mxu0 0
    %2246 = vmatprep.subr.bf16.mxu0 0
    %2247 = vmatpush1.bf16.xpose.msra.mxu0 0
    %2248 = vmatprep.subr.bf16.mxu0 0
    %2249 = vmatpush1.bf16.xpose.msra.mxu0 0
    %2250 = vmatprep.subr.bf16.mxu0 0
    %2251 = vmatpush1.bf16.xpose.msra.mxu0 0
    %2252 = vmatprep.mubr.bf16.mxu0 0
    %2253 = vmatmul.mubr.bf16.gmra.mrb[0].mxu0 %v2215
    %v2254 = vpop.f32.mrb[0].mxu0
    %v2255 = vadd.f32 0.0, %v2254
    %v2256 = vpop.f32.mrb[0].mxu0
    %v2257 = vpop.f32.mrb[0].mxu0
    %v2258 = vpop.f32.mrb[0].mxu0
    %2259 = vdwg.mxu0
    %v2260 = vsel %vm582, %v2205, -inf
    %2261 = vmax.xlane.f32.xlu0 %v2260
    %v2262 = vpop.xlane.xlu0 %2261
    %v2263 = vsel %vm582, %v2255, -inf
    %2264 = vmax.xlane.f32.xlu0 %v2263
    %v2265 = vpop.xlane.xlu0 %2264
    %v2266 = vsub.f32 %v2205, %v2262
    %v2267 = vsub.f32 %v2255, %v2265
    %v2268 = vmul.f32 %v2266, 1.442695
    %v2269 = vpow.pop %v2268
    %v2270 = vmul.f32 %v2267, 1.442695
    %v2271 = vpow.pop %v2270
    %v2272 = vsel %vm582, %v2269, 0.0
    %2273 = vadd.xlane.f32.xlu0 %v2272
    %v2274 = vpop.xlane.xlu0 %2273
    %v2275 = vsel %vm582, %v2271, 0.0
    %2276 = vadd.xlane.f32.xlu0 %v2275
    %v2277 = vpop.xlane.xlu0 %2276
    %v2278 = vrcp.pop %v2274
    %v2279 = vmul.f32 %v2269, %v2278
    %v2280 = vrcp.pop %v2277
    %v2281 = vmul.f32 %v2271, %v2280
    %v2282 = vadd.f32 %v2058, %v2279
    %v2283 = vadd.f32 %v2059, %v2281
    %v2284 = vpack.c.bf16 %v2279, %v2279
    %v2285 = vpack.c.bf16 %v2281, %v2281
    %2286 = vrot.lane.b32.xlu0 %v1938, 88
    %v2287 = vpop.permute.xlu0 %2286
    %v2289 = vsel %vm582, %v2284, 0
    %v2292 = vsel %vm708, %v2287, 0
    %2294 = vmatprep.subr.bf16.mxu0 0
    %2295 = vmatpush1.bf16.msra.mxu0 %v2292
    %2296 = vmatprep.subr.bf16.mxu0 0
    %2297 = vmatpush1.bf16.msra.mxu0 0
    %2298 = vmatprep.subr.bf16.mxu0 0
    %2299 = vmatpush1.bf16.msra.mxu0 0
    %2300 = vmatprep.subr.bf16.mxu0 0
    %2301 = vmatpush1.bf16.msra.mxu0 0
    %2302 = vmatprep.subr.bf16.mxu0 0
    %2303 = vmatpush1.bf16.msra.mxu0 0
    %2304 = vmatprep.subr.bf16.mxu0 0
    %2305 = vmatpush1.bf16.msra.mxu0 0
    %2306 = vmatprep.subr.bf16.mxu0 0
    %2307 = vmatpush1.bf16.msra.mxu0 0
    %2308 = vmatprep.subr.bf16.mxu0 0
    %2309 = vmatpush1.bf16.msra.mxu0 0
    %2310 = vmatprep.subr.bf16.mxu0 0
    %2311 = vmatpush1.bf16.msra.mxu0 0
    %2312 = vmatprep.subr.bf16.mxu0 0
    %2313 = vmatpush1.bf16.msra.mxu0 0
    %2314 = vmatprep.subr.bf16.mxu0 0
    %2315 = vmatpush1.bf16.msra.mxu0 0
    %2316 = vmatprep.subr.bf16.mxu0 0
    %2317 = vmatpush1.bf16.msra.mxu0 0
    %2318 = vmatprep.subr.bf16.mxu0 0
    %2319 = vmatpush1.bf16.msra.mxu0 0
    %2320 = vmatprep.subr.bf16.mxu0 0
    %2321 = vmatpush1.bf16.msra.mxu0 0
    %2322 = vmatprep.subr.bf16.mxu0 0
    %2323 = vmatpush1.bf16.msra.mxu0 0
    %2324 = vmatprep.subr.bf16.mxu0 0
    %2325 = vmatpush1.bf16.msra.mxu0 0
    %2326 = vmatprep.mubr.bf16.mxu0 0
    %2327 = vmatmul.mubr.bf16.gmra.mrb[0].mxu0 %v2289
    %v2328 = vpop.f32.mrb[0].mxu0
    %v2329 = vadd.f32 0.0, %v2328
    %v2330 = vpop.f32.mrb[0].mxu0
    %v2331 = vpop.f32.mrb[0].mxu0
    %v2332 = vpop.f32.mrb[0].mxu0
    %2333 = vdwg.mxu0
    %2334 = vrot.lane.b32.xlu0 %v1939, 88
    %v2335 = vpop.permute.xlu0 %2334
    %v2337 = vsel %vm582, %v2285, 0
    %v2340 = vsel %vm708, %v2335, 0
    %2342 = vmatprep.subr.bf16.mxu0 0
    %2343 = vmatpush1.bf16.msra.mxu0 %v2340
    %2344 = vmatprep.subr.bf16.mxu0 0
    %2345 = vmatpush1.bf16.msra.mxu0 0
    %2346 = vmatprep.subr.bf16.mxu0 0
    %2347 = vmatpush1.bf16.msra.mxu0 0
    %2348 = vmatprep.subr.bf16.mxu0 0
    %2349 = vmatpush1.bf16.msra.mxu0 0
    %2350 = vmatprep.subr.bf16.mxu0 0
    %2351 = vmatpush1.bf16.msra.mxu0 0
    %2352 = vmatprep.subr.bf16.mxu0 0
    %2353 = vmatpush1.bf16.msra.mxu0 0
    %2354 = vmatprep.subr.bf16.mxu0 0
    %2355 = vmatpush1.bf16.msra.mxu0 0
    %2356 = vmatprep.subr.bf16.mxu0 0
    %2357 = vmatpush1.bf16.msra.mxu0 0
    %2358 = vmatprep.subr.bf16.mxu0 0
    %2359 = vmatpush1.bf16.msra.mxu0 0
    %2360 = vmatprep.subr.bf16.mxu0 0
    %2361 = vmatpush1.bf16.msra.mxu0 0
    %2362 = vmatprep.subr.bf16.mxu0 0
    %2363 = vmatpush1.bf16.msra.mxu0 0
    %2364 = vmatprep.subr.bf16.mxu0 0
    %2365 = vmatpush1.bf16.msra.mxu0 0
    %2366 = vmatprep.subr.bf16.mxu0 0
    %2367 = vmatpush1.bf16.msra.mxu0 0
    %2368 = vmatprep.subr.bf16.mxu0 0
    %2369 = vmatpush1.bf16.msra.mxu0 0
    %2370 = vmatprep.subr.bf16.mxu0 0
    %2371 = vmatpush1.bf16.msra.mxu0 0
    %2372 = vmatprep.subr.bf16.mxu0 0
    %2373 = vmatpush1.bf16.msra.mxu0 0
    %2374 = vmatprep.mubr.bf16.mxu0 0
    %2375 = vmatmul.mubr.bf16.gmra.mrb[0].mxu0 %v2337
    %v2376 = vpop.f32.mrb[0].mxu0
    %v2377 = vadd.f32 0.0, %v2376
    %v2378 = vpop.f32.mrb[0].mxu0
    %v2379 = vpop.f32.mrb[0].mxu0
    %v2380 = vpop.f32.mrb[0].mxu0
    %2381 = vdwg.mxu0
    %v2382 = vpack.c.bf16 %v2329, %v2329
    %v2383 = vpack.c.bf16 %v2377, %v2377
    %v2386 = vunpack.c.l.b16 %v2382
    %v2387 = vunpack.c.l.b16 %v2383
    %v2388 = vpack.c.b16 %v2387, %v2386
    %v2390 = vsel %vm582, %v2388, 0
    %v2393 = vsel %vm708, %v1941, 0
    %2395 = vmatprep.subr.bf16.mxu0 0
    %2396 = vmatpush1.bf16.msra.mxu0 %v2393
    %2397 = vmatprep.subr.bf16.mxu0 0
    %2398 = vmatpush1.bf16.msra.mxu0 0
    %2399 = vmatprep.subr.bf16.mxu0 0
    %2400 = vmatpush1.bf16.msra.mxu0 0
    %2401 = vmatprep.subr.bf16.mxu0 0
    %2402 = vmatpush1.bf16.msra.mxu0 0
    %2403 = vmatprep.subr.bf16.mxu0 0
    %2404 = vmatpush1.bf16.msra.mxu0 0
    %2405 = vmatprep.subr.bf16.mxu0 0
    %2406 = vmatpush1.bf16.msra.mxu0 0
    %2407 = vmatprep.subr.bf16.mxu0 0
    %2408 = vmatpush1.bf16.msra.mxu0 0
    %2409 = vmatprep.subr.bf16.mxu0 0
    %2410 = vmatpush1.bf16.msra.mxu0 0
    %2411 = vmatprep.subr.bf16.mxu0 0
    %2412 = vmatpush1.bf16.msra.mxu0 0
    %2413 = vmatprep.subr.bf16.mxu0 0
    %2414 = vmatpush1.bf16.msra.mxu0 0
    %2415 = vmatprep.subr.bf16.mxu0 0
    %2416 = vmatpush1.bf16.msra.mxu0 0
    %2417 = vmatprep.subr.bf16.mxu0 0
    %2418 = vmatpush1.bf16.msra.mxu0 0
    %2419 = vmatprep.subr.bf16.mxu0 0
    %2420 = vmatpush1.bf16.msra.mxu0 0
    %2421 = vmatprep.subr.bf16.mxu0 0
    %2422 = vmatpush1.bf16.msra.mxu0 0
    %2423 = vmatprep.subr.bf16.mxu0 0
    %2424 = vmatpush1.bf16.msra.mxu0 0
    %2425 = vmatprep.subr.bf16.mxu0 0
    %2426 = vmatpush1.bf16.msra.mxu0 0
    %2427 = vmatprep.mubr.bf16.mxu0 0
    %2428 = vmatmul.mubr.bf16.gmra.mrb[0].mxu0 %v2390
    %v2429 = vpop.f32.mrb[0].mxu0
    %v2430 = vadd.f32 0.0, %v2429
    %v2431 = vpop.f32.mrb[0].mxu0
    %v2432 = vpop.f32.mrb[0].mxu0
    %v2433 = vadd.f32 0.0, %v2432
    %v2434 = vpop.f32.mrb[0].mxu0
    %2435 = vdwg.mxu0
    %v2438 = vunpack.c.l.b16 %v2158
    %v2439 = vunpack.c.l.b16 %v2159
    %v2440 = vpack.c.b16 %v2439, %v2438
    %v2442 = vsel %vm582, %v2440, 0
    %v2445 = vsel %vm708, %v1940, 0
    %2447 = vmatprep.subr.bf16.mxu0 0
    %2448 = vmatpush1.bf16.msra.mxu0 %v2445
    %2449 = vmatprep.subr.bf16.mxu0 0
    %2450 = vmatpush1.bf16.msra.mxu0 0
    %2451 = vmatprep.subr.bf16.mxu0 0
    %2452 = vmatpush1.bf16.msra.mxu0 0
    %2453 = vmatprep.subr.bf16.mxu0 0
    %2454 = vmatpush1.bf16.msra.mxu0 0
    %2455 = vmatprep.subr.bf16.mxu0 0
    %2456 = vmatpush1.bf16.msra.mxu0 0
    %2457 = vmatprep.subr.bf16.mxu0 0
    %2458 = vmatpush1.bf16.msra.mxu0 0
    %2459 = vmatprep.subr.bf16.mxu0 0
    %2460 = vmatpush1.bf16.msra.mxu0 0
    %2461 = vmatprep.subr.bf16.mxu0 0
    %2462 = vmatpush1.bf16.msra.mxu0 0
    %2463 = vmatprep.subr.bf16.mxu0 0
    %2464 = vmatpush1.bf16.msra.mxu0 0
    %2465 = vmatprep.subr.bf16.mxu0 0
    %2466 = vmatpush1.bf16.msra.mxu0 0
    %2467 = vmatprep.subr.bf16.mxu0 0
    %2468 = vmatpush1.bf16.msra.mxu0 0
    %2469 = vmatprep.subr.bf16.mxu0 0
    %2470 = vmatpush1.bf16.msra.mxu0 0
    %2471 = vmatprep.subr.bf16.mxu0 0
    %2472 = vmatpush1.bf16.msra.mxu0 0
    %2473 = vmatprep.subr.bf16.mxu0 0
    %2474 = vmatpush1.bf16.msra.mxu0 0
    %2475 = vmatprep.subr.bf16.mxu0 0
    %2476 = vmatpush1.bf16.msra.mxu0 0
    %2477 = vmatprep.subr.bf16.mxu0 0
    %2478 = vmatpush1.bf16.msra.mxu0 0
    %2479 = vmatprep.mubr.bf16.mxu0 0
    %2480 = vmatmul.mubr.bf16.gmra.mrb[0].mxu0 %v2442
    %v2481 = vpop.f32.mrb[0].mxu0
    %v2482 = vadd.f32 %v2430, %v2481
    %v2483 = vpop.f32.mrb[0].mxu0
    %v2484 = vpop.f32.mrb[0].mxu0
    %v2485 = vadd.f32 %v2433, %v2484
    %v2486 = vpop.f32.mrb[0].mxu0
    %2487 = vdwg.mxu0
    %2488 = vrot.lane.b32.xlu0 %v1862, 112
    %v2489 = vpop.permute.xlu0 %2488
    %2490 = vrot.lane.b32.xlu0 %v1938, 112
    %v2491 = vpop.permute.xlu0 %2490
    %v2493 = vsel %vm582, %v2489, 0
    %v2496 = vsel %vm582, %v2491, 0
    %2498 = vmatprep.subr.bf16.mxu0 0
    %2499 = vmatpush1.bf16.xpose.msra.mxu0 %v2496
    %2500 = vmatprep.subr.bf16.mxu0 0
    %2501 = vmatpush1.bf16.xpose.msra.mxu0 0
    %2502 = vmatprep.subr.bf16.mxu0 0
    %2503 = vmatpush1.bf16.xpose.msra.mxu0 0
    %2504 = vmatprep.subr.bf16.mxu0 0
    %2505 = vmatpush1.bf16.xpose.msra.mxu0 0
    %2506 = vmatprep.subr.bf16.mxu0 0
    %2507 = vmatpush1.bf16.xpose.msra.mxu0 0
    %2508 = vmatprep.subr.bf16.mxu0 0
    %2509 = vmatpush1.bf16.xpose.msra.mxu0 0
    %2510 = vmatprep.subr.bf16.mxu0 0
    %2511 = vmatpush1.bf16.xpose.msra.mxu0 0
    %2512 = vmatprep.subr.bf16.mxu0 0
    %2513 = vmatpush1.bf16.xpose.msra.mxu0 0
    %2514 = vmatprep.subr.bf16.mxu0 0
    %2515 = vmatpush1.bf16.xpose.msra.mxu0 0
    %2516 = vmatprep.subr.bf16.mxu0 0
    %2517 = vmatpush1.bf16.xpose.msra.mxu0 0
    %2518 = vmatprep.subr.bf16.mxu0 0
    %2519 = vmatpush1.bf16.xpose.msra.mxu0 0
    %2520 = vmatprep.subr.bf16.mxu0 0
    %2521 = vmatpush1.bf16.xpose.msra.mxu0 0
    %2522 = vmatprep.subr.bf16.mxu0 0
    %2523 = vmatpush1.bf16.xpose.msra.mxu0 0
    %2524 = vmatprep.subr.bf16.mxu0 0
    %2525 = vmatpush1.bf16.xpose.msra.mxu0 0
    %2526 = vmatprep.subr.bf16.mxu0 0
    %2527 = vmatpush1.bf16.xpose.msra.mxu0 0
    %2528 = vmatprep.subr.bf16.mxu0 0
    %2529 = vmatpush1.bf16.xpose.msra.mxu0 0
    %2530 = vmatprep.mubr.bf16.mxu0 0
    %2531 = vmatmul.mubr.bf16.gmra.mrb[0].mxu0 %v2493
    %v2532 = vpop.f32.mrb[0].mxu0
    %v2533 = vadd.f32 0.0, %v2532
    %v2534 = vpop.f32.mrb[0].mxu0
    %v2535 = vpop.f32.mrb[0].mxu0
    %v2536 = vpop.f32.mrb[0].mxu0
    %2537 = vdwg.mxu0
    %2538 = vrot.lane.b32.xlu0 %v1863, 112
    %v2539 = vpop.permute.xlu0 %2538
    %2540 = vrot.lane.b32.xlu0 %v1939, 112
    %v2541 = vpop.permute.xlu0 %2540
    %v2543 = vsel %vm582, %v2539, 0
    %v2546 = vsel %vm582, %v2541, 0
    %2548 = vmatprep.subr.bf16.mxu0 0
    %2549 = vmatpush1.bf16.xpose.msra.mxu0 %v2546
    %2550 = vmatprep.subr.bf16.mxu0 0
    %2551 = vmatpush1.bf16.xpose.msra.mxu0 0
    %2552 = vmatprep.subr.bf16.mxu0 0
    %2553 = vmatpush1.bf16.xpose.msra.mxu0 0
    %2554 = vmatprep.subr.bf16.mxu0 0
    %2555 = vmatpush1.bf16.xpose.msra.mxu0 0
    %2556 = vmatprep.subr.bf16.mxu0 0
    %2557 = vmatpush1.bf16.xpose.msra.mxu0 0
    %2558 = vmatprep.subr.bf16.mxu0 0
    %2559 = vmatpush1.bf16.xpose.msra.mxu0 0
    %2560 = vmatprep.subr.bf16.mxu0 0
    %2561 = vmatpush1.bf16.xpose.msra.mxu0 0
    %2562 = vmatprep.subr.bf16.mxu0 0
    %2563 = vmatpush1.bf16.xpose.msra.mxu0 0
    %2564 = vmatprep.subr.bf16.mxu0 0
    %2565 = vmatpush1.bf16.xpose.msra.mxu0 0
    %2566 = vmatprep.subr.bf16.mxu0 0
    %2567 = vmatpush1.bf16.xpose.msra.mxu0 0
    %2568 = vmatprep.subr.bf16.mxu0 0
    %2569 = vmatpush1.bf16.xpose.msra.mxu0 0
    %2570 = vmatprep.subr.bf16.mxu0 0
    %2571 = vmatpush1.bf16.xpose.msra.mxu0 0
    %2572 = vmatprep.subr.bf16.mxu0 0
    %2573 = vmatpush1.bf16.xpose.msra.mxu0 0
    %2574 = vmatprep.subr.bf16.mxu0 0
    %2575 = vmatpush1.bf16.xpose.msra.mxu0 0
    %2576 = vmatprep.subr.bf16.mxu0 0
    %2577 = vmatpush1.bf16.xpose.msra.mxu0 0
    %2578 = vmatprep.subr.bf16.mxu0 0
    %2579 = vmatpush1.bf16.xpose.msra.mxu0 0
    %2580 = vmatprep.mubr.bf16.mxu0 0
    %2581 = vmatmul.mubr.bf16.gmra.mrb[0].mxu0 %v2543
    %v2582 = vpop.f32.mrb[0].mxu0
    %v2583 = vadd.f32 0.0, %v2582
    %v2584 = vpop.f32.mrb[0].mxu0
    %v2585 = vpop.f32.mrb[0].mxu0
    %v2586 = vpop.f32.mrb[0].mxu0
    %2587 = vdwg.mxu0
    %v2588 = vsel %vm582, %v2533, -inf
    %2589 = vmax.xlane.f32.xlu0 %v2588
    %v2590 = vpop.xlane.xlu0 %2589
    %v2591 = vsel %vm582, %v2583, -inf
    %2592 = vmax.xlane.f32.xlu0 %v2591
    %v2593 = vpop.xlane.xlu0 %2592
    %v2594 = vsub.f32 %v2533, %v2590
    %v2595 = vsub.f32 %v2583, %v2593
    %v2596 = vmul.f32 %v2594, 1.442695
    %v2597 = vpow.pop %v2596
    %v2598 = vmul.f32 %v2595, 1.442695
    %v2599 = vpow.pop %v2598
    %v2600 = vsel %vm582, %v2597, 0.0
    %2601 = vadd.xlane.f32.xlu0 %v2600
    %v2602 = vpop.xlane.xlu0 %2601
    %v2603 = vsel %vm582, %v2599, 0.0
    %2604 = vadd.xlane.f32.xlu0 %v2603
    %v2605 = vpop.xlane.xlu0 %2604
    %v2606 = vrcp.pop %v2602
    %v2607 = vmul.f32 %v2597, %v2606
    %v2608 = vrcp.pop %v2605
    %v2609 = vmul.f32 %v2599, %v2608
    %v2610 = vadd.f32 %v2282, %v2607
    %v2611 = vadd.f32 %v2283, %v2609
    %v2612 = vpack.c.bf16 %v2607, %v2607
    %v2613 = vpack.c.bf16 %v2609, %v2609
    %2614 = vrot.lane.b32.xlu0 %v1938, 80
    %v2615 = vpop.permute.xlu0 %2614
    %v2617 = vsel %vm582, %v2612, 0
    %v2620 = vsel %vm708, %v2615, 0
    %2622 = vmatprep.subr.bf16.mxu0 0
    %2623 = vmatpush1.bf16.msra.mxu0 %v2620
    %2624 = vmatprep.subr.bf16.mxu0 0
    %2625 = vmatpush1.bf16.msra.mxu0 0
    %2626 = vmatprep.subr.bf16.mxu0 0
    %2627 = vmatpush1.bf16.msra.mxu0 0
    %2628 = vmatprep.subr.bf16.mxu0 0
    %2629 = vmatpush1.bf16.msra.mxu0 0
    %2630 = vmatprep.subr.bf16.mxu0 0
    %2631 = vmatpush1.bf16.msra.mxu0 0
    %2632 = vmatprep.subr.bf16.mxu0 0
    %2633 = vmatpush1.bf16.msra.mxu0 0
    %2634 = vmatprep.subr.bf16.mxu0 0
    %2635 = vmatpush1.bf16.msra.mxu0 0
    %2636 = vmatprep.subr.bf16.mxu0 0
    %2637 = vmatpush1.bf16.msra.mxu0 0
    %2638 = vmatprep.subr.bf16.mxu0 0
    %2639 = vmatpush1.bf16.msra.mxu0 0
    %2640 = vmatprep.subr.bf16.mxu0 0
    %2641 = vmatpush1.bf16.msra.mxu0 0
    %2642 = vmatprep.subr.bf16.mxu0 0
    %2643 = vmatpush1.bf16.msra.mxu0 0
    %2644 = vmatprep.subr.bf16.mxu0 0
    %2645 = vmatpush1.bf16.msra.mxu0 0
    %2646 = vmatprep.subr.bf16.mxu0 0
    %2647 = vmatpush1.bf16.msra.mxu0 0
    %2648 = vmatprep.subr.bf16.mxu0 0
    %2649 = vmatpush1.bf16.msra.mxu0 0
    %2650 = vmatprep.subr.bf16.mxu0 0
    %2651 = vmatpush1.bf16.msra.mxu0 0
    %2652 = vmatprep.subr.bf16.mxu0 0
    %2653 = vmatpush1.bf16.msra.mxu0 0
    %2654 = vmatprep.mubr.bf16.mxu0 0
    %2655 = vmatmul.mubr.bf16.gmra.mrb[0].mxu0 %v2617
    %v2656 = vpop.f32.mrb[0].mxu0
    %v2657 = vadd.f32 0.0, %v2656
    %v2658 = vpop.f32.mrb[0].mxu0
    %v2659 = vpop.f32.mrb[0].mxu0
    %v2660 = vpop.f32.mrb[0].mxu0
    %2661 = vdwg.mxu0
    %2662 = vrot.lane.b32.xlu0 %v1939, 80
    %v2663 = vpop.permute.xlu0 %2662
    %v2665 = vsel %vm582, %v2613, 0
    %v2668 = vsel %vm708, %v2663, 0
    %2670 = vmatprep.subr.bf16.mxu0 0
    %2671 = vmatpush1.bf16.msra.mxu0 %v2668
    %2672 = vmatprep.subr.bf16.mxu0 0
    %2673 = vmatpush1.bf16.msra.mxu0 0
    %2674 = vmatprep.subr.bf16.mxu0 0
    %2675 = vmatpush1.bf16.msra.mxu0 0
    %2676 = vmatprep.subr.bf16.mxu0 0
    %2677 = vmatpush1.bf16.msra.mxu0 0
    %2678 = vmatprep.subr.bf16.mxu0 0
    %2679 = vmatpush1.bf16.msra.mxu0 0
    %2680 = vmatprep.subr.bf16.mxu0 0
    %2681 = vmatpush1.bf16.msra.mxu0 0
    %2682 = vmatprep.subr.bf16.mxu0 0
    %2683 = vmatpush1.bf16.msra.mxu0 0
    %2684 = vmatprep.subr.bf16.mxu0 0
    %2685 = vmatpush1.bf16.msra.mxu0 0
    %2686 = vmatprep.subr.bf16.mxu0 0
    %2687 = vmatpush1.bf16.msra.mxu0 0
    %2688 = vmatprep.subr.bf16.mxu0 0
    %2689 = vmatpush1.bf16.msra.mxu0 0
    %2690 = vmatprep.subr.bf16.mxu0 0
    %2691 = vmatpush1.bf16.msra.mxu0 0
    %2692 = vmatprep.subr.bf16.mxu0 0
    %2693 = vmatpush1.bf16.msra.mxu0 0
    %2694 = vmatprep.subr.bf16.mxu0 0
    %2695 = vmatpush1.bf16.msra.mxu0 0
    %2696 = vmatprep.subr.bf16.mxu0 0
    %2697 = vmatpush1.bf16.msra.mxu0 0
    %2698 = vmatprep.subr.bf16.mxu0 0
    %2699 = vmatpush1.bf16.msra.mxu0 0
    %2700 = vmatprep.subr.bf16.mxu0 0
    %2701 = vmatpush1.bf16.msra.mxu0 0
    %2702 = vmatprep.mubr.bf16.mxu0 0
    %2703 = vmatmul.mubr.bf16.gmra.mrb[0].mxu0 %v2665
    %v2704 = vpop.f32.mrb[0].mxu0
    %v2705 = vadd.f32 0.0, %v2704
    %v2706 = vpop.f32.mrb[0].mxu0
    %v2707 = vpop.f32.mrb[0].mxu0
    %v2708 = vpop.f32.mrb[0].mxu0
    %2709 = vdwg.mxu0
    %v2710 = vpack.c.bf16 %v2657, %v2657
    %v2711 = vpack.c.bf16 %v2705, %v2705
    %v2714 = vunpack.c.l.b16 %v2710
    %v2715 = vunpack.c.l.b16 %v2711
    %v2716 = vpack.c.b16 %v2715, %v2714
    %v2718 = vsel %vm582, %v2716, 0
    %v2721 = vsel %vm708, %v1942, 0
    %2723 = vmatprep.subr.bf16.mxu0 0
    %2724 = vmatpush1.bf16.msra.mxu0 %v2721
    %2725 = vmatprep.subr.bf16.mxu0 0
    %2726 = vmatpush1.bf16.msra.mxu0 0
    %2727 = vmatprep.subr.bf16.mxu0 0
    %2728 = vmatpush1.bf16.msra.mxu0 0
    %2729 = vmatprep.subr.bf16.mxu0 0
    %2730 = vmatpush1.bf16.msra.mxu0 0
    %2731 = vmatprep.subr.bf16.mxu0 0
    %2732 = vmatpush1.bf16.msra.mxu0 0
    %2733 = vmatprep.subr.bf16.mxu0 0
    %2734 = vmatpush1.bf16.msra.mxu0 0
    %2735 = vmatprep.subr.bf16.mxu0 0
    %2736 = vmatpush1.bf16.msra.mxu0 0
    %2737 = vmatprep.subr.bf16.mxu0 0
    %2738 = vmatpush1.bf16.msra.mxu0 0
    %2739 = vmatprep.subr.bf16.mxu0 0
    %2740 = vmatpush1.bf16.msra.mxu0 0
    %2741 = vmatprep.subr.bf16.mxu0 0
    %2742 = vmatpush1.bf16.msra.mxu0 0
    %2743 = vmatprep.subr.bf16.mxu0 0
    %2744 = vmatpush1.bf16.msra.mxu0 0
    %2745 = vmatprep.subr.bf16.mxu0 0
    %2746 = vmatpush1.bf16.msra.mxu0 0
    %2747 = vmatprep.subr.bf16.mxu0 0
    %2748 = vmatpush1.bf16.msra.mxu0 0
    %2749 = vmatprep.subr.bf16.mxu0 0
    %2750 = vmatpush1.bf16.msra.mxu0 0
    %2751 = vmatprep.subr.bf16.mxu0 0
    %2752 = vmatpush1.bf16.msra.mxu0 0
    %2753 = vmatprep.subr.bf16.mxu0 0
    %2754 = vmatpush1.bf16.msra.mxu0 0
    %2755 = vmatprep.mubr.bf16.mxu0 0
    %2756 = vmatmul.mubr.bf16.gmra.mrb[0].mxu0 %v2718
    %v2757 = vpop.f32.mrb[0].mxu0
    %v2758 = vadd.f32 0.0, %v2757
    %v2759 = vpop.f32.mrb[0].mxu0
    %v2760 = vpop.f32.mrb[0].mxu0
    %v2761 = vadd.f32 0.0, %v2760
    %v2762 = vpop.f32.mrb[0].mxu0
    %2763 = vdwg.mxu0
    %v2764 = vadd.f32 %v2482, %v2758
    %v2765 = vadd.f32 %v2485, %v2761
    %2766 = vrot.lane.b32.xlu0 %v1862, 104
    %v2767 = vpop.permute.xlu0 %2766
    %2768 = vrot.lane.b32.xlu0 %v1938, 104
    %v2769 = vpop.permute.xlu0 %2768
    %v2771 = vsel %vm582, %v2767, 0
    %v2774 = vsel %vm582, %v2769, 0
    %2776 = vmatprep.subr.bf16.mxu0 0
    %2777 = vmatpush1.bf16.xpose.msra.mxu0 %v2774
    %2778 = vmatprep.subr.bf16.mxu0 0
    %2779 = vmatpush1.bf16.xpose.msra.mxu0 0
    %2780 = vmatprep.subr.bf16.mxu0 0
    %2781 = vmatpush1.bf16.xpose.msra.mxu0 0
    %2782 = vmatprep.subr.bf16.mxu0 0
    %2783 = vmatpush1.bf16.xpose.msra.mxu0 0
    %2784 = vmatprep.subr.bf16.mxu0 0
    %2785 = vmatpush1.bf16.xpose.msra.mxu0 0
    %2786 = vmatprep.subr.bf16.mxu0 0
    %2787 = vmatpush1.bf16.xpose.msra.mxu0 0
    %2788 = vmatprep.subr.bf16.mxu0 0
    %2789 = vmatpush1.bf16.xpose.msra.mxu0 0
    %2790 = vmatprep.subr.bf16.mxu0 0
    %2791 = vmatpush1.bf16.xpose.msra.mxu0 0
    %2792 = vmatprep.subr.bf16.mxu0 0
    %2793 = vmatpush1.bf16.xpose.msra.mxu0 0
    %2794 = vmatprep.subr.bf16.mxu0 0
    %2795 = vmatpush1.bf16.xpose.msra.mxu0 0
    %2796 = vmatprep.subr.bf16.mxu0 0
    %2797 = vmatpush1.bf16.xpose.msra.mxu0 0
    %2798 = vmatprep.subr.bf16.mxu0 0
    %2799 = vmatpush1.bf16.xpose.msra.mxu0 0
    %2800 = vmatprep.subr.bf16.mxu0 0
    %2801 = vmatpush1.bf16.xpose.msra.mxu0 0
    %2802 = vmatprep.subr.bf16.mxu0 0
    %2803 = vmatpush1.bf16.xpose.msra.mxu0 0
    %2804 = vmatprep.subr.bf16.mxu0 0
    %2805 = vmatpush1.bf16.xpose.msra.mxu0 0
    %2806 = vmatprep.subr.bf16.mxu0 0
    %2807 = vmatpush1.bf16.xpose.msra.mxu0 0
    %2808 = vmatprep.mubr.bf16.mxu0 0
    %2809 = vmatmul.mubr.bf16.gmra.mrb[0].mxu0 %v2771
    %v2810 = vpop.f32.mrb[0].mxu0
    %v2811 = vadd.f32 0.0, %v2810
    %v2812 = vpop.f32.mrb[0].mxu0
    %v2813 = vpop.f32.mrb[0].mxu0
    %v2814 = vpop.f32.mrb[0].mxu0
    %2815 = vdwg.mxu0
    %2816 = vrot.lane.b32.xlu0 %v1863, 104
    %v2817 = vpop.permute.xlu0 %2816
    %2818 = vrot.lane.b32.xlu0 %v1939, 104
    %v2819 = vpop.permute.xlu0 %2818
    %v2821 = vsel %vm582, %v2817, 0
    %v2824 = vsel %vm582, %v2819, 0
    %2826 = vmatprep.subr.bf16.mxu0 0
    %2827 = vmatpush1.bf16.xpose.msra.mxu0 %v2824
    %2828 = vmatprep.subr.bf16.mxu0 0
    %2829 = vmatpush1.bf16.xpose.msra.mxu0 0
    %2830 = vmatprep.subr.bf16.mxu0 0
    %2831 = vmatpush1.bf16.xpose.msra.mxu0 0
    %2832 = vmatprep.subr.bf16.mxu0 0
    %2833 = vmatpush1.bf16.xpose.msra.mxu0 0
    %2834 = vmatprep.subr.bf16.mxu0 0
    %2835 = vmatpush1.bf16.xpose.msra.mxu0 0
    %2836 = vmatprep.subr.bf16.mxu0 0
    %2837 = vmatpush1.bf16.xpose.msra.mxu0 0
    %2838 = vmatprep.subr.bf16.mxu0 0
    %2839 = vmatpush1.bf16.xpose.msra.mxu0 0
    %2840 = vmatprep.subr.bf16.mxu0 0
    %2841 = vmatpush1.bf16.xpose.msra.mxu0 0
    %2842 = vmatprep.subr.bf16.mxu0 0
    %2843 = vmatpush1.bf16.xpose.msra.mxu0 0
    %2844 = vmatprep.subr.bf16.mxu0 0
    %2845 = vmatpush1.bf16.xpose.msra.mxu0 0
    %2846 = vmatprep.subr.bf16.mxu0 0
    %2847 = vmatpush1.bf16.xpose.msra.mxu0 0
    %2848 = vmatprep.subr.bf16.mxu0 0
    %2849 = vmatpush1.bf16.xpose.msra.mxu0 0
    %2850 = vmatprep.subr.bf16.mxu0 0
    %2851 = vmatpush1.bf16.xpose.msra.mxu0 0
    %2852 = vmatprep.subr.bf16.mxu0 0
    %2853 = vmatpush1.bf16.xpose.msra.mxu0 0
    %2854 = vmatprep.subr.bf16.mxu0 0
    %2855 = vmatpush1.bf16.xpose.msra.mxu0 0
    %2856 = vmatprep.subr.bf16.mxu0 0
    %2857 = vmatpush1.bf16.xpose.msra.mxu0 0
    %2858 = vmatprep.mubr.bf16.mxu0 0
    %2859 = vmatmul.mubr.bf16.gmra.mrb[0].mxu0 %v2821
    %v2860 = vpop.f32.mrb[0].mxu0
    %v2861 = vadd.f32 0.0, %v2860
    %v2862 = vpop.f32.mrb[0].mxu0
    %v2863 = vpop.f32.mrb[0].mxu0
    %v2864 = vpop.f32.mrb[0].mxu0
    %2865 = vdwg.mxu0
    %v2866 = vsel %vm582, %v2811, -inf
    %2867 = vmax.xlane.f32.xlu0 %v2866
    %v2868 = vpop.xlane.xlu0 %2867
    %v2869 = vsel %vm582, %v2861, -inf
    %2870 = vmax.xlane.f32.xlu0 %v2869
    %v2871 = vpop.xlane.xlu0 %2870
    %v2872 = vsub.f32 %v2811, %v2868
    %v2873 = vsub.f32 %v2861, %v2871
    %v2874 = vmul.f32 %v2872, 1.442695
    %v2875 = vpow.pop %v2874
    %v2876 = vmul.f32 %v2873, 1.442695
    %v2877 = vpow.pop %v2876
    %v2878 = vsel %vm582, %v2875, 0.0
    %2879 = vadd.xlane.f32.xlu0 %v2878
    %v2880 = vpop.xlane.xlu0 %2879
    %v2881 = vsel %vm582, %v2877, 0.0
    %2882 = vadd.xlane.f32.xlu0 %v2881
    %v2883 = vpop.xlane.xlu0 %2882
    %v2884 = vrcp.pop %v2880
    %v2885 = vmul.f32 %v2875, %v2884
    %v2886 = vrcp.pop %v2883
    %v2887 = vmul.f32 %v2877, %v2886
    %v2888 = vadd.f32 %v2610, %v2885
    %v2889 = vadd.f32 %v2611, %v2887
    %v2890 = vpack.c.bf16 %v2885, %v2885
    %v2891 = vpack.c.bf16 %v2887, %v2887
    %2892 = vrot.lane.b32.xlu0 %v1938, 72
    %v2893 = vpop.permute.xlu0 %2892
    %v2895 = vsel %vm582, %v2890, 0
    %v2898 = vsel %vm708, %v2893, 0
    %2900 = vmatprep.subr.bf16.mxu0 0
    %2901 = vmatpush1.bf16.msra.mxu0 %v2898
    %2902 = vmatprep.subr.bf16.mxu0 0
    %2903 = vmatpush1.bf16.msra.mxu0 0
    %2904 = vmatprep.subr.bf16.mxu0 0
    %2905 = vmatpush1.bf16.msra.mxu0 0
    %2906 = vmatprep.subr.bf16.mxu0 0
    %2907 = vmatpush1.bf16.msra.mxu0 0
    %2908 = vmatprep.subr.bf16.mxu0 0
    %2909 = vmatpush1.bf16.msra.mxu0 0
    %2910 = vmatprep.subr.bf16.mxu0 0
    %2911 = vmatpush1.bf16.msra.mxu0 0
    %2912 = vmatprep.subr.bf16.mxu0 0
    %2913 = vmatpush1.bf16.msra.mxu0 0
    %2914 = vmatprep.subr.bf16.mxu0 0
    %2915 = vmatpush1.bf16.msra.mxu0 0
    %2916 = vmatprep.subr.bf16.mxu0 0
    %2917 = vmatpush1.bf16.msra.mxu0 0
    %2918 = vmatprep.subr.bf16.mxu0 0
    %2919 = vmatpush1.bf16.msra.mxu0 0
    %2920 = vmatprep.subr.bf16.mxu0 0
    %2921 = vmatpush1.bf16.msra.mxu0 0
    %2922 = vmatprep.subr.bf16.mxu0 0
    %2923 = vmatpush1.bf16.msra.mxu0 0
    %2924 = vmatprep.subr.bf16.mxu0 0
    %2925 = vmatpush1.bf16.msra.mxu0 0
    %2926 = vmatprep.subr.bf16.mxu0 0
    %2927 = vmatpush1.bf16.msra.mxu0 0
    %2928 = vmatprep.subr.bf16.mxu0 0
    %2929 = vmatpush1.bf16.msra.mxu0 0
    %2930 = vmatprep.subr.bf16.mxu0 0
    %2931 = vmatpush1.bf16.msra.mxu0 0
    %2932 = vmatprep.mubr.bf16.mxu0 0
    %2933 = vmatmul.mubr.bf16.gmra.mrb[0].mxu0 %v2895
    %v2934 = vpop.f32.mrb[0].mxu0
    %v2935 = vadd.f32 0.0, %v2934
    %v2936 = vpop.f32.mrb[0].mxu0
    %v2937 = vpop.f32.mrb[0].mxu0
    %v2938 = vpop.f32.mrb[0].mxu0
    %2939 = vdwg.mxu0
    %2940 = vrot.lane.b32.xlu0 %v1939, 72
    %v2941 = vpop.permute.xlu0 %2940
    %v2943 = vsel %vm582, %v2891, 0
    %v2946 = vsel %vm708, %v2941, 0
    %2948 = vmatprep.subr.bf16.mxu0 0
    %2949 = vmatpush1.bf16.msra.mxu0 %v2946
    %2950 = vmatprep.subr.bf16.mxu0 0
    %2951 = vmatpush1.bf16.msra.mxu0 0
    %2952 = vmatprep.subr.bf16.mxu0 0
    %2953 = vmatpush1.bf16.msra.mxu0 0
    %2954 = vmatprep.subr.bf16.mxu0 0
    %2955 = vmatpush1.bf16.msra.mxu0 0
    %2956 = vmatprep.subr.bf16.mxu0 0
    %2957 = vmatpush1.bf16.msra.mxu0 0
    %2958 = vmatprep.subr.bf16.mxu0 0
    %2959 = vmatpush1.bf16.msra.mxu0 0
    %2960 = vmatprep.subr.bf16.mxu0 0
    %2961 = vmatpush1.bf16.msra.mxu0 0
    %2962 = vmatprep.subr.bf16.mxu0 0
    %2963 = vmatpush1.bf16.msra.mxu0 0
    %2964 = vmatprep.subr.bf16.mxu0 0
    %2965 = vmatpush1.bf16.msra.mxu0 0
    %2966 = vmatprep.subr.bf16.mxu0 0
    %2967 = vmatpush1.bf16.msra.mxu0 0
    %2968 = vmatprep.subr.bf16.mxu0 0
    %2969 = vmatpush1.bf16.msra.mxu0 0
    %2970 = vmatprep.subr.bf16.mxu0 0
    %2971 = vmatpush1.bf16.msra.mxu0 0
    %2972 = vmatprep.subr.bf16.mxu0 0
    %2973 = vmatpush1.bf16.msra.mxu0 0
    %2974 = vmatprep.subr.bf16.mxu0 0
    %2975 = vmatpush1.bf16.msra.mxu0 0
    %2976 = vmatprep.subr.bf16.mxu0 0
    %2977 = vmatpush1.bf16.msra.mxu0 0
    %2978 = vmatprep.subr.bf16.mxu0 0
    %2979 = vmatpush1.bf16.msra.mxu0 0
    %2980 = vmatprep.mubr.bf16.mxu0 0
    %2981 = vmatmul.mubr.bf16.gmra.mrb[0].mxu0 %v2943
    %v2982 = vpop.f32.mrb[0].mxu0
    %v2983 = vadd.f32 0.0, %v2982
    %v2984 = vpop.f32.mrb[0].mxu0
    %v2985 = vpop.f32.mrb[0].mxu0
    %v2986 = vpop.f32.mrb[0].mxu0
    %2987 = vdwg.mxu0
    %v2988 = vpack.c.bf16 %v2935, %v2935
    %v2989 = vpack.c.bf16 %v2983, %v2983
    %v2992 = vunpack.c.l.b16 %v2988
    %v2993 = vunpack.c.l.b16 %v2989
    %v2994 = vpack.c.b16 %v2993, %v2992
    %v2996 = vsel %vm582, %v2994, 0
    %v2999 = vsel %vm708, %v1943, 0
    %3001 = vmatprep.subr.bf16.mxu0 0
    %3002 = vmatpush1.bf16.msra.mxu0 %v2999
    %3003 = vmatprep.subr.bf16.mxu0 0
    %3004 = vmatpush1.bf16.msra.mxu0 0
    %3005 = vmatprep.subr.bf16.mxu0 0
    %3006 = vmatpush1.bf16.msra.mxu0 0
    %3007 = vmatprep.subr.bf16.mxu0 0
    %3008 = vmatpush1.bf16.msra.mxu0 0
    %3009 = vmatprep.subr.bf16.mxu0 0
    %3010 = vmatpush1.bf16.msra.mxu0 0
    %3011 = vmatprep.subr.bf16.mxu0 0
    %3012 = vmatpush1.bf16.msra.mxu0 0
    %3013 = vmatprep.subr.bf16.mxu0 0
    %3014 = vmatpush1.bf16.msra.mxu0 0
    %3015 = vmatprep.subr.bf16.mxu0 0
    %3016 = vmatpush1.bf16.msra.mxu0 0
    %3017 = vmatprep.subr.bf16.mxu0 0
    %3018 = vmatpush1.bf16.msra.mxu0 0
    %3019 = vmatprep.subr.bf16.mxu0 0
    %3020 = vmatpush1.bf16.msra.mxu0 0
    %3021 = vmatprep.subr.bf16.mxu0 0
    %3022 = vmatpush1.bf16.msra.mxu0 0
    %3023 = vmatprep.subr.bf16.mxu0 0
    %3024 = vmatpush1.bf16.msra.mxu0 0
    %3025 = vmatprep.subr.bf16.mxu0 0
    %3026 = vmatpush1.bf16.msra.mxu0 0
    %3027 = vmatprep.subr.bf16.mxu0 0
    %3028 = vmatpush1.bf16.msra.mxu0 0
    %3029 = vmatprep.subr.bf16.mxu0 0
    %3030 = vmatpush1.bf16.msra.mxu0 0
    %3031 = vmatprep.subr.bf16.mxu0 0
    %3032 = vmatpush1.bf16.msra.mxu0 0
    %3033 = vmatprep.mubr.bf16.mxu0 0
    %3034 = vmatmul.mubr.bf16.gmra.mrb[0].mxu0 %v2996
    %v3035 = vpop.f32.mrb[0].mxu0
    %v3036 = vadd.f32 0.0, %v3035
    %v3037 = vpop.f32.mrb[0].mxu0
    %v3038 = vpop.f32.mrb[0].mxu0
    %v3039 = vadd.f32 0.0, %v3038
    %v3040 = vpop.f32.mrb[0].mxu0
    %3041 = vdwg.mxu0
    %v3042 = vadd.f32 %v2764, %v3036
    %v3043 = vadd.f32 %v2765, %v3039
    %v3044 = vld [vmem:[#allocation15] sm:$0x1]
    %v3046 = vlaneseq
    %v3047 = vshrl.u32 %v3046, 7
    %v3048 = vsub.s32 0, %v3047
    %v3049 = vrot.slane %v3044, %v3048
    %v3051 = vadd.f32 %v3042, %v3049
    %v3052 = vadd.f32 %v3043, %v3049
    %v3053 = vadd.f32 %v1744, %v3051
    %v3054 = vadd.f32 %v1745, %v3052
    %v3055 = vmul.f32 %v2888, 0.25
    %v3056 = vmul.f32 %v2889, 0.25
    %3057 = vst.msk [vmem:[#allocation27] sm:$0xff] %vm582, %v3055
    %3058 = vst.msk [vmem:[#allocation27 + $0x8] sm:$0xff] %vm582, %v3056
    %v3059 = vld [vmem:[#allocation17] sm:$0x1]
    %v3060 = vld [vmem:[#allocation18] sm:$0x1]
    %v3061 = vsel %vm288, %v3053, 0.0
    %3062 = vadd.xlane.f32.xlu0 %v3061
    %v3063 = vpop.xlane.xlu0 %3062
    %v3064 = vsel %vm288, %v3054, 0.0
    %3065 = vadd.xlane.f32.xlu0 %v3064
    %v3066 = vpop.xlane.xlu0 %3065
    %v3067 = vmul.f32 %v3063, %v295
    %v3068 = vmul.f32 %v3066, %v295
    %v3069 = vsub.f32 %v3053, %v3067
    %v3070 = vsub.f32 %v3054, %v3068
    %v3071 = vmul.f32 %v3069, %v3069
    %v3072 = vmul.f32 %v3070, %v3070
    %v3073 = vsel %vm288, %v3071, 0.0
    %3074 = vadd.xlane.f32.xlu0 %v3073
    %v3075 = vpop.xlane.xlu0 %3074
    %v3076 = vsel %vm288, %v3072, 0.0
    %3077 = vadd.xlane.f32.xlu0 %v3076
    %v3078 = vpop.xlane.xlu0 %3077
    %v3079 = vmul.f32 %v3075, %v295
    %v3080 = vmul.f32 %v3078, %v295
    %v3081 = vadd.f32 %v3079, 1e-05
    %v3082 = vadd.f32 %v3080, 1e-05
    %v3083 = vrsqrt.pop %v3081
    %v3084 = vrsqrt.pop %v3082
    %v3085 = vmul.f32 %v3069, %v3083
    %v3086 = vmul.f32 %v3070, %v3084
    %v3088 = vlaneseq
    %v3089 = vshrl.u32 %v3088, 7
    %v3090 = vsub.s32 0, %v3089
    %v3091 = vrot.slane %v3059, %v3090
    %v3093 = vmul.f32 %v3085, %v3091
    %v3094 = vmul.f32 %v3086, %v3091
    %v3096 = vlaneseq
    %v3097 = vshrl.u32 %v3096, 7
    %v3098 = vsub.s32 0, %v3097
    %v3099 = vrot.slane %v3060, %v3098
    %v3101 = vadd.f32 %v3093, %v3099
    %v3102 = vadd.f32 %v3094, %v3099
    %v3103 = vld [vmem:[#allocation20] sm:$0xf]
    %v3104 = vld [vmem:[#allocation20 + $0x4] sm:$0xf]
    %v3105 = vld [vmem:[#allocation20 + $0x8] sm:$0xf]
    %v3106 = vld [vmem:[#allocation20 + $0xc] sm:$0xf]
    %v3107 = vpack.c.bf16 %v3102, %v3101
    %v3108 = vld [vmem:[#allocation21] sm:$0x1]
    %v3110 = vlaneseq
    %v3111 = vshrl.u32 %v3110, 7
    %v3112 = vsub.s32 0, %v3111
    %v3113 = vrot.slane %v3108, %v3112
    %v3119 = vunpack.c.l.b16 %v3103
    %v3120 = vunpack.c.l.b16 %v3104
    %v3121 = vunpack.c.l.b16 %v3105
    %v3122 = vunpack.c.l.b16 %v3106
    %v3123 = vpack.c.b16 %v3120, %v3119
    %v3124 = vpack.c.b16 %v3122, %v3121
    %v3128 = vsel %vm288, %v3107, 0
    %3130 = vmatprep.subr.bf16.mxu0 0
    %3131 = vmatpush1.bf16.msra.mxu0 %v3123
    %3132 = vmatprep.subr.bf16.mxu0 0
    %3133 = vmatpush1.bf16.msra.mxu0 %v3124
    %3134 = vmatprep.subr.bf16.mxu0 0
    %3135 = vmatpush1.bf16.msra.mxu0 0
    %3136 = vmatprep.subr.bf16.mxu0 0
    %3137 = vmatpush1.bf16.msra.mxu0 0
    %3138 = vmatprep.subr.bf16.mxu0 0
    %3139 = vmatpush1.bf16.msra.mxu0 0
    %3140 = vmatprep.subr.bf16.mxu0 0
    %3141 = vmatpush1.bf16.msra.mxu0 0
    %3142 = vmatprep.subr.bf16.mxu0 0
    %3143 = vmatpush1.bf16.msra.mxu0 0
    %3144 = vmatprep.subr.bf16.mxu0 0
    %3145 = vmatpush1.bf16.msra.mxu0 0
    %3146 = vmatprep.subr.bf16.mxu0 0
    %3147 = vmatpush1.bf16.msra.mxu0 0
    %3148 = vmatprep.subr.bf16.mxu0 0
    %3149 = vmatpush1.bf16.msra.mxu0 0
    %3150 = vmatprep.subr.bf16.mxu0 0
    %3151 = vmatpush1.bf16.msra.mxu0 0
    %3152 = vmatprep.subr.bf16.mxu0 0
    %3153 = vmatpush1.bf16.msra.mxu0 0
    %3154 = vmatprep.subr.bf16.mxu0 0
    %3155 = vmatpush1.bf16.msra.mxu0 0
    %3156 = vmatprep.subr.bf16.mxu0 0
    %3157 = vmatpush1.bf16.msra.mxu0 0
    %3158 = vmatprep.subr.bf16.mxu0 0
    %3159 = vmatpush1.bf16.msra.mxu0 0
    %3160 = vmatprep.subr.bf16.mxu0 0
    %3161 = vmatpush1.bf16.msra.mxu0 0
    %3162 = vmatprep.mubr.bf16.mxu0 0
    %3163 = vmatmul.mubr.bf16.gmra.mrb[0].mxu0 %v3128
    %v3164 = vpop.f32.mrb[0].mxu0
    %v3165 = vadd.f32 %v3113, %v3164
    %v3166 = vpop.f32.mrb[0].mxu0
    %v3167 = vpop.f32.mrb[0].mxu0
    %v3168 = vadd.f32 %v3113, %v3167
    %v3169 = vpop.f32.mrb[0].mxu0
    %3170 = vdwg.mxu0
    %v3171 = vmax.f32 %v3165, 0.0
    %v3172 = vmax.f32 %v3168, 0.0
    %v3173 = vld [vmem:[%s51] sm:$0xf]
    %v3174 = vld [vmem:[%s51 + $0x4] sm:$0xf]
    %v3175 = vld [vmem:[%s51 + $0x8] sm:$0xf]
    %v3176 = vld [vmem:[%s51 + $0xc] sm:$0xf]
    %v3177 = vld [vmem:[%s51 + $0x10] sm:$0xf]
    %v3178 = vld [vmem:[%s51 + $0x14] sm:$0xf]
    %v3179 = vld [vmem:[%s51 + $0x18] sm:$0xf]
    %v3180 = vld [vmem:[%s51 + $0x1c] sm:$0xf]
    %v3181 = vpack.c.bf16 %v3172, %v3171
    %v3182 = vld [vmem:[#allocation23] sm:$0x1]
    %v3184 = vlaneseq
    %v3185 = vshrl.u32 %v3184, 7
    %v3186 = vsub.s32 0, %v3185
    %v3187 = vrot.slane %v3182, %v3186
    %v3197 = vunpack.c.l.b16 %v3173
    %v3198 = vunpack.c.l.b16 %v3174
    %v3199 = vunpack.c.l.b16 %v3175
    %v3200 = vunpack.c.l.b16 %v3176
    %v3201 = vunpack.c.l.b16 %v3177
    %v3202 = vunpack.c.l.b16 %v3178
    %v3203 = vunpack.c.l.b16 %v3179
    %v3204 = vunpack.c.l.b16 %v3180
    %v3205 = vpack.c.b16 %v3198, %v3197
    %v3206 = vpack.c.b16 %v3200, %v3199
    %v3207 = vpack.c.b16 %v3202, %v3201
    %v3208 = vpack.c.b16 %v3204, %v3203
    %vm3213 = vcmask 523264
    %v3215 = vsel %vm3213, %v3181, 0
    %3217 = vmatprep.subr.bf16.mxu0 0
    %3218 = vmatpush1.bf16.msra.mxu0 %v3205
    %3219 = vmatprep.subr.bf16.mxu0 0
    %3220 = vmatpush1.bf16.msra.mxu0 %v3206
    %3221 = vmatprep.subr.bf16.mxu0 0
    %3222 = vmatpush1.bf16.msra.mxu0 %v3207
    %3223 = vmatprep.subr.bf16.mxu0 0
    %3224 = vmatpush1.bf16.msra.mxu0 %v3208
    %3225 = vmatprep.subr.bf16.mxu0 0
    %3226 = vmatpush1.bf16.msra.mxu0 0
    %3227 = vmatprep.subr.bf16.mxu0 0
    %3228 = vmatpush1.bf16.msra.mxu0 0
    %3229 = vmatprep.subr.bf16.mxu0 0
    %3230 = vmatpush1.bf16.msra.mxu0 0
    %3231 = vmatprep.subr.bf16.mxu0 0
    %3232 = vmatpush1.bf16.msra.mxu0 0
    %3233 = vmatprep.subr.bf16.mxu0 0
    %3234 = vmatpush1.bf16.msra.mxu0 0
    %3235 = vmatprep.subr.bf16.mxu0 0
    %3236 = vmatpush1.bf16.msra.mxu0 0
    %3237 = vmatprep.subr.bf16.mxu0 0
    %3238 = vmatpush1.bf16.msra.mxu0 0
    %3239 = vmatprep.subr.bf16.mxu0 0
    %3240 = vmatpush1.bf16.msra.mxu0 0
    %3241 = vmatprep.subr.bf16.mxu0 0
    %3242 = vmatpush1.bf16.msra.mxu0 0
    %3243 = vmatprep.subr.bf16.mxu0 0
    %3244 = vmatpush1.bf16.msra.mxu0 0
    %3245 = vmatprep.subr.bf16.mxu0 0
    %3246 = vmatpush1.bf16.msra.mxu0 0
    %3247 = vmatprep.subr.bf16.mxu0 0
    %3248 = vmatpush1.bf16.msra.mxu0 0
    %3249 = vmatprep.mubr.bf16.mxu0 0
    %3250 = vmatmul.mubr.bf16.gmra.mrb[0].mxu0 %v3215
    %v3251 = vpop.f32.mrb[0].mxu0
    %v3252 = vadd.f32 %v3187, %v3251
    %v3253 = vpop.f32.mrb[0].mxu0
    %v3254 = vpop.f32.mrb[0].mxu0
    %v3255 = vadd.f32 %v3187, %v3254
    %v3256 = vpop.f32.mrb[0].mxu0
    %3257 = vdwg.mxu0
    %v3258 = vadd.f32 %v3053, %v3252
    %v3259 = vadd.f32 %v3054, %v3255
    %3260 = vst.msk [vmem:[#allocation24] sm:$0xff] %vm288, %v3258
    %3261 = vst.msk [vmem:[#allocation24 + $0x8] sm:$0xff] %vm288, %v3259
    // Predicated region
    $region162: #{transformer_spatial_decoder_layer.1} parent=1 // pred_check
      _
    $region163: #{transformer_spatial_decoder_layer.1} parent=1 // pred_check_branch
      %3263 = sbr.rel (0) target = $region165
    $region164: #{transformer_spatial_decoder_layer.1} parent=1 // pred_region
      %s3265 = ssub.s32 256, 256
      %3266 = vsyncadd [#allocation4], %s3265
      %s3267 = sshll.u32 [#allocation24], 4
      %s3268 = int_to_ptr.vmem [resolvable:$true] %s3267
      %3273 = dma.vmem_to_hbm [thread:$0]  %s3268, 256, %s55, [#allocation4], 128, 128, 8
    $region165: #{transformer_spatial_decoder_layer.1} parent=1 // pred_fallthru
      _
    // Predicated region
    $region166: #{transformer_spatial_decoder_layer.1} parent=1 // pred_check
      _
    $region167: #{transformer_spatial_decoder_layer.1} parent=1 // pred_check_branch
      %3275 = sbr.rel (0) target = $region169
    $region168: #{transformer_spatial_decoder_layer.1} parent=1 // pred_region
      %s3277 = ssub.s32 1024, 1024
      %3278 = vsyncadd [#allocation26], %s3277
      %s3279 = sshll.u32 [#allocation25], 4
      %s3280 = int_to_ptr.vmem [resolvable:$true] %s3279
      %3285 = dma.vmem_to_hbm [thread:$0]  %s3280, 1024, %s57, [#allocation26], 128, 128, 8
    $region169: #{transformer_spatial_decoder_layer.1} parent=1 // pred_fallthru
      _
    // Predicated region
    $region170: #{transformer_spatial_decoder_layer.1} parent=1 // pred_check
      _
    $region171: #{transformer_spatial_decoder_layer.1} parent=1 // pred_check_branch
      %3287 = sbr.rel (0) target = $region173
    $region172: #{transformer_spatial_decoder_layer.1} parent=1 // pred_region
      %s3289 = ssub.s32 256, 256
      %3290 = vsyncadd [#allocation26], %s3289
      %s3291 = sshll.u32 [#allocation27], 4
      %s3292 = int_to_ptr.vmem [resolvable:$true] %s3291
      %3297 = dma.vmem_to_hbm [thread:$0]  %s3292, 256, %s59, [#allocation26], 128, 128, 8
    $region173: #{transformer_spatial_decoder_layer.1} parent=1 // pred_fallthru
      _
    // Predicated region
    $region174: #{transformer_spatial_decoder_layer.1} parent=1 // pred_check
      _
    $region175: #{transformer_spatial_decoder_layer.1} parent=1 // pred_check_branch
      %3299 = sbr.rel (0) target = $region177
    $region176: #{transformer_spatial_decoder_layer.1} parent=1 // pred_region
      %3300 = dma.done [#allocation4], 256
    $region177: #{transformer_spatial_decoder_layer.1} parent=1 // pred_fallthru
      _
    // Predicated region
    $region178: #{transformer_spatial_decoder_layer.1} parent=1 // pred_check
      _
    $region179: #{transformer_spatial_decoder_layer.1} parent=1 // pred_check_branch
      %3302 = sbr.rel (0) target = $region181
    $region180: #{transformer_spatial_decoder_layer.1} parent=1 // pred_region
      %3303 = dma.done [#allocation26], 1024
    $region181: #{transformer_spatial_decoder_layer.1} parent=1 // pred_fallthru
      _
    // Predicated region
    $region182: #{transformer_spatial_decoder_layer.1} parent=1 // pred_check
      _
    $region183: #{transformer_spatial_decoder_layer.1} parent=1 // pred_check_branch
      %3305 = sbr.rel (0) target = $region185
    $region184: #{transformer_spatial_decoder_layer.1} parent=1 // pred_region
      %3306 = dma.done [#allocation26], 256
    $region185: #{transformer_spatial_decoder_layer.1} parent=1 // pred_fallthru
      _
    %3307 = vsyncpa [#allocation3], 1
    %3308 = vsyncpa [#allocation10], 1
    %3309 = vsyncpa [#allocation13], 1
    %3310 = vsyncpa [#allocation16], 1
    %3311 = vsyncpa [#allocation19], 1
    %3312 = vsyncpa [#allocation22], 1
    %3313 = vsyncpa [#allocation4], 1
    %3314 = vsyncpa [#allocation26], 1
    %3315 = vsyncpa [#allocation5], 1
    %3316 = vsyncpa [#allocation7], 1

</llo_original>
